<compile_context>
chip_gen: v6e
topology: v6e:2x2x1
jax: 0.10.0
libtpu: 0.0.40
codegen_flags: <defaults>
</compile_context>

<pallas_src>
import math

import jax
import jax.numpy as jnp
import numpy as np
from jax.experimental import pallas as pl
from jax.experimental.pallas import tpu as pltpu

# ---------------------------------------------------------------------------
# Model hyper-parameters (small, consistent with the module's forward)
# ---------------------------------------------------------------------------
B = 2        # batch
LQ = 8       # number of decoder queries
LK = 16      # memory (encoder) sequence length
D = 32       # d_model
NHEAD = 4    # attention heads
DH = D // NHEAD
DFF = 64     # feed-forward hidden dim
NUM_LAYERS = 2
RETURN_INTERMEDIATE = True
EPS = 1e-5

# Row indices inside the packed per-layer "vector table" (all length-D params).
(_V_SA_BQ, _V_SA_BK, _V_SA_BV, _V_SA_BO,
 _V_CA_BQ, _V_CA_BK, _V_CA_BV, _V_CA_BO,
 _V_B2, _V_G1, _V_BE1, _V_G2, _V_BE2, _V_G3, _V_BE3) = range(15)
_NVEC = 16   # padded to 16 rows (nicer sublane fill)

# Per-layer weight names used by the (unpacked) parameter dict / reference.
_LAYER_WEIGHT_NAMES = (
    "sa_wq", "sa_wk", "sa_wv", "sa_wo", "sa_bq", "sa_bk", "sa_bv", "sa_bo",
    "ca_wq", "ca_wk", "ca_wv", "ca_wo", "ca_bq", "ca_bk", "ca_bv", "ca_bo",
    "w1", "b1", "w2", "b2",
    "g1", "be1", "g2", "be2", "g3", "be3",
)


# ---------------------------------------------------------------------------
# In-kernel helpers
# ---------------------------------------------------------------------------
def _layer_norm(x, g, b):
    mu = jnp.mean(x, axis=-1, keepdims=True)
    var = jnp.mean((x - mu) ** 2, axis=-1, keepdims=True)
    return (x - mu) * jax.lax.rsqrt(var + EPS) * g + b


def _attention(q, k, v, wo, bo, lq, lk):
    """Multi-head attention on flattened (B*lq, D) / (B*lk, D) projections.

    Attention is block-diagonal over the batch, heads are contiguous DH-wide
    slices of the feature dim (PyTorch nn.MultiheadAttention convention).
    Static Python loops are fully unrolled at trace time inside the kernel.
    """
    scale = 1.0 / math.sqrt(DH)
    batch_outs = []
    for b in range(B):
        qb = q[b * lq:(b + 1) * lq]          # (lq, D)
        kb_t = k[b * lk:(b + 1) * lk].T      # (D, lk)  one transpose per batch
        vb = v[b * lk:(b + 1) * lk]          # (lk, D)
        heads = []
        for h in range(NHEAD):
            s0 = h * DH
            qh = qb[:, s0:s0 + DH]           # (lq, DH)
            kh_t = kb_t[s0:s0 + DH, :]       # (DH, lk)
            vh = vb[:, s0:s0 + DH]           # (lk, DH)
            sc = jnp.dot(qh, kh_t, preferred_element_type=jnp.float32) * scale
            sc = sc - jnp.max(sc, axis=-1, keepdims=True)
            p = jnp.exp(sc)
            p = p * pl.reciprocal(jnp.sum(p, axis=-1, keepdims=True), approx=True)
            heads.append(jnp.dot(p, vh, preferred_element_type=jnp.float32))
        batch_outs.append(jnp.concatenate(heads, axis=-1))
    o = jnp.concatenate(batch_outs, axis=0)  # (B*lq, D)
    return jnp.dot(o, wo, preferred_element_type=jnp.float32) + bo


# ---------------------------------------------------------------------------
# Fused decoder kernel: one grid step == one decoder layer (whole batch)
# ---------------------------------------------------------------------------
def fused_decoder_kernel(tgt_ref, mem_ref, qpos_ref, kpos_ref,
                         wqkv_ref, wo_ref, wff1_ref, wff2_ref,
                         vec_ref, b1_ref, normw_ref,
                         out_ref, state_ref):
    layer = pl.program_id(0)

    # Initialize the VMEM-resident running decoder state at the first layer.
    @pl.when(layer == 0)
    def _():
        state_ref[...] = tgt_ref[...]

    x = state_ref[...]        # (B*LQ, D) running decoder state
    mem = mem_ref[...]        # (B*LK, D)
    qp = qpos_ref[...]        # (B*LQ, D)
    kp = kpos_ref[...]        # (B*LK, D)

    wsa = wqkv_ref[0, 0]      # (D, 3D)  self-attn  [Wq | Wk | Wv]
    wca = wqkv_ref[0, 1]      # (D, 3D)  cross-attn [Wq | Wk | Wv]
    wsa_o = wo_ref[0, 0]      # (D, D)
    wca_o = wo_ref[0, 1]      # (D, D)
    w1 = wff1_ref[0]          # (D, DFF)
    w2 = wff2_ref[0]          # (DFF, D)
    vec = vec_ref[0]          # (_NVEC, D) packed biases / LN params
    b1 = b1_ref[0]            # (1, DFF)
    nw = normw_ref[...]       # (2, D) shared final norm [gamma; beta]

    def vrow(i):
        return vec[i:i + 1]   # (1, D)

    # --- self attention (q = k = x + query_pos, v = x), post-norm ----------
    tq = x + qp
    qk = jnp.dot(tq, wsa[:, :2 * D], preferred_element_type=jnp.float32)  # fused Q|K
    q = qk[:, :D] + vrow(_V_SA_BQ)
    k = qk[:, D:2 * D] + vrow(_V_SA_BK)
    v = jnp.dot(x, wsa[:, 2 * D:], preferred_element_type=jnp.float32) + vrow(_V_SA_BV)
    sa = _attention(q, k, v, wsa_o, vrow(_V_SA_BO), LQ, LQ)
    x = _layer_norm(x + sa, vrow(_V_G1), vrow(_V_BE1))

    # --- cross attention (q = x + query_pos, k = memory + pos, v = memory) -
    mk = mem + kp
    q = jnp.dot(x + qp, wca[:, :D], preferred_element_type=jnp.float32) + vrow(_V_CA_BQ)
    k = jnp.dot(mk, wca[:, D:2 * D], preferred_element_type=jnp.float32) + vrow(_V_CA_BK)
    v = jnp.dot(mem, wca[:, 2 * D:], preferred_element_type=jnp.float32) + vrow(_V_CA_BV)
    ca = _attention(q, k, v, wca_o, vrow(_V_CA_BO), LQ, LK)
    x = _layer_norm(x + ca, vrow(_V_G2), vrow(_V_BE2))

    # --- feed forward --------------------------------------------------------
    h = jnp.maximum(jnp.dot(x, w1, preferred_element_type=jnp.float32) + b1, 0.0)
    ff = jnp.dot(h, w2, preferred_element_type=jnp.float32) + vrow(_V_B2)
    x = _layer_norm(x + ff, vrow(_V_G3), vrow(_V_BE3))

    # Persist state for the next layer and emit the shared-norm intermediate.
    state_ref[...] = x
    out_ref[0] = _layer_norm(x, nw[0:1], nw[1:2]).astype(out_ref.dtype)


# ---------------------------------------------------------------------------
# Weight packing (26 per-layer tensors -> 6 stacked arrays + shared norm)
# ---------------------------------------------------------------------------
def pack_params(params):
    wqkv, wo, wff1, wff2, vecd, b1 = [], [], [], [], [], []
    for lp in params["layers"]:
        wqkv.append(jnp.stack([
            jnp.concatenate([lp["sa_wq"], lp["sa_wk"], lp["sa_wv"]], axis=1),
            jnp.concatenate([lp["ca_wq"], lp["ca_wk"], lp["ca_wv"]], axis=1),
        ]))
        wo.append(jnp.stack([lp["sa_wo"], lp["ca_wo"]]))
        wff1.append(lp["w1"])
        wff2.append(lp["w2"])
        rows = [lp["sa_bq"], lp["sa_bk"], lp["sa_bv"], lp["sa_bo"],
                lp["ca_bq"], lp["ca_bk"], lp["ca_bv"], lp["ca_bo"],
                lp["b2"], lp["g1"], lp["be1"], lp["g2"], lp["be2"],
                lp["g3"], lp["be3"],
                jnp.zeros((1, D), jnp.float32)]          # pad to _NVEC rows
        vecd.append(jnp.concatenate(rows, axis=0))
        b1.append(lp["b1"])
    return {
        "wqkv": jnp.stack(wqkv),                         # (L, 2, D, 3D)
        "wo": jnp.stack(wo),                             # (L, 2, D, D)
        "wff1": jnp.stack(wff1),                         # (L, D, DFF)
        "wff2": jnp.stack(wff2),                         # (L, DFF, D)
        "vec": jnp.stack(vecd),                          # (L, _NVEC, D)
        "b1": jnp.stack(b1),                             # (L, 1, DFF)
        "normw": jnp.concatenate(
            [params["norm_g"], params["norm_b"]], axis=0),  # (2, D)
    }


# ---------------------------------------------------------------------------
# Wrapper: single pallas_call over all layers
# ---------------------------------------------------------------------------
@jax.jit
def query_transformer_decoder(tgt, memory, query_pos, pos, packed):
    """Mirrors TransformerDecoder.forward (return_intermediate=True)."""
    tgt2 = tgt.reshape(B * LQ, D)
    mem2 = memory.reshape(B * LK, D)
    qp2 = query_pos.reshape(B * LQ, D)
    kp2 = pos.reshape(B * LK, D)

    out = pl.pallas_call(
        fused_decoder_kernel,
        out_shape=jax.ShapeDtypeStruct((NUM_LAYERS, B * LQ, D), jnp.float32),
        grid=(NUM_LAYERS,),
        in_specs=[
            pl.BlockSpec((B * LQ, D), lambda l: (0, 0)),             # tgt
            pl.BlockSpec((B * LK, D), lambda l: (0, 0)),             # memory
            pl.BlockSpec((B * LQ, D), lambda l: (0, 0)),             # query_pos
            pl.BlockSpec((B * LK, D), lambda l: (0, 0)),             # pos
            pl.BlockSpec((1, 2, D, 3 * D), lambda l: (l, 0, 0, 0)),  # wqkv
            pl.BlockSpec((1, 2, D, D), lambda l: (l, 0, 0, 0)),      # wo
            pl.BlockSpec((1, D, DFF), lambda l: (l, 0, 0)),          # w1
            pl.BlockSpec((1, DFF, D), lambda l: (l, 0, 0)),          # w2
            pl.BlockSpec((1, _NVEC, D), lambda l: (l, 0, 0)),        # vec table
            pl.BlockSpec((1, 1, DFF), lambda l: (l, 0, 0)),          # b1
            pl.BlockSpec((2, D), lambda l: (0, 0)),                  # final norm
        ],
        out_specs=pl.BlockSpec((1, B * LQ, D), lambda l: (l, 0, 0)),
        scratch_shapes=[pltpu.VMEM((B * LQ, D), jnp.float32)],
        compiler_params=pltpu.CompilerParams(
            dimension_semantics=("arbitrary",)),   # layers carry state -> sequential
    )(tgt2, mem2, qp2, kp2,
      packed["wqkv"], packed["wo"], packed["wff1"], packed["wff2"],
      packed["vec"], packed["b1"], packed["normw"])

    inter = out.reshape(NUM_LAYERS, B, LQ, D)
    if RETURN_INTERMEDIATE:
        return inter          # (num_layers, B, LQ, D), last entry == norm(final)
    return inter[-1]


# ---------------------------------------------------------------------------
# Deterministic parameter init + pure-JAX reference for verification
# ---------------------------------------------------------------------------
def init_params(key):
    layers = []
    for _ in range(NUM_LAYERS):
        lp = {}
        for name in _LAYER_WEIGHT_NAMES:
            key, sub = jax.random.split(key)
            if name.startswith("g"):           # layernorm gains g1/g2/g3
                lp[name] = jnp.ones((1, D), jnp.float32)
            elif name.startswith("be"):        # layernorm biases
                lp[name] = jnp.zeros((1, D), jnp.float32)
            elif name == "w1":
                lp[name] = 0.05 * jax.random.normal(sub, (D, DFF), jnp.float32)
            elif name == "b1":
                lp[name] = 0.01 * jax.random.normal(sub, (1, DFF), jnp.float32)
            elif name == "w2":
                lp[name] = 0.05 * jax.random.normal(sub, (DFF, D), jnp.float32)
            elif name.startswith(("sa_b", "ca_b")) or name == "b2":
                lp[name] = 0.01 * jax.random.normal(sub, (1, D), jnp.float32)
            else:                              # attention projection matrices
                lp[name] = 0.05 * jax.random.normal(sub, (D, D), jnp.float32)
        layers.append(lp)
    return {"layers": layers,
            "norm_g": jnp.ones((1, D), jnp.float32),
            "norm_b": jnp.zeros((1, D), jnp.float32)}


def _ref_ln(x, g, b):
    mu = jnp.mean(x, -1, keepdims=True)
    var = jnp.mean((x - mu) ** 2, -1, keepdims=True)
    return (x - mu) * jax.lax.rsqrt(var + EPS) * g + b


def _ref_mha(q_in, k_in, v_in, wq, wk, wv, wo, bq, bk, bv, bo):
    q = jnp.einsum("bld,de->ble", q_in, wq) + bq
    k = jnp.einsum("bld,de->ble", k_in, wk) + bk
    v = jnp.einsum("bld,de->ble", v_in, wv) + bv
    Bq, Lq, _ = q.shape
    Lk = k.shape[1]
    qh = q.reshape(Bq, Lq, NHEAD, DH)
    kh = k.reshape(Bq, Lk, NHEAD, DH)
    vh = v.reshape(Bq, Lk, NHEAD, DH)
    s = jnp.einsum("blhd,bmhd->bhlm", qh, kh) / math.sqrt(DH)
    p = jax.nn.softmax(s, axis=-1)
    o = jnp.einsum("bhlm,bmhd->blhd", p, vh).reshape(Bq, Lq, D)
    return jnp.einsum("bld,de->ble", o, wo) + bo


def reference_forward(tgt, memory, qp, kp, params):
    out = tgt
    inter = []
    for lp in params["layers"]:
        sa = _ref_mha(out + qp, out + qp, out,
                      lp["sa_wq"], lp["sa_wk"], lp["sa_wv"], lp["sa_wo"],
                      lp["sa_bq"], lp["sa_bk"], lp["sa_bv"], lp["sa_bo"])
        x = _ref_ln(out + sa, lp["g1"], lp["be1"])
        ca = _ref_mha(x + qp, memory + kp, memory,
                      lp["ca_wq"], lp["ca_wk"], lp["ca_wv"], lp["ca_wo"],
                      lp["ca_bq"], lp["ca_bk"], lp["ca_bv"], lp["ca_bo"])
        x = _ref_ln(x + ca, lp["g2"], lp["be2"])
        ff = jnp.einsum("blf,fd->bld",
                        jnp.maximum(jnp.einsum("bld,df->blf", x, lp["w1"]) + lp["b1"], 0.0),
                        lp["w2"]) + lp["b2"]
        out = _ref_ln(x + ff, lp["g3"], lp["be3"])
        inter.append(_ref_ln(out, params["norm_g"], params["norm_b"]))
    final = _ref_ln(out, params["norm_g"], params["norm_b"])
    inter[-1] = final
    return jnp.stack(inter)


if __name__ == "__main__":
    key = jax.random.PRNGKey(0)
    k_tgt, k_mem, k_qp, k_pos, k_params = jax.random.split(key, 5)

    tgt = jax.random.normal(k_tgt, (B, LQ, D), jnp.float32)
    memory = jax.random.normal(k_mem, (B, LK, D), jnp.float32)
    query_pos = jax.random.normal(k_qp, (B, LQ, D), jnp.float32)
    pos = jax.random.normal(k_pos, (B, LK, D), jnp.float32)
    params = init_params(k_params)
    packed = pack_params(params)

    out = jax.block_until_ready(
        query_transformer_decoder(tgt, memory, query_pos, pos, packed))

    ref = jax.block_until_ready(
        reference_forward(tgt, memory, query_pos, pos, params))
    # Tolerance loosened slightly vs f32-exact because the softmax denominator
    # uses the approximate EUP reciprocal (pl.reciprocal(approx=True)).
    np.testing.assert_allclose(np.asarray(out), np.asarray(ref), rtol=2e-3, atol=2e-3)

    print("KERNEL_OK")
</pallas_src>

<mosaic_0001>
module attributes {stable_mosaic.version = 11 : i64} {
  func.func @fused_decoder_kernel(%arg0: i32, %arg1: memref<16x32xf32, #tpu.memory_space<vmem>>, %arg2: memref<32x32xf32, #tpu.memory_space<vmem>>, %arg3: memref<16x32xf32, #tpu.memory_space<vmem>>, %arg4: memref<32x32xf32, #tpu.memory_space<vmem>>, %arg5: memref<1x2x32x96xf32, #tpu.memory_space<vmem>>, %arg6: memref<1x2x32x32xf32, #tpu.memory_space<vmem>>, %arg7: memref<1x32x64xf32, #tpu.memory_space<vmem>>, %arg8: memref<1x64x32xf32, #tpu.memory_space<vmem>>, %arg9: memref<1x16x32xf32, #tpu.memory_space<vmem>>, %arg10: memref<1x1x64xf32, #tpu.memory_space<vmem>>, %arg11: memref<2x32xf32, #tpu.memory_space<vmem>>, %arg12: memref<1x16x32xf32, #tpu.memory_space<vmem>>, %arg13: memref<16x32xf32, #tpu.memory_space<vmem>>) attributes {dimension_semantics = [#tpu.dimension_semantics<arbitrary>], iteration_bounds = array<i64: 2>, scalar_prefetch = 0 : i64, scratch_operands = 1 : i64, tpu.core_type = #tpu.core_type<tc>, window_params = [{pipeline_mode = #tpu.pipeline_mode<synchronous>, transform_indices = @transform_0, window_bounds = array<i64: 16, 32>}, {pipeline_mode = #tpu.pipeline_mode<synchronous>, transform_indices = @transform_1, window_bounds = array<i64: 32, 32>}, {pipeline_mode = #tpu.pipeline_mode<synchronous>, transform_indices = @transform_2, window_bounds = array<i64: 16, 32>}, {pipeline_mode = #tpu.pipeline_mode<synchronous>, transform_indices = @transform_3, window_bounds = array<i64: 32, 32>}, {transform_indices = @transform_4, window_bounds = array<i64: 1, 2, 32, 96>}, {transform_indices = @transform_5, window_bounds = array<i64: 1, 2, 32, 32>}, {transform_indices = @transform_6, window_bounds = array<i64: 1, 32, 64>}, {transform_indices = @transform_7, window_bounds = array<i64: 1, 64, 32>}, {transform_indices = @transform_8, window_bounds = array<i64: 1, 16, 32>}, {transform_indices = @transform_9, window_bounds = array<i64: 1, 1, 64>}, {pipeline_mode = #tpu.pipeline_mode<synchronous>, transform_indices = @transform_10, window_bounds = array<i64: 2, 32>}, {transform_indices = @transform_11, window_bounds = array<i64: 1, 16, 32>}]} {
    %c0_i32 = arith.constant 0 : i32
    %0 = arith.cmpi eq, %arg0, %c0_i32 : i32
    %1 = arith.extui %0 : i1 to i32
    %c0_i32_0 = arith.constant 0 : i32
    %2 = arith.cmpi ne, %1, %c0_i32_0 : i32
    scf.if %2 {
      %c0_151 = arith.constant 0 : index
      %c0_152 = arith.constant 0 : index
      %471 = vector.load %arg1[%c0_151, %c0_152] : memref<16x32xf32, #tpu.memory_space<vmem>>, vector<16x32xf32>
      %c0_153 = arith.constant 0 : index
      %c0_154 = arith.constant 0 : index
      %472 = vector.load %arg13[%c0_153, %c0_154] : memref<16x32xf32, #tpu.memory_space<vmem>>, vector<16x32xf32>
      tpu.vector_store %arg13[%c0_153, %c0_154], %471 {strides = array<i32>} : memref<16x32xf32, #tpu.memory_space<vmem>>, vector<16x32xf32>,
    } else {
    }
    %c0 = arith.constant 0 : index
    %c0_1 = arith.constant 0 : index
    %3 = vector.load %arg13[%c0, %c0_1] : memref<16x32xf32, #tpu.memory_space<vmem>>, vector<16x32xf32>
    %c0_2 = arith.constant 0 : index
    %c0_3 = arith.constant 0 : index
    %4 = vector.load %arg2[%c0_2, %c0_3] : memref<32x32xf32, #tpu.memory_space<vmem>>, vector<32x32xf32>
    %c0_4 = arith.constant 0 : index
    %c0_5 = arith.constant 0 : index
    %5 = vector.load %arg3[%c0_4, %c0_5] : memref<16x32xf32, #tpu.memory_space<vmem>>, vector<16x32xf32>
    %c0_6 = arith.constant 0 : index
    %c0_7 = arith.constant 0 : index
    %6 = vector.load %arg4[%c0_6, %c0_7] : memref<32x32xf32, #tpu.memory_space<vmem>>, vector<32x32xf32>
    %c0_8 = arith.constant 0 : index
    %c0_9 = arith.constant 0 : index
    %c0_10 = arith.constant 0 : index
    %c0_11 = arith.constant 0 : index
    %7 = vector.load %arg5[%c0_8, %c0_9, %c0_10, %c0_11] : memref<1x2x32x96xf32, #tpu.memory_space<vmem>>, vector<1x1x32x96xf32>
    %8 = vector.shape_cast %7 : vector<1x1x32x96xf32> to vector<32x96xf32>
    %c0_12 = arith.constant 0 : index
    %c1 = arith.constant 1 : index
    %c0_13 = arith.constant 0 : index
    %c0_14 = arith.constant 0 : index
    %9 = vector.load %arg5[%c0_12, %c1, %c0_13, %c0_14] : memref<1x2x32x96xf32, #tpu.memory_space<vmem>>, vector<1x1x32x96xf32>
    %10 = vector.shape_cast %9 : vector<1x1x32x96xf32> to vector<32x96xf32>
    %c0_15 = arith.constant 0 : index
    %c0_16 = arith.constant 0 : index
    %c0_17 = arith.constant 0 : index
    %c0_18 = arith.constant 0 : index
    %11 = vector.load %arg6[%c0_15, %c0_16, %c0_17, %c0_18] : memref<1x2x32x32xf32, #tpu.memory_space<vmem>>, vector<1x1x32x32xf32>
    %12 = vector.shape_cast %11 : vector<1x1x32x32xf32> to vector<32x32xf32>
    %c0_19 = arith.constant 0 : index
    %c1_20 = arith.constant 1 : index
    %c0_21 = arith.constant 0 : index
    %c0_22 = arith.constant 0 : index
    %13 = vector.load %arg6[%c0_19, %c1_20, %c0_21, %c0_22] : memref<1x2x32x32xf32, #tpu.memory_space<vmem>>, vector<1x1x32x32xf32>
    %14 = vector.shape_cast %13 : vector<1x1x32x32xf32> to vector<32x32xf32>
    %c0_23 = arith.constant 0 : index
    %c0_24 = arith.constant 0 : index
    %c0_25 = arith.constant 0 : index
    %15 = vector.load %arg7[%c0_23, %c0_24, %c0_25] : memref<1x32x64xf32, #tpu.memory_space<vmem>>, vector<1x32x64xf32>
    %16 = vector.shape_cast %15 : vector<1x32x64xf32> to vector<32x64xf32>
    %c0_26 = arith.constant 0 : index
    %c0_27 = arith.constant 0 : index
    %c0_28 = arith.constant 0 : index
    %17 = vector.load %arg8[%c0_26, %c0_27, %c0_28] : memref<1x64x32xf32, #tpu.memory_space<vmem>>, vector<1x64x32xf32>
    %18 = vector.shape_cast %17 : vector<1x64x32xf32> to vector<64x32xf32>
    %c0_29 = arith.constant 0 : index
    %c0_30 = arith.constant 0 : index
    %c0_31 = arith.constant 0 : index
    %19 = vector.load %arg9[%c0_29, %c0_30, %c0_31] : memref<1x16x32xf32, #tpu.memory_space<vmem>>, vector<1x16x32xf32>
    %20 = vector.shape_cast %19 : vector<1x16x32xf32> to vector<16x32xf32>
    %c0_32 = arith.constant 0 : index
    %c0_33 = arith.constant 0 : index
    %c0_34 = arith.constant 0 : index
    %21 = vector.load %arg10[%c0_32, %c0_33, %c0_34] : memref<1x1x64xf32, #tpu.memory_space<vmem>>, vector<1x1x64xf32>
    %22 = vector.shape_cast %21 : vector<1x1x64xf32> to vector<1x64xf32>
    %c0_35 = arith.constant 0 : index
    %c0_36 = arith.constant 0 : index
    %23 = vector.load %arg11[%c0_35, %c0_36] : memref<2x32xf32, #tpu.memory_space<vmem>>, vector<2x32xf32>
    %24 = arith.addf %3, %5 : vector<16x32xf32>
    %25 = vector.extract_strided_slice %8 {offsets = [0, 0], sizes = [32, 64], strides = [1, 1]} : vector<32x96xf32> to vector<32x64xf32>
    %cst = arith.constant dense<0.000000e+00> : vector<16x64xf32>
    %26 = tpu.matmul %24, %25, %cst {dimension_numbers = #tpu.dot_dimension_numbers<[1], [0], [0], [1], [0, 0, 1, 1], [], []>} : vector<16x32xf32>, vector<32x64xf32>, vector<16x64xf32> -> vector<16x64xf32>
    %27 = vector.extract_strided_slice %26 {offsets = [0, 0], sizes = [16, 32], strides = [1, 1]} : vector<16x64xf32> to vector<16x32xf32>
    %28 = vector.extract_strided_slice %20 {offsets = [0, 0], sizes = [1, 32], strides = [1, 1]} : vector<16x32xf32> to vector<1x32xf32>
    %29 = vector.broadcast %28 : vector<1x32xf32> to vector<16x32xf32>
    %30 = arith.addf %27, %29 : vector<16x32xf32>
    %31 = vector.extract_strided_slice %26 {offsets = [0, 32], sizes = [16, 32], strides = [1, 1]} : vector<16x64xf32> to vector<16x32xf32>
    %32 = vector.extract_strided_slice %20 {offsets = [1, 0], sizes = [1, 32], strides = [1, 1]} : vector<16x32xf32> to vector<1x32xf32>
    %33 = vector.broadcast %32 : vector<1x32xf32> to vector<16x32xf32>
    %34 = arith.addf %31, %33 : vector<16x32xf32>
    %35 = vector.extract_strided_slice %8 {offsets = [0, 64], sizes = [32, 32], strides = [1, 1]} : vector<32x96xf32> to vector<32x32xf32>
    %cst_37 = arith.constant dense<0.000000e+00> : vector<16x32xf32>
    %36 = tpu.matmul %3, %35, %cst_37 {dimension_numbers = #tpu.dot_dimension_numbers<[1], [0], [0], [1], [0, 0, 1, 1], [], []>} : vector<16x32xf32>, vector<32x32xf32>, vector<16x32xf32> -> vector<16x32xf32>
    %37 = vector.extract_strided_slice %20 {offsets = [2, 0], sizes = [1, 32], strides = [1, 1]} : vector<16x32xf32> to vector<1x32xf32>
    %38 = vector.broadcast %37 : vector<1x32xf32> to vector<16x32xf32>
    %39 = arith.addf %36, %38 : vector<16x32xf32>
    %40 = vector.extract_strided_slice %20 {offsets = [3, 0], sizes = [1, 32], strides = [1, 1]} : vector<16x32xf32> to vector<1x32xf32>
    %41 = vector.extract_strided_slice %30 {offsets = [0, 0], sizes = [8, 32], strides = [1, 1]} : vector<16x32xf32> to vector<8x32xf32>
    %42 = vector.extract_strided_slice %34 {offsets = [0, 0], sizes = [8, 32], strides = [1, 1]} : vector<16x32xf32> to vector<8x32xf32>
    %43 = tpu.transpose %42, [1, 0] : vector<8x32xf32> -> vector<32x8xf32>
    %44 = vector.extract_strided_slice %39 {offsets = [0, 0], sizes = [8, 32], strides = [1, 1]} : vector<16x32xf32> to vector<8x32xf32>
    %45 = vector.extract_strided_slice %41 {offsets = [0, 0], sizes = [8, 8], strides = [1, 1]} : vector<8x32xf32> to vector<8x8xf32>
    %46 = vector.extract_strided_slice %43 {offsets = [0, 0], sizes = [8, 8], strides = [1, 1]} : vector<32x8xf32> to vector<8x8xf32>
    %47 = vector.extract_strided_slice %44 {offsets = [0, 0], sizes = [8, 8], strides = [1, 1]} : vector<8x32xf32> to vector<8x8xf32>
    %cst_38 = arith.constant dense<0.000000e+00> : vector<8x8xf32>
    %48 = tpu.matmul %45, %46, %cst_38 {dimension_numbers = #tpu.dot_dimension_numbers<[1], [0], [0], [1], [0, 0, 1, 1], [], []>} : vector<8x8xf32>, vector<8x8xf32>, vector<8x8xf32> -> vector<8x8xf32>
    %cst_39 = arith.constant 0.353553385 : f32
    %49 = vector.broadcast %cst_39 : f32 to vector<8x8xf32>
    %50 = arith.mulf %48, %49 : vector<8x8xf32>
    %cst_40 = arith.constant dense<0xFF800000> : vector<8xf32>
    %51 = vector.multi_reduction <maximumf>, %50, %cst_40 [1] : vector<8x8xf32> to vector<8xf32>
    %52 = vector.shape_cast %51 : vector<8xf32> to vector<8x1xf32>
    %53 = vector.broadcast %52 : vector<8x1xf32> to vector<8x8xf32>
    %54 = arith.subf %50, %53 : vector<8x8xf32>
    %55 = math.exp %54 : vector<8x8xf32>
    %cst_41 = arith.constant dense<0.000000e+00> : vector<8xf32>
    %56 = vector.multi_reduction <add>, %55, %cst_41 [1] : vector<8x8xf32> to vector<8xf32>
    %57 = vector.shape_cast %56 : vector<8xf32> to vector<8x1xf32>
    %58 = tpu.reciprocal %57 {approx = true} : vector<8x1xf32> -> vector<8x1xf32>
    %59 = vector.broadcast %58 : vector<8x1xf32> to vector<8x8xf32>
    %60 = arith.mulf %55, %59 : vector<8x8xf32>
    %cst_42 = arith.constant dense<0.000000e+00> : vector<8x8xf32>
    %61 = tpu.matmul %60, %47, %cst_42 {dimension_numbers = #tpu.dot_dimension_numbers<[1], [0], [0], [1], [0, 0, 1, 1], [], []>} : vector<8x8xf32>, vector<8x8xf32>, vector<8x8xf32> -> vector<8x8xf32>
    %62 = vector.extract_strided_slice %41 {offsets = [0, 8], sizes = [8, 8], strides = [1, 1]} : vector<8x32xf32> to vector<8x8xf32>
    %63 = vector.extract_strided_slice %43 {offsets = [8, 0], sizes = [8, 8], strides = [1, 1]} : vector<32x8xf32> to vector<8x8xf32>
    %64 = vector.extract_strided_slice %44 {offsets = [0, 8], sizes = [8, 8], strides = [1, 1]} : vector<8x32xf32> to vector<8x8xf32>
    %cst_43 = arith.constant dense<0.000000e+00> : vector<8x8xf32>
    %65 = tpu.matmul %62, %63, %cst_43 {dimension_numbers = #tpu.dot_dimension_numbers<[1], [0], [0], [1], [0, 0, 1, 1], [], []>} : vector<8x8xf32>, vector<8x8xf32>, vector<8x8xf32> -> vector<8x8xf32>
    %cst_44 = arith.constant 0.353553385 : f32
    %66 = vector.broadcast %cst_44 : f32 to vector<8x8xf32>
    %67 = arith.mulf %65, %66 : vector<8x8xf32>
    %cst_45 = arith.constant dense<0xFF800000> : vector<8xf32>
    %68 = vector.multi_reduction <maximumf>, %67, %cst_45 [1] : vector<8x8xf32> to vector<8xf32>
    %69 = vector.shape_cast %68 : vector<8xf32> to vector<8x1xf32>
    %70 = vector.broadcast %69 : vector<8x1xf32> to vector<8x8xf32>
    %71 = arith.subf %67, %70 : vector<8x8xf32>
    %72 = math.exp %71 : vector<8x8xf32>
    %cst_46 = arith.constant dense<0.000000e+00> : vector<8xf32>
    %73 = vector.multi_reduction <add>, %72, %cst_46 [1] : vector<8x8xf32> to vector<8xf32>
    %74 = vector.shape_cast %73 : vector<8xf32> to vector<8x1xf32>
    %75 = tpu.reciprocal %74 {approx = true} : vector<8x1xf32> -> vector<8x1xf32>
    %76 = vector.broadcast %75 : vector<8x1xf32> to vector<8x8xf32>
    %77 = arith.mulf %72, %76 : vector<8x8xf32>
    %cst_47 = arith.constant dense<0.000000e+00> : vector<8x8xf32>
    %78 = tpu.matmul %77, %64, %cst_47 {dimension_numbers = #tpu.dot_dimension_numbers<[1], [0], [0], [1], [0, 0, 1, 1], [], []>} : vector<8x8xf32>, vector<8x8xf32>, vector<8x8xf32> -> vector<8x8xf32>
    %79 = vector.extract_strided_slice %41 {offsets = [0, 16], sizes = [8, 8], strides = [1, 1]} : vector<8x32xf32> to vector<8x8xf32>
    %80 = vector.extract_strided_slice %43 {offsets = [16, 0], sizes = [8, 8], strides = [1, 1]} : vector<32x8xf32> to vector<8x8xf32>
    %81 = vector.extract_strided_slice %44 {offsets = [0, 16], sizes = [8, 8], strides = [1, 1]} : vector<8x32xf32> to vector<8x8xf32>
    %cst_48 = arith.constant dense<0.000000e+00> : vector<8x8xf32>
    %82 = tpu.matmul %79, %80, %cst_48 {dimension_numbers = #tpu.dot_dimension_numbers<[1], [0], [0], [1], [0, 0, 1, 1], [], []>} : vector<8x8xf32>, vector<8x8xf32>, vector<8x8xf32> -> vector<8x8xf32>
    %cst_49 = arith.constant 0.353553385 : f32
    %83 = vector.broadcast %cst_49 : f32 to vector<8x8xf32>
    %84 = arith.mulf %82, %83 : vector<8x8xf32>
    %cst_50 = arith.constant dense<0xFF800000> : vector<8xf32>
    %85 = vector.multi_reduction <maximumf>, %84, %cst_50 [1] : vector<8x8xf32> to vector<8xf32>
    %86 = vector.shape_cast %85 : vector<8xf32> to vector<8x1xf32>
    %87 = vector.broadcast %86 : vector<8x1xf32> to vector<8x8xf32>
    %88 = arith.subf %84, %87 : vector<8x8xf32>
    %89 = math.exp %88 : vector<8x8xf32>
    %cst_51 = arith.constant dense<0.000000e+00> : vector<8xf32>
    %90 = vector.multi_reduction <add>, %89, %cst_51 [1] : vector<8x8xf32> to vector<8xf32>
    %91 = vector.shape_cast %90 : vector<8xf32> to vector<8x1xf32>
    %92 = tpu.reciprocal %91 {approx = true} : vector<8x1xf32> -> vector<8x1xf32>
    %93 = vector.broadcast %92 : vector<8x1xf32> to vector<8x8xf32>
    %94 = arith.mulf %89, %93 : vector<8x8xf32>
    %cst_52 = arith.constant dense<0.000000e+00> : vector<8x8xf32>
    %95 = tpu.matmul %94, %81, %cst_52 {dimension_numbers = #tpu.dot_dimension_numbers<[1], [0], [0], [1], [0, 0, 1, 1], [], []>} : vector<8x8xf32>, vector<8x8xf32>, vector<8x8xf32> -> vector<8x8xf32>
    %96 = vector.extract_strided_slice %41 {offsets = [0, 24], sizes = [8, 8], strides = [1, 1]} : vector<8x32xf32> to vector<8x8xf32>
    %97 = vector.extract_strided_slice %43 {offsets = [24, 0], sizes = [8, 8], strides = [1, 1]} : vector<32x8xf32> to vector<8x8xf32>
    %98 = vector.extract_strided_slice %44 {offsets = [0, 24], sizes = [8, 8], strides = [1, 1]} : vector<8x32xf32> to vector<8x8xf32>
    %cst_53 = arith.constant dense<0.000000e+00> : vector<8x8xf32>
    %99 = tpu.matmul %96, %97, %cst_53 {dimension_numbers = #tpu.dot_dimension_numbers<[1], [0], [0], [1], [0, 0, 1, 1], [], []>} : vector<8x8xf32>, vector<8x8xf32>, vector<8x8xf32> -> vector<8x8xf32>
    %cst_54 = arith.constant 0.353553385 : f32
    %100 = vector.broadcast %cst_54 : f32 to vector<8x8xf32>
    %101 = arith.mulf %99, %100 : vector<8x8xf32>
    %cst_55 = arith.constant dense<0xFF800000> : vector<8xf32>
    %102 = vector.multi_reduction <maximumf>, %101, %cst_55 [1] : vector<8x8xf32> to vector<8xf32>
    %103 = vector.shape_cast %102 : vector<8xf32> to vector<8x1xf32>
    %104 = vector.broadcast %103 : vector<8x1xf32> to vector<8x8xf32>
    %105 = arith.subf %101, %104 : vector<8x8xf32>
    %106 = math.exp %105 : vector<8x8xf32>
    %cst_56 = arith.constant dense<0.000000e+00> : vector<8xf32>
    %107 = vector.multi_reduction <add>, %106, %cst_56 [1] : vector<8x8xf32> to vector<8xf32>
    %108 = vector.shape_cast %107 : vector<8xf32> to vector<8x1xf32>
    %109 = tpu.reciprocal %108 {approx = true} : vector<8x1xf32> -> vector<8x1xf32>
    %110 = vector.broadcast %109 : vector<8x1xf32> to vector<8x8xf32>
    %111 = arith.mulf %106, %110 : vector<8x8xf32>
    %cst_57 = arith.constant dense<0.000000e+00> : vector<8x8xf32>
    %112 = tpu.matmul %111, %98, %cst_57 {dimension_numbers = #tpu.dot_dimension_numbers<[1], [0], [0], [1], [0, 0, 1, 1], [], []>} : vector<8x8xf32>, vector<8x8xf32>, vector<8x8xf32> -> vector<8x8xf32>
    %113 = tpu.concatenate %61, %78, %95, %112 in 1 : vector<8x8xf32>, vector<8x8xf32>, vector<8x8xf32>, vector<8x8xf32> -> vector<8x32xf32>
    %114 = vector.extract_strided_slice %30 {offsets = [8, 0], sizes = [8, 32], strides = [1, 1]} : vector<16x32xf32> to vector<8x32xf32>
    %115 = vector.extract_strided_slice %34 {offsets = [8, 0], sizes = [8, 32], strides = [1, 1]} : vector<16x32xf32> to vector<8x32xf32>
    %116 = tpu.transpose %115, [1, 0] : vector<8x32xf32> -> vector<32x8xf32>
    %117 = vector.extract_strided_slice %39 {offsets = [8, 0], sizes = [8, 32], strides = [1, 1]} : vector<16x32xf32> to vector<8x32xf32>
    %118 = vector.extract_strided_slice %114 {offsets = [0, 0], sizes = [8, 8], strides = [1, 1]} : vector<8x32xf32> to vector<8x8xf32>
    %119 = vector.extract_strided_slice %116 {offsets = [0, 0], sizes = [8, 8], strides = [1, 1]} : vector<32x8xf32> to vector<8x8xf32>
    %120 = vector.extract_strided_slice %117 {offsets = [0, 0], sizes = [8, 8], strides = [1, 1]} : vector<8x32xf32> to vector<8x8xf32>
    %cst_58 = arith.constant dense<0.000000e+00> : vector<8x8xf32>
    %121 = tpu.matmul %118, %119, %cst_58 {dimension_numbers = #tpu.dot_dimension_numbers<[1], [0], [0], [1], [0, 0, 1, 1], [], []>} : vector<8x8xf32>, vector<8x8xf32>, vector<8x8xf32> -> vector<8x8xf32>
    %cst_59 = arith.constant 0.353553385 : f32
    %122 = vector.broadcast %cst_59 : f32 to vector<8x8xf32>
    %123 = arith.mulf %121, %122 : vector<8x8xf32>
    %cst_60 = arith.constant dense<0xFF800000> : vector<8xf32>
    %124 = vector.multi_reduction <maximumf>, %123, %cst_60 [1] : vector<8x8xf32> to vector<8xf32>
    %125 = vector.shape_cast %124 : vector<8xf32> to vector<8x1xf32>
    %126 = vector.broadcast %125 : vector<8x1xf32> to vector<8x8xf32>
    %127 = arith.subf %123, %126 : vector<8x8xf32>
    %128 = math.exp %127 : vector<8x8xf32>
    %cst_61 = arith.constant dense<0.000000e+00> : vector<8xf32>
    %129 = vector.multi_reduction <add>, %128, %cst_61 [1] : vector<8x8xf32> to vector<8xf32>
    %130 = vector.shape_cast %129 : vector<8xf32> to vector<8x1xf32>
    %131 = tpu.reciprocal %130 {approx = true} : vector<8x1xf32> -> vector<8x1xf32>
    %132 = vector.broadcast %131 : vector<8x1xf32> to vector<8x8xf32>
    %133 = arith.mulf %128, %132 : vector<8x8xf32>
    %cst_62 = arith.constant dense<0.000000e+00> : vector<8x8xf32>
    %134 = tpu.matmul %133, %120, %cst_62 {dimension_numbers = #tpu.dot_dimension_numbers<[1], [0], [0], [1], [0, 0, 1, 1], [], []>} : vector<8x8xf32>, vector<8x8xf32>, vector<8x8xf32> -> vector<8x8xf32>
    %135 = vector.extract_strided_slice %114 {offsets = [0, 8], sizes = [8, 8], strides = [1, 1]} : vector<8x32xf32> to vector<8x8xf32>
    %136 = vector.extract_strided_slice %116 {offsets = [8, 0], sizes = [8, 8], strides = [1, 1]} : vector<32x8xf32> to vector<8x8xf32>
    %137 = vector.extract_strided_slice %117 {offsets = [0, 8], sizes = [8, 8], strides = [1, 1]} : vector<8x32xf32> to vector<8x8xf32>
    %cst_63 = arith.constant dense<0.000000e+00> : vector<8x8xf32>
    %138 = tpu.matmul %135, %136, %cst_63 {dimension_numbers = #tpu.dot_dimension_numbers<[1], [0], [0], [1], [0, 0, 1, 1], [], []>} : vector<8x8xf32>, vector<8x8xf32>, vector<8x8xf32> -> vector<8x8xf32>
    %cst_64 = arith.constant 0.353553385 : f32
    %139 = vector.broadcast %cst_64 : f32 to vector<8x8xf32>
    %140 = arith.mulf %138, %139 : vector<8x8xf32>
    %cst_65 = arith.constant dense<0xFF800000> : vector<8xf32>
    %141 = vector.multi_reduction <maximumf>, %140, %cst_65 [1] : vector<8x8xf32> to vector<8xf32>
    %142 = vector.shape_cast %141 : vector<8xf32> to vector<8x1xf32>
    %143 = vector.broadcast %142 : vector<8x1xf32> to vector<8x8xf32>
    %144 = arith.subf %140, %143 : vector<8x8xf32>
    %145 = math.exp %144 : vector<8x8xf32>
    %cst_66 = arith.constant dense<0.000000e+00> : vector<8xf32>
    %146 = vector.multi_reduction <add>, %145, %cst_66 [1] : vector<8x8xf32> to vector<8xf32>
    %147 = vector.shape_cast %146 : vector<8xf32> to vector<8x1xf32>
    %148 = tpu.reciprocal %147 {approx = true} : vector<8x1xf32> -> vector<8x1xf32>
    %149 = vector.broadcast %148 : vector<8x1xf32> to vector<8x8xf32>
    %150 = arith.mulf %145, %149 : vector<8x8xf32>
    %cst_67 = arith.constant dense<0.000000e+00> : vector<8x8xf32>
    %151 = tpu.matmul %150, %137, %cst_67 {dimension_numbers = #tpu.dot_dimension_numbers<[1], [0], [0], [1], [0, 0, 1, 1], [], []>} : vector<8x8xf32>, vector<8x8xf32>, vector<8x8xf32> -> vector<8x8xf32>
    %152 = vector.extract_strided_slice %114 {offsets = [0, 16], sizes = [8, 8], strides = [1, 1]} : vector<8x32xf32> to vector<8x8xf32>
    %153 = vector.extract_strided_slice %116 {offsets = [16, 0], sizes = [8, 8], strides = [1, 1]} : vector<32x8xf32> to vector<8x8xf32>
    %154 = vector.extract_strided_slice %117 {offsets = [0, 16], sizes = [8, 8], strides = [1, 1]} : vector<8x32xf32> to vector<8x8xf32>
    %cst_68 = arith.constant dense<0.000000e+00> : vector<8x8xf32>
    %155 = tpu.matmul %152, %153, %cst_68 {dimension_numbers = #tpu.dot_dimension_numbers<[1], [0], [0], [1], [0, 0, 1, 1], [], []>} : vector<8x8xf32>, vector<8x8xf32>, vector<8x8xf32> -> vector<8x8xf32>
    %cst_69 = arith.constant 0.353553385 : f32
    %156 = vector.broadcast %cst_69 : f32 to vector<8x8xf32>
    %157 = arith.mulf %155, %156 : vector<8x8xf32>
    %cst_70 = arith.constant dense<0xFF800000> : vector<8xf32>
    %158 = vector.multi_reduction <maximumf>, %157, %cst_70 [1] : vector<8x8xf32> to vector<8xf32>
    %159 = vector.shape_cast %158 : vector<8xf32> to vector<8x1xf32>
    %160 = vector.broadcast %159 : vector<8x1xf32> to vector<8x8xf32>
    %161 = arith.subf %157, %160 : vector<8x8xf32>
    %162 = math.exp %161 : vector<8x8xf32>
    %cst_71 = arith.constant dense<0.000000e+00> : vector<8xf32>
    %163 = vector.multi_reduction <add>, %162, %cst_71 [1] : vector<8x8xf32> to vector<8xf32>
    %164 = vector.shape_cast %163 : vector<8xf32> to vector<8x1xf32>
    %165 = tpu.reciprocal %164 {approx = true} : vector<8x1xf32> -> vector<8x1xf32>
    %166 = vector.broadcast %165 : vector<8x1xf32> to vector<8x8xf32>
    %167 = arith.mulf %162, %166 : vector<8x8xf32>
    %cst_72 = arith.constant dense<0.000000e+00> : vector<8x8xf32>
    %168 = tpu.matmul %167, %154, %cst_72 {dimension_numbers = #tpu.dot_dimension_numbers<[1], [0], [0], [1], [0, 0, 1, 1], [], []>} : vector<8x8xf32>, vector<8x8xf32>, vector<8x8xf32> -> vector<8x8xf32>
    %169 = vector.extract_strided_slice %114 {offsets = [0, 24], sizes = [8, 8], strides = [1, 1]} : vector<8x32xf32> to vector<8x8xf32>
    %170 = vector.extract_strided_slice %116 {offsets = [24, 0], sizes = [8, 8], strides = [1, 1]} : vector<32x8xf32> to vector<8x8xf32>
    %171 = vector.extract_strided_slice %117 {offsets = [0, 24], sizes = [8, 8], strides = [1, 1]} : vector<8x32xf32> to vector<8x8xf32>
    %cst_73 = arith.constant dense<0.000000e+00> : vector<8x8xf32>
    %172 = tpu.matmul %169, %170, %cst_73 {dimension_numbers = #tpu.dot_dimension_numbers<[1], [0], [0], [1], [0, 0, 1, 1], [], []>} : vector<8x8xf32>, vector<8x8xf32>, vector<8x8xf32> -> vector<8x8xf32>
    %cst_74 = arith.constant 0.353553385 : f32
    %173 = vector.broadcast %cst_74 : f32 to vector<8x8xf32>
    %174 = arith.mulf %172, %173 : vector<8x8xf32>
    %cst_75 = arith.constant dense<0xFF800000> : vector<8xf32>
    %175 = vector.multi_reduction <maximumf>, %174, %cst_75 [1] : vector<8x8xf32> to vector<8xf32>
    %176 = vector.shape_cast %175 : vector<8xf32> to vector<8x1xf32>
    %177 = vector.broadcast %176 : vector<8x1xf32> to vector<8x8xf32>
    %178 = arith.subf %174, %177 : vector<8x8xf32>
    %179 = math.exp %178 : vector<8x8xf32>
    %cst_76 = arith.constant dense<0.000000e+00> : vector<8xf32>
    %180 = vector.multi_reduction <add>, %179, %cst_76 [1] : vector<8x8xf32> to vector<8xf32>
    %181 = vector.shape_cast %180 : vector<8xf32> to vector<8x1xf32>
    %182 = tpu.reciprocal %181 {approx = true} : vector<8x1xf32> -> vector<8x1xf32>
    %183 = vector.broadcast %182 : vector<8x1xf32> to vector<8x8xf32>
    %184 = arith.mulf %179, %183 : vector<8x8xf32>
    %cst_77 = arith.constant dense<0.000000e+00> : vector<8x8xf32>
    %185 = tpu.matmul %184, %171, %cst_77 {dimension_numbers = #tpu.dot_dimension_numbers<[1], [0], [0], [1], [0, 0, 1, 1], [], []>} : vector<8x8xf32>, vector<8x8xf32>, vector<8x8xf32> -> vector<8x8xf32>
    %186 = tpu.concatenate %134, %151, %168, %185 in 1 : vector<8x8xf32>, vector<8x8xf32>, vector<8x8xf32>, vector<8x8xf32> -> vector<8x32xf32>
    %187 = tpu.concatenate %113, %186 in 0 : vector<8x32xf32>, vector<8x32xf32> -> vector<16x32xf32>
    %cst_78 = arith.constant dense<0.000000e+00> : vector<16x32xf32>
    %188 = tpu.matmul %187, %12, %cst_78 {dimension_numbers = #tpu.dot_dimension_numbers<[1], [0], [0], [1], [0, 0, 1, 1], [], []>} : vector<16x32xf32>, vector<32x32xf32>, vector<16x32xf32> -> vector<16x32xf32>
    %189 = vector.broadcast %40 : vector<1x32xf32> to vector<16x32xf32>
    %190 = arith.addf %188, %189 : vector<16x32xf32>
    %191 = arith.addf %3, %190 : vector<16x32xf32>
    %192 = vector.extract_strided_slice %20 {offsets = [9, 0], sizes = [1, 32], strides = [1, 1]} : vector<16x32xf32> to vector<1x32xf32>
    %193 = vector.extract_strided_slice %20 {offsets = [10, 0], sizes = [1, 32], strides = [1, 1]} : vector<16x32xf32> to vector<1x32xf32>
    %cst_79 = arith.constant dense<0.000000e+00> : vector<16xf32>
    %194 = vector.multi_reduction <add>, %191, %cst_79 [1] : vector<16x32xf32> to vector<16xf32>
    %195 = vector.shape_cast %194 : vector<16xf32> to vector<16x1xf32>
    %cst_80 = arith.constant 3.200000e+01 : f32
    %196 = vector.broadcast %cst_80 : f32 to vector<16x1xf32>
    %197 = arith.divf %195, %196 : vector<16x1xf32>
    %198 = vector.broadcast %197 : vector<16x1xf32> to vector<16x32xf32>
    %199 = arith.subf %191, %198 : vector<16x32xf32>
    %200 = arith.mulf %199, %199 : vector<16x32xf32>
    %cst_81 = arith.constant dense<0.000000e+00> : vector<16xf32>
    %201 = vector.multi_reduction <add>, %200, %cst_81 [1] : vector<16x32xf32> to vector<16xf32>
    %202 = vector.shape_cast %201 : vector<16xf32> to vector<16x1xf32>
    %cst_82 = arith.constant 3.200000e+01 : f32
    %203 = vector.broadcast %cst_82 : f32 to vector<16x1xf32>
    %204 = arith.divf %202, %203 : vector<16x1xf32>
    %205 = vector.broadcast %197 : vector<16x1xf32> to vector<16x32xf32>
    %206 = arith.subf %191, %205 : vector<16x32xf32>
    %cst_83 = arith.constant 9.99999974E-6 : f32
    %207 = vector.broadcast %cst_83 : f32 to vector<16x1xf32>
    %208 = arith.addf %204, %207 : vector<16x1xf32>
    %209 = math.rsqrt %208 : vector<16x1xf32>
    %210 = vector.broadcast %209 : vector<16x1xf32> to vector<16x32xf32>
    %211 = arith.mulf %206, %210 : vector<16x32xf32>
    %212 = vector.broadcast %192 : vector<1x32xf32> to vector<16x32xf32>
    %213 = arith.mulf %211, %212 : vector<16x32xf32>
    %214 = vector.broadcast %193 : vector<1x32xf32> to vector<16x32xf32>
    %215 = arith.addf %213, %214 : vector<16x32xf32>
    %216 = arith.addf %4, %6 : vector<32x32xf32>
    %217 = arith.addf %215, %5 : vector<16x32xf32>
    %218 = vector.extract_strided_slice %10 {offsets = [0, 0], sizes = [32, 32], strides = [1, 1]} : vector<32x96xf32> to vector<32x32xf32>
    %cst_84 = arith.constant dense<0.000000e+00> : vector<16x32xf32>
    %219 = tpu.matmul %217, %218, %cst_84 {dimension_numbers = #tpu.dot_dimension_numbers<[1], [0], [0], [1], [0, 0, 1, 1], [], []>} : vector<16x32xf32>, vector<32x32xf32>, vector<16x32xf32> -> vector<16x32xf32>
    %220 = vector.extract_strided_slice %20 {offsets = [4, 0], sizes = [1, 32], strides = [1, 1]} : vector<16x32xf32> to vector<1x32xf32>
    %221 = vector.broadcast %220 : vector<1x32xf32> to vector<16x32xf32>
    %222 = arith.addf %219, %221 : vector<16x32xf32>
    %223 = vector.extract_strided_slice %10 {offsets = [0, 32], sizes = [32, 32], strides = [1, 1]} : vector<32x96xf32> to vector<32x32xf32>
    %cst_85 = arith.constant dense<0.000000e+00> : vector<32x32xf32>
    %224 = tpu.matmul %216, %223, %cst_85 {dimension_numbers = #tpu.dot_dimension_numbers<[1], [0], [0], [1], [0, 0, 1, 1], [], []>} : vector<32x32xf32>, vector<32x32xf32>, vector<32x32xf32> -> vector<32x32xf32>
    %225 = vector.extract_strided_slice %20 {offsets = [5, 0], sizes = [1, 32], strides = [1, 1]} : vector<16x32xf32> to vector<1x32xf32>
    %226 = vector.broadcast %225 : vector<1x32xf32> to vector<32x32xf32>
    %227 = arith.addf %224, %226 : vector<32x32xf32>
    %228 = vector.extract_strided_slice %10 {offsets = [0, 64], sizes = [32, 32], strides = [1, 1]} : vector<32x96xf32> to vector<32x32xf32>
    %cst_86 = arith.constant dense<0.000000e+00> : vector<32x32xf32>
    %229 = tpu.matmul %4, %228, %cst_86 {dimension_numbers = #tpu.dot_dimension_numbers<[1], [0], [0], [1], [0, 0, 1, 1], [], []>} : vector<32x32xf32>, vector<32x32xf32>, vector<32x32xf32> -> vector<32x32xf32>
    %230 = vector.extract_strided_slice %20 {offsets = [6, 0], sizes = [1, 32], strides = [1, 1]} : vector<16x32xf32> to vector<1x32xf32>
    %231 = vector.broadcast %230 : vector<1x32xf32> to vector<32x32xf32>
    %232 = arith.addf %229, %231 : vector<32x32xf32>
    %233 = vector.extract_strided_slice %20 {offsets = [7, 0], sizes = [1, 32], strides = [1, 1]} : vector<16x32xf32> to vector<1x32xf32>
    %234 = vector.extract_strided_slice %222 {offsets = [0, 0], sizes = [8, 32], strides = [1, 1]} : vector<16x32xf32> to vector<8x32xf32>
    %235 = vector.extract_strided_slice %227 {offsets = [0, 0], sizes = [16, 32], strides = [1, 1]} : vector<32x32xf32> to vector<16x32xf32>
    %236 = tpu.transpose %235, [1, 0] : vector<16x32xf32> -> vector<32x16xf32>
    %237 = vector.extract_strided_slice %232 {offsets = [0, 0], sizes = [16, 32], strides = [1, 1]} : vector<32x32xf32> to vector<16x32xf32>
    %238 = vector.extract_strided_slice %234 {offsets = [0, 0], sizes = [8, 8], strides = [1, 1]} : vector<8x32xf32> to vector<8x8xf32>
    %239 = vector.extract_strided_slice %236 {offsets = [0, 0], sizes = [8, 16], strides = [1, 1]} : vector<32x16xf32> to vector<8x16xf32>
    %240 = vector.extract_strided_slice %237 {offsets = [0, 0], sizes = [16, 8], strides = [1, 1]} : vector<16x32xf32> to vector<16x8xf32>
    %cst_87 = arith.constant dense<0.000000e+00> : vector<8x16xf32>
    %241 = tpu.matmul %238, %239, %cst_87 {dimension_numbers = #tpu.dot_dimension_numbers<[1], [0], [0], [1], [0, 0, 1, 1], [], []>} : vector<8x8xf32>, vector<8x16xf32>, vector<8x16xf32> -> vector<8x16xf32>
    %cst_88 = arith.constant 0.353553385 : f32
    %242 = vector.broadcast %cst_88 : f32 to vector<8x16xf32>
    %243 = arith.mulf %241, %242 : vector<8x16xf32>
    %cst_89 = arith.constant dense<0xFF800000> : vector<8xf32>
    %244 = vector.multi_reduction <maximumf>, %243, %cst_89 [1] : vector<8x16xf32> to vector<8xf32>
    %245 = vector.shape_cast %244 : vector<8xf32> to vector<8x1xf32>
    %246 = vector.broadcast %245 : vector<8x1xf32> to vector<8x16xf32>
    %247 = arith.subf %243, %246 : vector<8x16xf32>
    %248 = math.exp %247 : vector<8x16xf32>
    %cst_90 = arith.constant dense<0.000000e+00> : vector<8xf32>
    %249 = vector.multi_reduction <add>, %248, %cst_90 [1] : vector<8x16xf32> to vector<8xf32>
    %250 = vector.shape_cast %249 : vector<8xf32> to vector<8x1xf32>
    %251 = tpu.reciprocal %250 {approx = true} : vector<8x1xf32> -> vector<8x1xf32>
    %252 = vector.broadcast %251 : vector<8x1xf32> to vector<8x16xf32>
    %253 = arith.mulf %248, %252 : vector<8x16xf32>
    %cst_91 = arith.constant dense<0.000000e+00> : vector<8x8xf32>
    %254 = tpu.matmul %253, %240, %cst_91 {dimension_numbers = #tpu.dot_dimension_numbers<[1], [0], [0], [1], [0, 0, 1, 1], [], []>} : vector<8x16xf32>, vector<16x8xf32>, vector<8x8xf32> -> vector<8x8xf32>
    %255 = vector.extract_strided_slice %234 {offsets = [0, 8], sizes = [8, 8], strides = [1, 1]} : vector<8x32xf32> to vector<8x8xf32>
    %256 = vector.extract_strided_slice %236 {offsets = [8, 0], sizes = [8, 16], strides = [1, 1]} : vector<32x16xf32> to vector<8x16xf32>
    %257 = vector.extract_strided_slice %237 {offsets = [0, 8], sizes = [16, 8], strides = [1, 1]} : vector<16x32xf32> to vector<16x8xf32>
    %cst_92 = arith.constant dense<0.000000e+00> : vector<8x16xf32>
    %258 = tpu.matmul %255, %256, %cst_92 {dimension_numbers = #tpu.dot_dimension_numbers<[1], [0], [0], [1], [0, 0, 1, 1], [], []>} : vector<8x8xf32>, vector<8x16xf32>, vector<8x16xf32> -> vector<8x16xf32>
    %cst_93 = arith.constant 0.353553385 : f32
    %259 = vector.broadcast %cst_93 : f32 to vector<8x16xf32>
    %260 = arith.mulf %258, %259 : vector<8x16xf32>
    %cst_94 = arith.constant dense<0xFF800000> : vector<8xf32>
    %261 = vector.multi_reduction <maximumf>, %260, %cst_94 [1] : vector<8x16xf32> to vector<8xf32>
    %262 = vector.shape_cast %261 : vector<8xf32> to vector<8x1xf32>
    %263 = vector.broadcast %262 : vector<8x1xf32> to vector<8x16xf32>
    %264 = arith.subf %260, %263 : vector<8x16xf32>
    %265 = math.exp %264 : vector<8x16xf32>
    %cst_95 = arith.constant dense<0.000000e+00> : vector<8xf32>
    %266 = vector.multi_reduction <add>, %265, %cst_95 [1] : vector<8x16xf32> to vector<8xf32>
    %267 = vector.shape_cast %266 : vector<8xf32> to vector<8x1xf32>
    %268 = tpu.reciprocal %267 {approx = true} : vector<8x1xf32> -> vector<8x1xf32>
    %269 = vector.broadcast %268 : vector<8x1xf32> to vector<8x16xf32>
    %270 = arith.mulf %265, %269 : vector<8x16xf32>
    %cst_96 = arith.constant dense<0.000000e+00> : vector<8x8xf32>
    %271 = tpu.matmul %270, %257, %cst_96 {dimension_numbers = #tpu.dot_dimension_numbers<[1], [0], [0], [1], [0, 0, 1, 1], [], []>} : vector<8x16xf32>, vector<16x8xf32>, vector<8x8xf32> -> vector<8x8xf32>
    %272 = vector.extract_strided_slice %234 {offsets = [0, 16], sizes = [8, 8], strides = [1, 1]} : vector<8x32xf32> to vector<8x8xf32>
    %273 = vector.extract_strided_slice %236 {offsets = [16, 0], sizes = [8, 16], strides = [1, 1]} : vector<32x16xf32> to vector<8x16xf32>
    %274 = vector.extract_strided_slice %237 {offsets = [0, 16], sizes = [16, 8], strides = [1, 1]} : vector<16x32xf32> to vector<16x8xf32>
    %cst_97 = arith.constant dense<0.000000e+00> : vector<8x16xf32>
    %275 = tpu.matmul %272, %273, %cst_97 {dimension_numbers = #tpu.dot_dimension_numbers<[1], [0], [0], [1], [0, 0, 1, 1], [], []>} : vector<8x8xf32>, vector<8x16xf32>, vector<8x16xf32> -> vector<8x16xf32>
    %cst_98 = arith.constant 0.353553385 : f32
    %276 = vector.broadcast %cst_98 : f32 to vector<8x16xf32>
    %277 = arith.mulf %275, %276 : vector<8x16xf32>
    %cst_99 = arith.constant dense<0xFF800000> : vector<8xf32>
    %278 = vector.multi_reduction <maximumf>, %277, %cst_99 [1] : vector<8x16xf32> to vector<8xf32>
    %279 = vector.shape_cast %278 : vector<8xf32> to vector<8x1xf32>
    %280 = vector.broadcast %279 : vector<8x1xf32> to vector<8x16xf32>
    %281 = arith.subf %277, %280 : vector<8x16xf32>
    %282 = math.exp %281 : vector<8x16xf32>
    %cst_100 = arith.constant dense<0.000000e+00> : vector<8xf32>
    %283 = vector.multi_reduction <add>, %282, %cst_100 [1] : vector<8x16xf32> to vector<8xf32>
    %284 = vector.shape_cast %283 : vector<8xf32> to vector<8x1xf32>
    %285 = tpu.reciprocal %284 {approx = true} : vector<8x1xf32> -> vector<8x1xf32>
    %286 = vector.broadcast %285 : vector<8x1xf32> to vector<8x16xf32>
    %287 = arith.mulf %282, %286 : vector<8x16xf32>
    %cst_101 = arith.constant dense<0.000000e+00> : vector<8x8xf32>
    %288 = tpu.matmul %287, %274, %cst_101 {dimension_numbers = #tpu.dot_dimension_numbers<[1], [0], [0], [1], [0, 0, 1, 1], [], []>} : vector<8x16xf32>, vector<16x8xf32>, vector<8x8xf32> -> vector<8x8xf32>
    %289 = vector.extract_strided_slice %234 {offsets = [0, 24], sizes = [8, 8], strides = [1, 1]} : vector<8x32xf32> to vector<8x8xf32>
    %290 = vector.extract_strided_slice %236 {offsets = [24, 0], sizes = [8, 16], strides = [1, 1]} : vector<32x16xf32> to vector<8x16xf32>
    %291 = vector.extract_strided_slice %237 {offsets = [0, 24], sizes = [16, 8], strides = [1, 1]} : vector<16x32xf32> to vector<16x8xf32>
    %cst_102 = arith.constant dense<0.000000e+00> : vector<8x16xf32>
    %292 = tpu.matmul %289, %290, %cst_102 {dimension_numbers = #tpu.dot_dimension_numbers<[1], [0], [0], [1], [0, 0, 1, 1], [], []>} : vector<8x8xf32>, vector<8x16xf32>, vector<8x16xf32> -> vector<8x16xf32>
    %cst_103 = arith.constant 0.353553385 : f32
    %293 = vector.broadcast %cst_103 : f32 to vector<8x16xf32>
    %294 = arith.mulf %292, %293 : vector<8x16xf32>
    %cst_104 = arith.constant dense<0xFF800000> : vector<8xf32>
    %295 = vector.multi_reduction <maximumf>, %294, %cst_104 [1] : vector<8x16xf32> to vector<8xf32>
    %296 = vector.shape_cast %295 : vector<8xf32> to vector<8x1xf32>
    %297 = vector.broadcast %296 : vector<8x1xf32> to vector<8x16xf32>
    %298 = arith.subf %294, %297 : vector<8x16xf32>
    %299 = math.exp %298 : vector<8x16xf32>
    %cst_105 = arith.constant dense<0.000000e+00> : vector<8xf32>
    %300 = vector.multi_reduction <add>, %299, %cst_105 [1] : vector<8x16xf32> to vector<8xf32>
    %301 = vector.shape_cast %300 : vector<8xf32> to vector<8x1xf32>
    %302 = tpu.reciprocal %301 {approx = true} : vector<8x1xf32> -> vector<8x1xf32>
    %303 = vector.broadcast %302 : vector<8x1xf32> to vector<8x16xf32>
    %304 = arith.mulf %299, %303 : vector<8x16xf32>
    %cst_106 = arith.constant dense<0.000000e+00> : vector<8x8xf32>
    %305 = tpu.matmul %304, %291, %cst_106 {dimension_numbers = #tpu.dot_dimension_numbers<[1], [0], [0], [1], [0, 0, 1, 1], [], []>} : vector<8x16xf32>, vector<16x8xf32>, vector<8x8xf32> -> vector<8x8xf32>
    %306 = tpu.concatenate %254, %271, %288, %305 in 1 : vector<8x8xf32>, vector<8x8xf32>, vector<8x8xf32>, vector<8x8xf32> -> vector<8x32xf32>
    %307 = vector.extract_strided_slice %222 {offsets = [8, 0], sizes = [8, 32], strides = [1, 1]} : vector<16x32xf32> to vector<8x32xf32>
    %308 = vector.extract_strided_slice %227 {offsets = [16, 0], sizes = [16, 32], strides = [1, 1]} : vector<32x32xf32> to vector<16x32xf32>
    %309 = tpu.transpose %308, [1, 0] : vector<16x32xf32> -> vector<32x16xf32>
    %310 = vector.extract_strided_slice %232 {offsets = [16, 0], sizes = [16, 32], strides = [1, 1]} : vector<32x32xf32> to vector<16x32xf32>
    %311 = vector.extract_strided_slice %307 {offsets = [0, 0], sizes = [8, 8], strides = [1, 1]} : vector<8x32xf32> to vector<8x8xf32>
    %312 = vector.extract_strided_slice %309 {offsets = [0, 0], sizes = [8, 16], strides = [1, 1]} : vector<32x16xf32> to vector<8x16xf32>
    %313 = vector.extract_strided_slice %310 {offsets = [0, 0], sizes = [16, 8], strides = [1, 1]} : vector<16x32xf32> to vector<16x8xf32>
    %cst_107 = arith.constant dense<0.000000e+00> : vector<8x16xf32>
    %314 = tpu.matmul %311, %312, %cst_107 {dimension_numbers = #tpu.dot_dimension_numbers<[1], [0], [0], [1], [0, 0, 1, 1], [], []>} : vector<8x8xf32>, vector<8x16xf32>, vector<8x16xf32> -> vector<8x16xf32>
    %cst_108 = arith.constant 0.353553385 : f32
    %315 = vector.broadcast %cst_108 : f32 to vector<8x16xf32>
    %316 = arith.mulf %314, %315 : vector<8x16xf32>
    %cst_109 = arith.constant dense<0xFF800000> : vector<8xf32>
    %317 = vector.multi_reduction <maximumf>, %316, %cst_109 [1] : vector<8x16xf32> to vector<8xf32>
    %318 = vector.shape_cast %317 : vector<8xf32> to vector<8x1xf32>
    %319 = vector.broadcast %318 : vector<8x1xf32> to vector<8x16xf32>
    %320 = arith.subf %316, %319 : vector<8x16xf32>
    %321 = math.exp %320 : vector<8x16xf32>
    %cst_110 = arith.constant dense<0.000000e+00> : vector<8xf32>
    %322 = vector.multi_reduction <add>, %321, %cst_110 [1] : vector<8x16xf32> to vector<8xf32>
    %323 = vector.shape_cast %322 : vector<8xf32> to vector<8x1xf32>
    %324 = tpu.reciprocal %323 {approx = true} : vector<8x1xf32> -> vector<8x1xf32>
    %325 = vector.broadcast %324 : vector<8x1xf32> to vector<8x16xf32>
    %326 = arith.mulf %321, %325 : vector<8x16xf32>
    %cst_111 = arith.constant dense<0.000000e+00> : vector<8x8xf32>
    %327 = tpu.matmul %326, %313, %cst_111 {dimension_numbers = #tpu.dot_dimension_numbers<[1], [0], [0], [1], [0, 0, 1, 1], [], []>} : vector<8x16xf32>, vector<16x8xf32>, vector<8x8xf32> -> vector<8x8xf32>
    %328 = vector.extract_strided_slice %307 {offsets = [0, 8], sizes = [8, 8], strides = [1, 1]} : vector<8x32xf32> to vector<8x8xf32>
    %329 = vector.extract_strided_slice %309 {offsets = [8, 0], sizes = [8, 16], strides = [1, 1]} : vector<32x16xf32> to vector<8x16xf32>
    %330 = vector.extract_strided_slice %310 {offsets = [0, 8], sizes = [16, 8], strides = [1, 1]} : vector<16x32xf32> to vector<16x8xf32>
    %cst_112 = arith.constant dense<0.000000e+00> : vector<8x16xf32>
    %331 = tpu.matmul %328, %329, %cst_112 {dimension_numbers = #tpu.dot_dimension_numbers<[1], [0], [0], [1], [0, 0, 1, 1], [], []>} : vector<8x8xf32>, vector<8x16xf32>, vector<8x16xf32> -> vector<8x16xf32>
    %cst_113 = arith.constant 0.353553385 : f32
    %332 = vector.broadcast %cst_113 : f32 to vector<8x16xf32>
    %333 = arith.mulf %331, %332 : vector<8x16xf32>
    %cst_114 = arith.constant dense<0xFF800000> : vector<8xf32>
    %334 = vector.multi_reduction <maximumf>, %333, %cst_114 [1] : vector<8x16xf32> to vector<8xf32>
    %335 = vector.shape_cast %334 : vector<8xf32> to vector<8x1xf32>
    %336 = vector.broadcast %335 : vector<8x1xf32> to vector<8x16xf32>
    %337 = arith.subf %333, %336 : vector<8x16xf32>
    %338 = math.exp %337 : vector<8x16xf32>
    %cst_115 = arith.constant dense<0.000000e+00> : vector<8xf32>
    %339 = vector.multi_reduction <add>, %338, %cst_115 [1] : vector<8x16xf32> to vector<8xf32>
    %340 = vector.shape_cast %339 : vector<8xf32> to vector<8x1xf32>
    %341 = tpu.reciprocal %340 {approx = true} : vector<8x1xf32> -> vector<8x1xf32>
    %342 = vector.broadcast %341 : vector<8x1xf32> to vector<8x16xf32>
    %343 = arith.mulf %338, %342 : vector<8x16xf32>
    %cst_116 = arith.constant dense<0.000000e+00> : vector<8x8xf32>
    %344 = tpu.matmul %343, %330, %cst_116 {dimension_numbers = #tpu.dot_dimension_numbers<[1], [0], [0], [1], [0, 0, 1, 1], [], []>} : vector<8x16xf32>, vector<16x8xf32>, vector<8x8xf32> -> vector<8x8xf32>
    %345 = vector.extract_strided_slice %307 {offsets = [0, 16], sizes = [8, 8], strides = [1, 1]} : vector<8x32xf32> to vector<8x8xf32>
    %346 = vector.extract_strided_slice %309 {offsets = [16, 0], sizes = [8, 16], strides = [1, 1]} : vector<32x16xf32> to vector<8x16xf32>
    %347 = vector.extract_strided_slice %310 {offsets = [0, 16], sizes = [16, 8], strides = [1, 1]} : vector<16x32xf32> to vector<16x8xf32>
    %cst_117 = arith.constant dense<0.000000e+00> : vector<8x16xf32>
    %348 = tpu.matmul %345, %346, %cst_117 {dimension_numbers = #tpu.dot_dimension_numbers<[1], [0], [0], [1], [0, 0, 1, 1], [], []>} : vector<8x8xf32>, vector<8x16xf32>, vector<8x16xf32> -> vector<8x16xf32>
    %cst_118 = arith.constant 0.353553385 : f32
    %349 = vector.broadcast %cst_118 : f32 to vector<8x16xf32>
    %350 = arith.mulf %348, %349 : vector<8x16xf32>
    %cst_119 = arith.constant dense<0xFF800000> : vector<8xf32>
    %351 = vector.multi_reduction <maximumf>, %350, %cst_119 [1] : vector<8x16xf32> to vector<8xf32>
    %352 = vector.shape_cast %351 : vector<8xf32> to vector<8x1xf32>
    %353 = vector.broadcast %352 : vector<8x1xf32> to vector<8x16xf32>
    %354 = arith.subf %350, %353 : vector<8x16xf32>
    %355 = math.exp %354 : vector<8x16xf32>
    %cst_120 = arith.constant dense<0.000000e+00> : vector<8xf32>
    %356 = vector.multi_reduction <add>, %355, %cst_120 [1] : vector<8x16xf32> to vector<8xf32>
    %357 = vector.shape_cast %356 : vector<8xf32> to vector<8x1xf32>
    %358 = tpu.reciprocal %357 {approx = true} : vector<8x1xf32> -> vector<8x1xf32>
    %359 = vector.broadcast %358 : vector<8x1xf32> to vector<8x16xf32>
    %360 = arith.mulf %355, %359 : vector<8x16xf32>
    %cst_121 = arith.constant dense<0.000000e+00> : vector<8x8xf32>
    %361 = tpu.matmul %360, %347, %cst_121 {dimension_numbers = #tpu.dot_dimension_numbers<[1], [0], [0], [1], [0, 0, 1, 1], [], []>} : vector<8x16xf32>, vector<16x8xf32>, vector<8x8xf32> -> vector<8x8xf32>
    %362 = vector.extract_strided_slice %307 {offsets = [0, 24], sizes = [8, 8], strides = [1, 1]} : vector<8x32xf32> to vector<8x8xf32>
    %363 = vector.extract_strided_slice %309 {offsets = [24, 0], sizes = [8, 16], strides = [1, 1]} : vector<32x16xf32> to vector<8x16xf32>
    %364 = vector.extract_strided_slice %310 {offsets = [0, 24], sizes = [16, 8], strides = [1, 1]} : vector<16x32xf32> to vector<16x8xf32>
    %cst_122 = arith.constant dense<0.000000e+00> : vector<8x16xf32>
    %365 = tpu.matmul %362, %363, %cst_122 {dimension_numbers = #tpu.dot_dimension_numbers<[1], [0], [0], [1], [0, 0, 1, 1], [], []>} : vector<8x8xf32>, vector<8x16xf32>, vector<8x16xf32> -> vector<8x16xf32>
    %cst_123 = arith.constant 0.353553385 : f32
    %366 = vector.broadcast %cst_123 : f32 to vector<8x16xf32>
    %367 = arith.mulf %365, %366 : vector<8x16xf32>
    %cst_124 = arith.constant dense<0xFF800000> : vector<8xf32>
    %368 = vector.multi_reduction <maximumf>, %367, %cst_124 [1] : vector<8x16xf32> to vector<8xf32>
    %369 = vector.shape_cast %368 : vector<8xf32> to vector<8x1xf32>
    %370 = vector.broadcast %369 : vector<8x1xf32> to vector<8x16xf32>
    %371 = arith.subf %367, %370 : vector<8x16xf32>
    %372 = math.exp %371 : vector<8x16xf32>
    %cst_125 = arith.constant dense<0.000000e+00> : vector<8xf32>
    %373 = vector.multi_reduction <add>, %372, %cst_125 [1] : vector<8x16xf32> to vector<8xf32>
    %374 = vector.shape_cast %373 : vector<8xf32> to vector<8x1xf32>
    %375 = tpu.reciprocal %374 {approx = true} : vector<8x1xf32> -> vector<8x1xf32>
    %376 = vector.broadcast %375 : vector<8x1xf32> to vector<8x16xf32>
    %377 = arith.mulf %372, %376 : vector<8x16xf32>
    %cst_126 = arith.constant dense<0.000000e+00> : vector<8x8xf32>
    %378 = tpu.matmul %377, %364, %cst_126 {dimension_numbers = #tpu.dot_dimension_numbers<[1], [0], [0], [1], [0, 0, 1, 1], [], []>} : vector<8x16xf32>, vector<16x8xf32>, vector<8x8xf32> -> vector<8x8xf32>
    %379 = tpu.concatenate %327, %344, %361, %378 in 1 : vector<8x8xf32>, vector<8x8xf32>, vector<8x8xf32>, vector<8x8xf32> -> vector<8x32xf32>
    %380 = tpu.concatenate %306, %379 in 0 : vector<8x32xf32>, vector<8x32xf32> -> vector<16x32xf32>
    %cst_127 = arith.constant dense<0.000000e+00> : vector<16x32xf32>
    %381 = tpu.matmul %380, %14, %cst_127 {dimension_numbers = #tpu.dot_dimension_numbers<[1], [0], [0], [1], [0, 0, 1, 1], [], []>} : vector<16x32xf32>, vector<32x32xf32>, vector<16x32xf32> -> vector<16x32xf32>
    %382 = vector.broadcast %233 : vector<1x32xf32> to vector<16x32xf32>
    %383 = arith.addf %381, %382 : vector<16x32xf32>
    %384 = arith.addf %215, %383 : vector<16x32xf32>
    %385 = vector.extract_strided_slice %20 {offsets = [11, 0], sizes = [1, 32], strides = [1, 1]} : vector<16x32xf32> to vector<1x32xf32>
    %386 = vector.extract_strided_slice %20 {offsets = [12, 0], sizes = [1, 32], strides = [1, 1]} : vector<16x32xf32> to vector<1x32xf32>
    %cst_128 = arith.constant dense<0.000000e+00> : vector<16xf32>
    %387 = vector.multi_reduction <add>, %384, %cst_128 [1] : vector<16x32xf32> to vector<16xf32>
    %388 = vector.shape_cast %387 : vector<16xf32> to vector<16x1xf32>
    %cst_129 = arith.constant 3.200000e+01 : f32
    %389 = vector.broadcast %cst_129 : f32 to vector<16x1xf32>
    %390 = arith.divf %388, %389 : vector<16x1xf32>
    %391 = vector.broadcast %390 : vector<16x1xf32> to vector<16x32xf32>
    %392 = arith.subf %384, %391 : vector<16x32xf32>
    %393 = arith.mulf %392, %392 : vector<16x32xf32>
    %cst_130 = arith.constant dense<0.000000e+00> : vector<16xf32>
    %394 = vector.multi_reduction <add>, %393, %cst_130 [1] : vector<16x32xf32> to vector<16xf32>
    %395 = vector.shape_cast %394 : vector<16xf32> to vector<16x1xf32>
    %cst_131 = arith.constant 3.200000e+01 : f32
    %396 = vector.broadcast %cst_131 : f32 to vector<16x1xf32>
    %397 = arith.divf %395, %396 : vector<16x1xf32>
    %398 = vector.broadcast %390 : vector<16x1xf32> to vector<16x32xf32>
    %399 = arith.subf %384, %398 : vector<16x32xf32>
    %cst_132 = arith.constant 9.99999974E-6 : f32
    %400 = vector.broadcast %cst_132 : f32 to vector<16x1xf32>
    %401 = arith.addf %397, %400 : vector<16x1xf32>
    %402 = math.rsqrt %401 : vector<16x1xf32>
    %403 = vector.broadcast %402 : vector<16x1xf32> to vector<16x32xf32>
    %404 = arith.mulf %399, %403 : vector<16x32xf32>
    %405 = vector.broadcast %385 : vector<1x32xf32> to vector<16x32xf32>
    %406 = arith.mulf %404, %405 : vector<16x32xf32>
    %407 = vector.broadcast %386 : vector<1x32xf32> to vector<16x32xf32>
    %408 = arith.addf %406, %407 : vector<16x32xf32>
    %cst_133 = arith.constant dense<0.000000e+00> : vector<16x64xf32>
    %409 = tpu.matmul %408, %16, %cst_133 {dimension_numbers = #tpu.dot_dimension_numbers<[1], [0], [0], [1], [0, 0, 1, 1], [], []>} : vector<16x32xf32>, vector<32x64xf32>, vector<16x64xf32> -> vector<16x64xf32>
    %410 = vector.broadcast %22 : vector<1x64xf32> to vector<16x64xf32>
    %411 = arith.addf %409, %410 : vector<16x64xf32>
    %cst_134 = arith.constant 0.000000e+00 : f32
    %412 = vector.broadcast %cst_134 : f32 to vector<16x64xf32>
    %413 = arith.maximumf %411, %412 : vector<16x64xf32>
    %cst_135 = arith.constant dense<0.000000e+00> : vector<16x32xf32>
    %414 = tpu.matmul %413, %18, %cst_135 {dimension_numbers = #tpu.dot_dimension_numbers<[1], [0], [0], [1], [0, 0, 1, 1], [], []>} : vector<16x64xf32>, vector<64x32xf32>, vector<16x32xf32> -> vector<16x32xf32>
    %415 = vector.extract_strided_slice %20 {offsets = [8, 0], sizes = [1, 32], strides = [1, 1]} : vector<16x32xf32> to vector<1x32xf32>
    %416 = vector.broadcast %415 : vector<1x32xf32> to vector<16x32xf32>
    %417 = arith.addf %414, %416 : vector<16x32xf32>
    %418 = arith.addf %408, %417 : vector<16x32xf32>
    %419 = vector.extract_strided_slice %20 {offsets = [13, 0], sizes = [1, 32], strides = [1, 1]} : vector<16x32xf32> to vector<1x32xf32>
    %420 = vector.extract_strided_slice %20 {offsets = [14, 0], sizes = [1, 32], strides = [1, 1]} : vector<16x32xf32> to vector<1x32xf32>
    %cst_136 = arith.constant dense<0.000000e+00> : vector<16xf32>
    %421 = vector.multi_reduction <add>, %418, %cst_136 [1] : vector<16x32xf32> to vector<16xf32>
    %422 = vector.shape_cast %421 : vector<16xf32> to vector<16x1xf32>
    %cst_137 = arith.constant 3.200000e+01 : f32
    %423 = vector.broadcast %cst_137 : f32 to vector<16x1xf32>
    %424 = arith.divf %422, %423 : vector<16x1xf32>
    %425 = vector.broadcast %424 : vector<16x1xf32> to vector<16x32xf32>
    %426 = arith.subf %418, %425 : vector<16x32xf32>
    %427 = arith.mulf %426, %426 : vector<16x32xf32>
    %cst_138 = arith.constant dense<0.000000e+00> : vector<16xf32>
    %428 = vector.multi_reduction <add>, %427, %cst_138 [1] : vector<16x32xf32> to vector<16xf32>
    %429 = vector.shape_cast %428 : vector<16xf32> to vector<16x1xf32>
    %cst_139 = arith.constant 3.200000e+01 : f32
    %430 = vector.broadcast %cst_139 : f32 to vector<16x1xf32>
    %431 = arith.divf %429, %430 : vector<16x1xf32>
    %432 = vector.broadcast %424 : vector<16x1xf32> to vector<16x32xf32>
    %433 = arith.subf %418, %432 : vector<16x32xf32>
    %cst_140 = arith.constant 9.99999974E-6 : f32
    %434 = vector.broadcast %cst_140 : f32 to vector<16x1xf32>
    %435 = arith.addf %431, %434 : vector<16x1xf32>
    %436 = math.rsqrt %435 : vector<16x1xf32>
    %437 = vector.broadcast %436 : vector<16x1xf32> to vector<16x32xf32>
    %438 = arith.mulf %433, %437 : vector<16x32xf32>
    %439 = vector.broadcast %419 : vector<1x32xf32> to vector<16x32xf32>
    %440 = arith.mulf %438, %439 : vector<16x32xf32>
    %441 = vector.broadcast %420 : vector<1x32xf32> to vector<16x32xf32>
    %442 = arith.addf %440, %441 : vector<16x32xf32>
    %c0_141 = arith.constant 0 : index
    %c0_142 = arith.constant 0 : index
    %443 = vector.load %arg13[%c0_141, %c0_142] : memref<16x32xf32, #tpu.memory_space<vmem>>, vector<16x32xf32>
    tpu.vector_store %arg13[%c0_141, %c0_142], %442 {strides = array<i32>} : memref<16x32xf32, #tpu.memory_space<vmem>>, vector<16x32xf32>,
    %444 = vector.extract_strided_slice %23 {offsets = [0, 0], sizes = [1, 32], strides = [1, 1]} : vector<2x32xf32> to vector<1x32xf32>
    %445 = vector.extract_strided_slice %23 {offsets = [1, 0], sizes = [1, 32], strides = [1, 1]} : vector<2x32xf32> to vector<1x32xf32>
    %cst_143 = arith.constant dense<0.000000e+00> : vector<16xf32>
    %446 = vector.multi_reduction <add>, %442, %cst_143 [1] : vector<16x32xf32> to vector<16xf32>
    %447 = vector.shape_cast %446 : vector<16xf32> to vector<16x1xf32>
    %cst_144 = arith.constant 3.200000e+01 : f32
    %448 = vector.broadcast %cst_144 : f32 to vector<16x1xf32>
    %449 = arith.divf %447, %448 : vector<16x1xf32>
    %450 = vector.broadcast %449 : vector<16x1xf32> to vector<16x32xf32>
    %451 = arith.subf %442, %450 : vector<16x32xf32>
    %452 = arith.mulf %451, %451 : vector<16x32xf32>
    %cst_145 = arith.constant dense<0.000000e+00> : vector<16xf32>
    %453 = vector.multi_reduction <add>, %452, %cst_145 [1] : vector<16x32xf32> to vector<16xf32>
    %454 = vector.shape_cast %453 : vector<16xf32> to vector<16x1xf32>
    %cst_146 = arith.constant 3.200000e+01 : f32
    %455 = vector.broadcast %cst_146 : f32 to vector<16x1xf32>
    %456 = arith.divf %454, %455 : vector<16x1xf32>
    %457 = vector.broadcast %449 : vector<16x1xf32> to vector<16x32xf32>
    %458 = arith.subf %442, %457 : vector<16x32xf32>
    %cst_147 = arith.constant 9.99999974E-6 : f32
    %459 = vector.broadcast %cst_147 : f32 to vector<16x1xf32>
    %460 = arith.addf %456, %459 : vector<16x1xf32>
    %461 = math.rsqrt %460 : vector<16x1xf32>
    %462 = vector.broadcast %461 : vector<16x1xf32> to vector<16x32xf32>
    %463 = arith.mulf %458, %462 : vector<16x32xf32>
    %464 = vector.broadcast %444 : vector<1x32xf32> to vector<16x32xf32>
    %465 = arith.mulf %463, %464 : vector<16x32xf32>
    %466 = vector.broadcast %445 : vector<1x32xf32> to vector<16x32xf32>
    %467 = arith.addf %465, %466 : vector<16x32xf32>
    %c0_148 = arith.constant 0 : index
    %c0_149 = arith.constant 0 : index
    %c0_150 = arith.constant 0 : index
    %468 = vector.load %arg12[%c0_148, %c0_149, %c0_150] : memref<1x16x32xf32, #tpu.memory_space<vmem>>, vector<1x16x32xf32>
    %469 = vector.shape_cast %468 : vector<1x16x32xf32> to vector<16x32xf32>
    %470 = vector.shape_cast %467 : vector<16x32xf32> to vector<1x16x32xf32>
    tpu.vector_store %arg12[%c0_148, %c0_149, %c0_150], %470 {strides = array<i32>} : memref<1x16x32xf32, #tpu.memory_space<vmem>>, vector<1x16x32xf32>,
    return
  }
  func.func @transform_0(%arg0: i32) -> (i32, i32) {
    %c0_i32 = arith.constant 0 : i32
    %c0_i32_0 = arith.constant 0 : i32
    %c0_i32_1 = arith.constant 0 : i32
    return %c0_i32, %c0_i32_0 : i32, i32
  }
  func.func @transform_1(%arg0: i32) -> (i32, i32) {
    %c0_i32 = arith.constant 0 : i32
    %c0_i32_0 = arith.constant 0 : i32
    %c0_i32_1 = arith.constant 0 : i32
    return %c0_i32, %c0_i32_0 : i32, i32
  }
  func.func @transform_2(%arg0: i32) -> (i32, i32) {
    %c0_i32 = arith.constant 0 : i32
    %c0_i32_0 = arith.constant 0 : i32
    %c0_i32_1 = arith.constant 0 : i32
    return %c0_i32, %c0_i32_0 : i32, i32
  }
  func.func @transform_3(%arg0: i32) -> (i32, i32) {
    %c0_i32 = arith.constant 0 : i32
    %c0_i32_0 = arith.constant 0 : i32
    %c0_i32_1 = arith.constant 0 : i32
    return %c0_i32, %c0_i32_0 : i32, i32
  }
  func.func @transform_4(%arg0: i32) -> (i32, i32, i32, i32) {
    %c0_i32 = arith.constant 0 : i32
    %c0_i32_0 = arith.constant 0 : i32
    %c0_i32_1 = arith.constant 0 : i32
    %c0_i32_2 = arith.constant 0 : i32
    return %arg0, %c0_i32, %c0_i32_0, %c0_i32_1 : i32, i32, i32, i32
  }
  func.func @transform_5(%arg0: i32) -> (i32, i32, i32, i32) {
    %c0_i32 = arith.constant 0 : i32
    %c0_i32_0 = arith.constant 0 : i32
    %c0_i32_1 = arith.constant 0 : i32
    %c0_i32_2 = arith.constant 0 : i32
    return %arg0, %c0_i32, %c0_i32_0, %c0_i32_1 : i32, i32, i32, i32
  }
  func.func @transform_6(%arg0: i32) -> (i32, i32, i32) {
    %c0_i32 = arith.constant 0 : i32
    %c0_i32_0 = arith.constant 0 : i32
    %c0_i32_1 = arith.constant 0 : i32
    return %arg0, %c0_i32, %c0_i32_0 : i32, i32, i32
  }
  func.func @transform_7(%arg0: i32) -> (i32, i32, i32) {
    %c0_i32 = arith.constant 0 : i32
    %c0_i32_0 = arith.constant 0 : i32
    %c0_i32_1 = arith.constant 0 : i32
    return %arg0, %c0_i32, %c0_i32_0 : i32, i32, i32
  }
  func.func @transform_8(%arg0: i32) -> (i32, i32, i32) {
    %c0_i32 = arith.constant 0 : i32
    %c0_i32_0 = arith.constant 0 : i32
    %c0_i32_1 = arith.constant 0 : i32
    return %arg0, %c0_i32, %c0_i32_0 : i32, i32, i32
  }
  func.func @transform_9(%arg0: i32) -> (i32, i32, i32) {
    %c0_i32 = arith.constant 0 : i32
    %c0_i32_0 = arith.constant 0 : i32
    %c0_i32_1 = arith.constant 0 : i32
    return %arg0, %c0_i32, %c0_i32_0 : i32, i32, i32
  }
  func.func @transform_10(%arg0: i32) -> (i32, i32) {
    %c0_i32 = arith.constant 0 : i32
    %c0_i32_0 = arith.constant 0 : i32
    %c0_i32_1 = arith.constant 0 : i32
    return %c0_i32, %c0_i32_0 : i32, i32
  }
  func.func @transform_11(%arg0: i32) -> (i32, i32, i32) {
    %c0_i32 = arith.constant 0 : i32
    %c0_i32_0 = arith.constant 0 : i32
    %c0_i32_1 = arith.constant 0 : i32
    return %arg0, %c0_i32, %c0_i32_0 : i32, i32, i32
  }
}

</mosaic_0001>

<llo_original>
// kernel: query_transformer_decoder.1
$region0: #{query_transformer_decoder.1}
  #allocation0 [shape = 'u32[]', space=smem, size = 0x4, offset = 0x4, fixed_abs, tag = 'smem constant byte address 0x4 - core index']
  #allocation1 [shape = 'u32[144,128]{1,0:T(1,128)}', space=vmem, size = 0x12000, scoped, tag = 'internal scratch']
  #allocation2 [shape = 'f32[16,32]{1,0:T(8,128)}', space=vmem, size = 0x2000, scoped, tag = 'scratch operand']
  %s0 = inlined_call_operand.vmem [shape: f32[16,32], index: 0, kind: input, shape index: {}]
  %s1 = inlined_call_operand.hbm [shape: f32[32,32], index: 1, kind: input, shape index: {}]
  %s2 = inlined_call_operand.hbm [shape: f32[16,32], index: 2, kind: input, shape index: {}]
  %s3 = inlined_call_operand.hbm [shape: f32[32,32], index: 3, kind: input, shape index: {}]
  %s4 = inlined_call_operand.vmem [shape: f32[2,2,32,96], index: 4, kind: input, shape index: {}]
  %s5 = inlined_call_operand.hbm [shape: f32[2,2,32,32], index: 5, kind: input, shape index: {}]
  %s6 = inlined_call_operand.vmem [shape: f32[2,32,64], index: 6, kind: input, shape index: {}]
  %s7 = inlined_call_operand.vmem [shape: f32[2,64,32], index: 7, kind: input, shape index: {}]
  %s8 = inlined_call_operand.hbm [shape: f32[2,16,32], index: 8, kind: input, shape index: {}]
  %s9 = inlined_call_operand.vmem [shape: f32[2,1,64], index: 9, kind: input, shape index: {}]
  %s10 = inlined_call_operand.vmem [shape: f32[2,32], index: 10, kind: input, shape index: {}]
  %s11 = inlined_call_operand.hbm [shape: f32[2,16,32], index: 11, kind: output, shape index: {}]
  %s12 = sld [smem:[#allocation0]]
  $region101: #{query_transformer_decoder.1} parent=0
    _
  %s14 = ssub.s32 1, %s12
  %s15 = scalar_select 0, %s14, %s12
  $region1: #{query_transformer_decoder.1} parent=0
    #allocation3 [shape = 'u8[16384]{0}', space=vmem, size = 0x4000, scoped, tag = 'input window, operand 1, single buffered']
    #allocation4 [shape = 's32[2]{0}', space=sflag, size = 0x8, scoped, tag = 'scoped memory for query_transformer_decoder.1']
    #allocation5 [shape = 's32[2]{0}', space=sflag, size = 0x8, scoped, tag = 'scoped memory for query_transformer_decoder.1']
    #allocation6 [shape = 'u8[8192]{0}', space=vmem, size = 0x2000, scoped, tag = 'input window, operand 2, single buffered']
    #allocation7 [shape = 's32[1]{0}', space=sflag, size = 0x4, scoped, tag = 'scoped memory for query_transformer_decoder.1']
    #allocation8 [shape = 'u8[16384]{0}', space=vmem, size = 0x4000, scoped, tag = 'input window, operand 3, single buffered']
    #allocation9 [shape = 'u8[65536]{0}', space=vmem, size = 0x10000, scoped, tag = 'input window, operand 5']
    #allocation10 [shape = 's32[2]{0}', space=sflag, size = 0x8, scoped, tag = 'scoped memory for query_transformer_decoder.1']
    #allocation11 [shape = 'u8[16384]{0}', space=vmem, size = 0x4000, scoped, tag = 'input window, operand 8']
    #allocation12 [shape = 'u8[16384]{0}', space=vmem, size = 0x4000, scoped, tag = 'output window, operand 0']
    %16 = vsyncpa [#allocation4], 0
    %17 = vsyncpa [#allocation7], 0
    %18 = vsyncpa [#allocation10], 0
    %s19 = scalar_lea.sflag [#allocation10], 1
    %20 = vsyncpa %s19, 0
    %21 = vsyncpa [#allocation5], 0
    %s22 = scalar_lea.sflag [#allocation5], 1
    %23 = vsyncpa %s22, 0
    loop: start=0, step=1, limit=4
    $region2: #{query_transformer_decoder.1} parent=1 // loop_pre_header
      _
    $region3: #{query_transformer_decoder.1} parent=1 // loop_header
      %s25 = sphi 0, %s29
      %p26 = scmp.ge.s32.totalorder %s25, 4
      %s33 = sphi 0, %s33
      %s35 = sphi 0, %s33
      %s36 = sphi 0, %s35
      %s50 = sphi 0, %s36
      %s54 = sphi 0, %s54
      %s56 = sphi 0, %s54
      %s57 = sphi 0, %s56
      %s71 = sphi 0, %s57
      %s75 = sphi 0, %s75
      %s77 = sphi 0, %s75
      %s78 = sphi 0, %s77
      %s92 = sphi 0, %s78
      %s96 = sphi 0, %s96
      %s98 = sphi 0, %s96
      %s99 = sphi 0, %s98
      %s113 = sphi 0, %s99
      %s119 = sphi 0, %s121
      %s122 = sphi 0, %s119
      %s123 = sphi 0, %s122
      %s139 = sphi 0, %s123
      %s145 = sphi 0, %s147
      %s148 = sphi 0, %s145
      %s149 = sphi 0, %s148
      %s165 = sphi 0, %s149
      %s171 = sphi 0, %s173
      %s174 = sphi 0, %s171
      %s175 = sphi 0, %s174
      %s191 = sphi 0, %s175
      %s197 = sphi 0, %s199
      %s200 = sphi 0, %s197
      %s201 = sphi 0, %s200
      %s217 = sphi 0, %s201
      %s223 = sphi 0, %s225
      %s226 = sphi 0, %s223
      %s227 = sphi 0, %s226
      %s243 = sphi 0, %s227
      %s249 = sphi 0, %s251
      %s252 = sphi 0, %s249
      %s253 = sphi 0, %s252
      %s269 = sphi 0, %s253
      %s273 = sphi 0, %s273
      %s275 = sphi 0, %s273
      %s276 = sphi 0, %s275
      %s290 = sphi 0, %s276
      %s296 = sphi 0, %s298
      %s299 = sphi 0, %s296
      %s300 = sphi 0, %s299
      %s316 = sphi 0, %s300
    $region4: #{query_transformer_decoder.1} parent=1 // loop_header_branch
      %28 = sbr.rel (%p26) target = $region8
    $region5: #{query_transformer_decoder.1} parent=1 // loop_body
      %s30 = ssub.s32 %s25, 1
      %s31 = ssub.s32 %s25, 2
      %s32 = sadd.s32 %s25, 1
      %s34 = sadd.s32 %s33, 1
      %p37 = scmp.eq.s32.totalorder %s25, 1
      %p38 = scmp.ne.s32.totalorder %s33, %s35
      %p39 = scmp.eq.s32.totalorder %s25, 0
      %p40 = por %p38, %p39
      %p41 = scmp.ne.s32.totalorder %s33, %s35
      %p42 = scmp.eq.s32.totalorder %s30, 1
      %p43 = por %p41, %p42
      %p44 = scmp.ne.s32.totalorder %s35, %s36
      %p45 = scmp.eq.s32.totalorder %s30, 0
      %p46 = por %p44, %p45
      %p47 = scmp.ne.s32.totalorder %s35, %s36
      %p48 = scmp.eq.s32.totalorder %s31, 1
      %p49 = por %p47, %p48
      %p51 = scmp.ne.s32.totalorder %s36, %s50
      %p52 = scmp.eq.s32.totalorder %s31, 0
      %p53 = por %p51, %p52
      %s55 = sadd.s32 %s54, 1
      %p58 = scmp.eq.s32.totalorder %s25, 1
      %p59 = scmp.ne.s32.totalorder %s54, %s56
      %p60 = scmp.eq.s32.totalorder %s25, 0
      %p61 = por %p59, %p60
      %p62 = scmp.ne.s32.totalorder %s54, %s56
      %p63 = scmp.eq.s32.totalorder %s30, 1
      %p64 = por %p62, %p63
      %p65 = scmp.ne.s32.totalorder %s56, %s57
      %p66 = scmp.eq.s32.totalorder %s30, 0
      %p67 = por %p65, %p66
      %p68 = scmp.ne.s32.totalorder %s56, %s57
      %p69 = scmp.eq.s32.totalorder %s31, 1
      %p70 = por %p68, %p69
      %p72 = scmp.ne.s32.totalorder %s57, %s71
      %p73 = scmp.eq.s32.totalorder %s31, 0
      %p74 = por %p72, %p73
      %s76 = sadd.s32 %s75, 1
      %p79 = scmp.eq.s32.totalorder %s25, 1
      %p80 = scmp.ne.s32.totalorder %s75, %s77
      %p81 = scmp.eq.s32.totalorder %s25, 0
      %p82 = por %p80, %p81
      %p83 = scmp.ne.s32.totalorder %s75, %s77
      %p84 = scmp.eq.s32.totalorder %s30, 1
      %p85 = por %p83, %p84
      %p86 = scmp.ne.s32.totalorder %s77, %s78
      %p87 = scmp.eq.s32.totalorder %s30, 0
      %p88 = por %p86, %p87
      %p89 = scmp.ne.s32.totalorder %s77, %s78
      %p90 = scmp.eq.s32.totalorder %s31, 1
      %p91 = por %p89, %p90
      %p93 = scmp.ne.s32.totalorder %s78, %s92
      %p94 = scmp.eq.s32.totalorder %s31, 0
      %p95 = por %p93, %p94
      %s97 = sadd.s32 %s96, 1
      %p100 = scmp.eq.s32.totalorder %s25, 1
      %p101 = scmp.ne.s32.totalorder %s96, %s98
      %p102 = scmp.eq.s32.totalorder %s25, 0
      %p103 = por %p101, %p102
      %p104 = scmp.ne.s32.totalorder %s96, %s98
      %p105 = scmp.eq.s32.totalorder %s30, 1
      %p106 = por %p104, %p105
      %p107 = scmp.ne.s32.totalorder %s98, %s99
      %p108 = scmp.eq.s32.totalorder %s30, 0
      %p109 = por %p107, %p108
      %p110 = scmp.ne.s32.totalorder %s98, %s99
      %p111 = scmp.eq.s32.totalorder %s31, 1
      %p112 = por %p110, %p111
      %p114 = scmp.ne.s32.totalorder %s99, %s113
      %p115 = scmp.eq.s32.totalorder %s31, 0
      %p116 = por %p114, %p115
      %s117 = ssub.s32 %s25, %s32
      %p118 = scmp.eq.s32.totalorder %s117, 0
      %s120 = sadd.s32 %s119, 1
      %s121 = scalar_select %p118, %s119, %s120
      %p124 = pneg %p118
      %p125 = scmp.eq.s32.totalorder %s25, 1
      %p126 = por %p124, %p125
      %p127 = scmp.ne.s32.totalorder %s119, %s122
      %p128 = scmp.eq.s32.totalorder %s25, 0
      %p129 = por %p127, %p128
      %p130 = scmp.ne.s32.totalorder %s119, %s122
      %p131 = scmp.eq.s32.totalorder %s30, 1
      %p132 = por %p130, %p131
      %p133 = scmp.ne.s32.totalorder %s122, %s123
      %p134 = scmp.eq.s32.totalorder %s30, 0
      %p135 = por %p133, %p134
      %p136 = scmp.ne.s32.totalorder %s122, %s123
      %p137 = scmp.eq.s32.totalorder %s31, 1
      %p138 = por %p136, %p137
      %p140 = scmp.ne.s32.totalorder %s123, %s139
      %p141 = scmp.eq.s32.totalorder %s31, 0
      %p142 = por %p140, %p141
      %s143 = ssub.s32 %s25, %s32
      %p144 = scmp.eq.s32.totalorder %s143, 0
      %s146 = sadd.s32 %s145, 1
      %s147 = scalar_select %p144, %s145, %s146
      %p150 = pneg %p144
      %p151 = scmp.eq.s32.totalorder %s25, 1
      %p152 = por %p150, %p151
      %p153 = scmp.ne.s32.totalorder %s145, %s148
      %p154 = scmp.eq.s32.totalorder %s25, 0
      %p155 = por %p153, %p154
      %p156 = scmp.ne.s32.totalorder %s145, %s148
      %p157 = scmp.eq.s32.totalorder %s30, 1
      %p158 = por %p156, %p157
      %p159 = scmp.ne.s32.totalorder %s148, %s149
      %p160 = scmp.eq.s32.totalorder %s30, 0
      %p161 = por %p159, %p160
      %p162 = scmp.ne.s32.totalorder %s148, %s149
      %p163 = scmp.eq.s32.totalorder %s31, 1
      %p164 = por %p162, %p163
      %p166 = scmp.ne.s32.totalorder %s149, %s165
      %p167 = scmp.eq.s32.totalorder %s31, 0
      %p168 = por %p166, %p167
      %s169 = ssub.s32 %s25, %s32
      %p170 = scmp.eq.s32.totalorder %s169, 0
      %s172 = sadd.s32 %s171, 1
      %s173 = scalar_select %p170, %s171, %s172
      %p176 = pneg %p170
      %p177 = scmp.eq.s32.totalorder %s25, 1
      %p178 = por %p176, %p177
      %p179 = scmp.ne.s32.totalorder %s171, %s174
      %p180 = scmp.eq.s32.totalorder %s25, 0
      %p181 = por %p179, %p180
      %p182 = scmp.ne.s32.totalorder %s171, %s174
      %p183 = scmp.eq.s32.totalorder %s30, 1
      %p184 = por %p182, %p183
      %p185 = scmp.ne.s32.totalorder %s174, %s175
      %p186 = scmp.eq.s32.totalorder %s30, 0
      %p187 = por %p185, %p186
      %p188 = scmp.ne.s32.totalorder %s174, %s175
      %p189 = scmp.eq.s32.totalorder %s31, 1
      %p190 = por %p188, %p189
      %p192 = scmp.ne.s32.totalorder %s175, %s191
      %p193 = scmp.eq.s32.totalorder %s31, 0
      %p194 = por %p192, %p193
      %s195 = ssub.s32 %s25, %s32
      %p196 = scmp.eq.s32.totalorder %s195, 0
      %s198 = sadd.s32 %s197, 1
      %s199 = scalar_select %p196, %s197, %s198
      %p202 = pneg %p196
      %p203 = scmp.eq.s32.totalorder %s25, 1
      %p204 = por %p202, %p203
      %p205 = scmp.ne.s32.totalorder %s197, %s200
      %p206 = scmp.eq.s32.totalorder %s25, 0
      %p207 = por %p205, %p206
      %p208 = scmp.ne.s32.totalorder %s197, %s200
      %p209 = scmp.eq.s32.totalorder %s30, 1
      %p210 = por %p208, %p209
      %p211 = scmp.ne.s32.totalorder %s200, %s201
      %p212 = scmp.eq.s32.totalorder %s30, 0
      %p213 = por %p211, %p212
      %p214 = scmp.ne.s32.totalorder %s200, %s201
      %p215 = scmp.eq.s32.totalorder %s31, 1
      %p216 = por %p214, %p215
      %p218 = scmp.ne.s32.totalorder %s201, %s217
      %p219 = scmp.eq.s32.totalorder %s31, 0
      %p220 = por %p218, %p219
      %s221 = ssub.s32 %s25, %s32
      %p222 = scmp.eq.s32.totalorder %s221, 0
      %s224 = sadd.s32 %s223, 1
      %s225 = scalar_select %p222, %s223, %s224
      %p228 = pneg %p222
      %p229 = scmp.eq.s32.totalorder %s25, 1
      %p230 = por %p228, %p229
      %p231 = scmp.ne.s32.totalorder %s223, %s226
      %p232 = scmp.eq.s32.totalorder %s25, 0
      %p233 = por %p231, %p232
      %p234 = scmp.ne.s32.totalorder %s223, %s226
      %p235 = scmp.eq.s32.totalorder %s30, 1
      %p236 = por %p234, %p235
      %p237 = scmp.ne.s32.totalorder %s226, %s227
      %p238 = scmp.eq.s32.totalorder %s30, 0
      %p239 = por %p237, %p238
      %p240 = scmp.ne.s32.totalorder %s226, %s227
      %p241 = scmp.eq.s32.totalorder %s31, 1
      %p242 = por %p240, %p241
      %p244 = scmp.ne.s32.totalorder %s227, %s243
      %p245 = scmp.eq.s32.totalorder %s31, 0
      %p246 = por %p244, %p245
      %s247 = ssub.s32 %s25, %s32
      %p248 = scmp.eq.s32.totalorder %s247, 0
      %s250 = sadd.s32 %s249, 1
      %s251 = scalar_select %p248, %s249, %s250
      %p254 = pneg %p248
      %p255 = scmp.eq.s32.totalorder %s25, 1
      %p256 = por %p254, %p255
      %p257 = scmp.ne.s32.totalorder %s249, %s252
      %p258 = scmp.eq.s32.totalorder %s25, 0
      %p259 = por %p257, %p258
      %p260 = scmp.ne.s32.totalorder %s249, %s252
      %p261 = scmp.eq.s32.totalorder %s30, 1
      %p262 = por %p260, %p261
      %p263 = scmp.ne.s32.totalorder %s252, %s253
      %p264 = scmp.eq.s32.totalorder %s30, 0
      %p265 = por %p263, %p264
      %p266 = scmp.ne.s32.totalorder %s252, %s253
      %p267 = scmp.eq.s32.totalorder %s31, 1
      %p268 = por %p266, %p267
      %p270 = scmp.ne.s32.totalorder %s253, %s269
      %p271 = scmp.eq.s32.totalorder %s31, 0
      %p272 = por %p270, %p271
      %s274 = sadd.s32 %s273, 1
      %p277 = scmp.eq.s32.totalorder %s25, 1
      %p278 = scmp.ne.s32.totalorder %s273, %s275
      %p279 = scmp.eq.s32.totalorder %s25, 0
      %p280 = por %p278, %p279
      %p281 = scmp.ne.s32.totalorder %s273, %s275
      %p282 = scmp.eq.s32.totalorder %s30, 1
      %p283 = por %p281, %p282
      %p284 = scmp.ne.s32.totalorder %s275, %s276
      %p285 = scmp.eq.s32.totalorder %s30, 0
      %p286 = por %p284, %p285
      %p287 = scmp.ne.s32.totalorder %s275, %s276
      %p288 = scmp.eq.s32.totalorder %s31, 1
      %p289 = por %p287, %p288
      %p291 = scmp.ne.s32.totalorder %s276, %s290
      %p292 = scmp.eq.s32.totalorder %s31, 0
      %p293 = por %p291, %p292
      %s294 = ssub.s32 %s25, %s32
      %p295 = scmp.eq.s32.totalorder %s294, 0
      %s297 = sadd.s32 %s296, 1
      %s298 = scalar_select %p295, %s296, %s297
      %p301 = pneg %p295
      %p302 = scmp.eq.s32.totalorder %s25, 1
      %p303 = por %p301, %p302
      %p304 = scmp.ne.s32.totalorder %s296, %s299
      %p305 = scmp.eq.s32.totalorder %s25, 0
      %p306 = por %p304, %p305
      %p307 = scmp.ne.s32.totalorder %s296, %s299
      %p308 = scmp.eq.s32.totalorder %s30, 1
      %p309 = por %p307, %p308
      %p310 = scmp.ne.s32.totalorder %s299, %s300
      %p311 = scmp.eq.s32.totalorder %s30, 0
      %p312 = por %p310, %p311
      %p313 = scmp.ne.s32.totalorder %s299, %s300
      %p314 = scmp.eq.s32.totalorder %s31, 1
      %p315 = por %p313, %p314
      %p317 = scmp.ne.s32.totalorder %s300, %s316
      %p318 = scmp.eq.s32.totalorder %s31, 0
      %p319 = por %p317, %p318
      %p320 = scmp.le.s32.totalorder 1, %s25
      %p321 = scmp.lt.s32.totalorder %s25, 3
      %p322 = pnand %p320, %p321
      %p323 = pneg %p322
      // Predicated region
      $region9: #{query_transformer_decoder.1} parent=5 // pred_check
        _
      $region10: #{query_transformer_decoder.1} parent=5 // pred_check_branch
        %325 = sbr.rel (%p322) target = $region12
      $region11: #{query_transformer_decoder.1} parent=5 // pred_region
        %s326 = ssub.s32 %s25, 1
        // Predicated region
        $region13: #{query_transformer_decoder.1} parent=11 // pred_check
          %p327 = pneg %p46
        $region14: #{query_transformer_decoder.1} parent=11 // pred_check_branch
          %329 = sbr.rel (%p327) target = $region16
        $region15: #{query_transformer_decoder.1} parent=11 // pred_region
          _
        $region16: #{query_transformer_decoder.1} parent=11 // pred_fallthru
          _
        // Predicated region
        $region17: #{query_transformer_decoder.1} parent=11 // pred_check
          %p330 = pneg %p67
        $region18: #{query_transformer_decoder.1} parent=11 // pred_check_branch
          %332 = sbr.rel (%p330) target = $region20
        $region19: #{query_transformer_decoder.1} parent=11 // pred_region
          %s334 = ssub.s32 512, 512
          %335 = vsyncadd [#allocation4], %s334
          %s336 = sshll.u32 [#allocation3], 4
          %s337 = int_to_ptr.vmem [resolvable:$true] %s336
          %342 = dma.hbm_to_vmem [thread:$0]  %s1, 512, %s337, [#allocation4], 128, 128, 8
        $region20: #{query_transformer_decoder.1} parent=11 // pred_fallthru
          _
        // Predicated region
        $region21: #{query_transformer_decoder.1} parent=11 // pred_check
          %p343 = pneg %p88
        $region22: #{query_transformer_decoder.1} parent=11 // pred_check_branch
          %345 = sbr.rel (%p343) target = $region24
        $region23: #{query_transformer_decoder.1} parent=11 // pred_region
          %s347 = ssub.s32 256, 256
          %348 = vsyncadd [#allocation7], %s347
          %s349 = sshll.u32 [#allocation6], 4
          %s350 = int_to_ptr.vmem [resolvable:$true] %s349
          %355 = dma.hbm_to_vmem [thread:$0]  %s2, 256, %s350, [#allocation7], 128, 128, 8
        $region24: #{query_transformer_decoder.1} parent=11 // pred_fallthru
          _
        // Predicated region
        $region25: #{query_transformer_decoder.1} parent=11 // pred_check
          %p356 = pneg %p109
        $region26: #{query_transformer_decoder.1} parent=11 // pred_check_branch
          %358 = sbr.rel (%p356) target = $region28
        $region27: #{query_transformer_decoder.1} parent=11 // pred_region
          %s360 = ssub.s32 512, 512
          %361 = vsyncadd [#allocation7], %s360
          %s362 = sshll.u32 [#allocation8], 4
          %s363 = int_to_ptr.vmem [resolvable:$true] %s362
          %368 = dma.hbm_to_vmem [thread:$0]  %s3, 512, %s363, [#allocation7], 128, 128, 8
        $region28: #{query_transformer_decoder.1} parent=11 // pred_fallthru
          _
        // Predicated region
        $region29: #{query_transformer_decoder.1} parent=11 // pred_check
          %p369 = pneg %p286
        $region30: #{query_transformer_decoder.1} parent=11 // pred_check_branch
          %371 = sbr.rel (%p369) target = $region32
        $region31: #{query_transformer_decoder.1} parent=11 // pred_region
          _
        $region32: #{query_transformer_decoder.1} parent=11 // pred_fallthru
          _
      $region12: #{query_transformer_decoder.1} parent=5 // pred_fallthru
        _
      %p372 = scmp.lt.s32.totalorder %s25, 2
      // Predicated region
      $region33: #{query_transformer_decoder.1} parent=5 // pred_check
        %p373 = pneg %p372
      $region34: #{query_transformer_decoder.1} parent=5 // pred_check_branch
        %375 = sbr.rel (%p373) target = $region36
      $region35: #{query_transformer_decoder.1} parent=5 // pred_region
        // Predicated region
        $region37: #{query_transformer_decoder.1} parent=35 // pred_check
          %p376 = pneg %p129
        $region38: #{query_transformer_decoder.1} parent=35 // pred_check_branch
          %378 = sbr.rel (%p376) target = $region40
        $region39: #{query_transformer_decoder.1} parent=35 // pred_region
          %p379 = scmp.lt.s32.totalorder %s25, 1
          %s380 = scalar_select %p379, %s25, 1
          %s381 = smul.addr %s380, 8
          %s382 = smul.addr %s381, 8
          %s383 = scalar_lea.vmem %s4, %s382
        $region40: #{query_transformer_decoder.1} parent=35 // pred_fallthru
          _
        // Predicated region
        $region41: #{query_transformer_decoder.1} parent=35 // pred_check
          %p384 = pneg %p155
        $region42: #{query_transformer_decoder.1} parent=35 // pred_check_branch
          %386 = sbr.rel (%p384) target = $region44
        $region43: #{query_transformer_decoder.1} parent=35 // pred_region
          %s387 = sand.u32 %s25, 1
          %s388 = scalar_lea.sflag [#allocation10], %s387
          %s389 = sand.u32 %s145, 1
          %s390 = smul.addr %s389, 64
          %s391 = scalar_lea.vmem [#allocation9], %s390
          %s393 = ssub.s32 1024, 1024
          %394 = vsyncadd %s388, %s393
          %s395 = smul.addr %s25, 8
          %s396 = smul.addr %s395, 128
          %s397 = scalar_lea.hbm %s5, %s396
          %s398 = sshll.u32 %s391, 4
          %s399 = int_to_ptr.vmem [resolvable:$true] %s398
          %404 = dma.hbm_to_vmem [thread:$0]  %s397, 1024, %s399, %s388, 128, 128, 8
        $region44: #{query_transformer_decoder.1} parent=35 // pred_fallthru
          _
        // Predicated region
        $region45: #{query_transformer_decoder.1} parent=35 // pred_check
          %p405 = pneg %p181
        $region46: #{query_transformer_decoder.1} parent=35 // pred_check_branch
          %407 = sbr.rel (%p405) target = $region48
        $region47: #{query_transformer_decoder.1} parent=35 // pred_region
          %p408 = scmp.lt.s32.totalorder %s25, 1
          %s409 = scalar_select %p408, %s25, 1
          %s410 = smul.addr %s409, 4
          %s411 = smul.addr %s410, 8
          %s412 = scalar_lea.vmem %s6, %s411
        $region48: #{query_transformer_decoder.1} parent=35 // pred_fallthru
          _
        // Predicated region
        $region49: #{query_transformer_decoder.1} parent=35 // pred_check
          %p413 = pneg %p207
        $region50: #{query_transformer_decoder.1} parent=35 // pred_check_branch
          %415 = sbr.rel (%p413) target = $region52
        $region51: #{query_transformer_decoder.1} parent=35 // pred_region
          %p416 = scmp.lt.s32.totalorder %s25, 1
          %s417 = scalar_select %p416, %s25, 1
          %s418 = smul.addr %s417, 8
          %s419 = smul.addr %s418, 8
          %s420 = scalar_lea.vmem %s7, %s419
        $region52: #{query_transformer_decoder.1} parent=35 // pred_fallthru
          _
        // Predicated region
        $region53: #{query_transformer_decoder.1} parent=35 // pred_check
          %p421 = pneg %p233
        $region54: #{query_transformer_decoder.1} parent=35 // pred_check_branch
          %423 = sbr.rel (%p421) target = $region56
        $region55: #{query_transformer_decoder.1} parent=35 // pred_region
          %s424 = sand.u32 %s25, 1
          %s425 = scalar_lea.sflag [#allocation10], %s424
          %s426 = sand.u32 %s223, 1
          %s427 = smul.addr %s426, 16
          %s428 = scalar_lea.vmem [#allocation11], %s427
          %s430 = ssub.s32 256, 256
          %431 = vsyncadd %s425, %s430
          %s432 = smul.addr %s25, 2
          %s433 = smul.addr %s432, 128
          %s434 = scalar_lea.hbm %s8, %s433
          %s435 = sshll.u32 %s428, 4
          %s436 = int_to_ptr.vmem [resolvable:$true] %s435
          %441 = dma.hbm_to_vmem [thread:$0]  %s434, 256, %s436, %s425, 128, 128, 8
        $region56: #{query_transformer_decoder.1} parent=35 // pred_fallthru
          _
        // Predicated region
        $region57: #{query_transformer_decoder.1} parent=35 // pred_check
          %p442 = pneg %p259
        $region58: #{query_transformer_decoder.1} parent=35 // pred_check_branch
          %444 = sbr.rel (%p442) target = $region60
        $region59: #{query_transformer_decoder.1} parent=35 // pred_region
          %p445 = scmp.lt.s32.totalorder %s25, 1
          %s446 = scalar_select %p445, %s25, 1
          %s447 = scalar_lea.vmem %s9, %s446
        $region60: #{query_transformer_decoder.1} parent=35 // pred_fallthru
          _
      $region36: #{query_transformer_decoder.1} parent=5 // pred_fallthru
        _
      %p448 = scmp.le.s32.totalorder 1, %s25
      %p449 = scmp.lt.s32.totalorder %s25, 3
      %p450 = pnand %p448, %p449
      %p451 = pneg %p450
      // Predicated region
      $region61: #{query_transformer_decoder.1} parent=5 // pred_check
        _
      $region62: #{query_transformer_decoder.1} parent=5 // pred_check_branch
        %453 = sbr.rel (%p450) target = $region64
      $region63: #{query_transformer_decoder.1} parent=5 // pred_region
        %s454 = ssub.s32 %s25, 1
        // Predicated region
        $region65: #{query_transformer_decoder.1} parent=63 // pred_check
          %p455 = pneg %p67
        $region66: #{query_transformer_decoder.1} parent=63 // pred_check_branch
          %457 = sbr.rel (%p455) target = $region68
        $region67: #{query_transformer_decoder.1} parent=63 // pred_region
          %458 = dma.done [#allocation4], 512
        $region68: #{query_transformer_decoder.1} parent=63 // pred_fallthru
          _
        // Predicated region
        $region69: #{query_transformer_decoder.1} parent=63 // pred_check
          %p459 = pneg %p88
        $region70: #{query_transformer_decoder.1} parent=63 // pred_check_branch
          %461 = sbr.rel (%p459) target = $region72
        $region71: #{query_transformer_decoder.1} parent=63 // pred_region
          %462 = dma.done [#allocation7], 256
        $region72: #{query_transformer_decoder.1} parent=63 // pred_fallthru
          _
        // Predicated region
        $region73: #{query_transformer_decoder.1} parent=63 // pred_check
          %p463 = pneg %p109
        $region74: #{query_transformer_decoder.1} parent=63 // pred_check_branch
          %465 = sbr.rel (%p463) target = $region76
        $region75: #{query_transformer_decoder.1} parent=63 // pred_region
          %466 = dma.done [#allocation7], 512
        $region76: #{query_transformer_decoder.1} parent=63 // pred_fallthru
          _
        %s467 = sand.u32 %s30, 1
        %s468 = scalar_lea.sflag [#allocation10], %s467
        %s469 = sand.u32 %s148, 1
        %s470 = smul.addr %s469, 64
        %s471 = scalar_lea.vmem [#allocation9], %s470
        // Predicated region
        $region77: #{query_transformer_decoder.1} parent=63 // pred_check
          %p472 = pneg %p161
        $region78: #{query_transformer_decoder.1} parent=63 // pred_check_branch
          %474 = sbr.rel (%p472) target = $region80
        $region79: #{query_transformer_decoder.1} parent=63 // pred_region
          %475 = dma.done %s468, 1024
        $region80: #{query_transformer_decoder.1} parent=63 // pred_fallthru
          _
        %s476 = sand.u32 %s30, 1
        %s477 = scalar_lea.sflag [#allocation10], %s476
        %s478 = sand.u32 %s226, 1
        %s479 = smul.addr %s478, 16
        %s480 = scalar_lea.vmem [#allocation11], %s479
        // Predicated region
        $region81: #{query_transformer_decoder.1} parent=63 // pred_check
          %p481 = pneg %p239
        $region82: #{query_transformer_decoder.1} parent=63 // pred_check_branch
          %483 = sbr.rel (%p481) target = $region84
        $region83: #{query_transformer_decoder.1} parent=63 // pred_region
          %484 = dma.done %s477, 256
        $region84: #{query_transformer_decoder.1} parent=63 // pred_fallthru
          _
        %p485 = pneg %p46
        %p486 = pneg %p43
        %p487 = pneg %p67
        %p488 = pneg %p64
        %p489 = pneg %p88
        %p490 = pneg %p85
        %p491 = pneg %p109
        %p492 = pneg %p106
        %p493 = scmp.lt.s32.totalorder %s30, 1
        %s494 = scalar_select %p493, %s30, 1
        %s495 = smul.addr %s494, 8
        %s496 = smul.addr %s495, 8
        %s497 = scalar_lea.vmem %s4, %s496
        %p498 = pneg %p135
        %p499 = pneg %p132
        %s500 = sand.u32 %s30, 1
        %s501 = scalar_lea.sflag [#allocation10], %s500
        %s502 = sand.u32 %s148, 1
        %s503 = smul.addr %s502, 64
        %s504 = scalar_lea.vmem [#allocation9], %s503
        %p505 = pneg %p161
        %p506 = pneg %p158
        %p507 = scmp.lt.s32.totalorder %s30, 1
        %s508 = scalar_select %p507, %s30, 1
        %s509 = smul.addr %s508, 4
        %s510 = smul.addr %s509, 8
        %s511 = scalar_lea.vmem %s6, %s510
        %p512 = pneg %p187
        %p513 = pneg %p184
        %p514 = scmp.lt.s32.totalorder %s30, 1
        %s515 = scalar_select %p514, %s30, 1
        %s516 = smul.addr %s515, 8
        %s517 = smul.addr %s516, 8
        %s518 = scalar_lea.vmem %s7, %s517
        %p519 = pneg %p213
        %p520 = pneg %p210
        %s521 = sand.u32 %s30, 1
        %s522 = scalar_lea.sflag [#allocation10], %s521
        %s523 = sand.u32 %s226, 1
        %s524 = smul.addr %s523, 16
        %s525 = scalar_lea.vmem [#allocation11], %s524
        %p526 = pneg %p239
        %p527 = pneg %p236
        %p528 = scmp.lt.s32.totalorder %s30, 1
        %s529 = scalar_select %p528, %s30, 1
        %s530 = scalar_lea.vmem %s9, %s529
        %p531 = pneg %p265
        %p532 = pneg %p262
        %p533 = pneg %p286
        %p534 = pneg %p283
        %p535 = pneg %p312
        %p536 = pneg %p309
        %s537 = sand.u32 %s299, 1
        %s538 = scalar_lea.sflag [#allocation5], %s537
        %s539 = sand.u32 %s299, 1
        %s540 = smul.addr %s539, 16
        %s541 = scalar_lea.vmem [#allocation12], %s540
        %p542 = scmp.lt.s32.totalorder %s30, 1
        %s543 = scalar_select %p542, %s30, 1
        %s544 = smul.addr %s543, 8
        %s545 = smul.addr %s544, 8
        %s546 = scalar_lea.vmem %s4, %s545
        %p547 = scmp.lt.s32.totalorder %s30, 1
        %s548 = scalar_select %p547, %s30, 1
        %s549 = smul.addr %s548, 4
        %s550 = smul.addr %s549, 8
        %s551 = scalar_lea.vmem %s6, %s550
        %p552 = scmp.lt.s32.totalorder %s30, 1
        %s553 = scalar_select %p552, %s30, 1
        %s554 = smul.addr %s553, 8
        %s555 = smul.addr %s554, 8
        %s556 = scalar_lea.vmem %s7, %s555
        %p557 = scmp.lt.s32.totalorder %s30, 1
        %s558 = scalar_select %p557, %s30, 1
        %s559 = scalar_lea.vmem %s9, %s558
        %p560 = scmp.eq.s32.totalorder %s30, 0
        // Predicated region
        $region85: #{query_transformer_decoder.1} parent=63 // pred_check
          %p561 = pneg %p560
        $region86: #{query_transformer_decoder.1} parent=63 // pred_check_branch
          %563 = sbr.rel (%p561) target = $region88
        $region87: #{query_transformer_decoder.1} parent=63 // pred_region
          %v564 = vld [vmem:[%s0] sm:$0xff]
          %v565 = vld [vmem:[%s0 + $0x8] sm:$0xff]
          %vm566 = vcmask 261120
          %567 = vst.msk [vmem:[#allocation2] sm:$0xff] %vm566, %v564
          %568 = vst.msk [vmem:[#allocation2 + $0x8] sm:$0xff] %vm566, %v565
        $region88: #{query_transformer_decoder.1} parent=63 // pred_fallthru
          _
        %v569 = vld [vmem:[#allocation2] sm:$0xff]
        %v570 = vld [vmem:[#allocation2 + $0x8] sm:$0xff]
        %v571 = vld [vmem:[#allocation3] sm:$0xff]
        %v572 = vld [vmem:[#allocation3 + $0x8] sm:$0xff]
        %v573 = vld [vmem:[#allocation3 + $0x10] sm:$0xff]
        %v574 = vld [vmem:[#allocation3 + $0x18] sm:$0xff]
        %v575 = vld [vmem:[#allocation6] sm:$0xff]
        %v576 = vld [vmem:[#allocation6 + $0x8] sm:$0xff]
        %v577 = vld [vmem:[#allocation8] sm:$0xff]
        %v578 = vld [vmem:[#allocation8 + $0x8] sm:$0xff]
        %v579 = vld [vmem:[#allocation8 + $0x10] sm:$0xff]
        %v580 = vld [vmem:[#allocation8 + $0x18] sm:$0xff]
        %v581 = vld [vmem:[%s546] sm:$0xff]
        %v582 = vld [vmem:[%s546 + $0x8] sm:$0xff]
        %v583 = vld [vmem:[%s546 + $0x10] sm:$0xff]
        %v584 = vld [vmem:[%s546 + $0x18] sm:$0xff]
        %s585 = scalar_lea.vmem %s546, 32
        %v586 = vld [vmem:[%s585] sm:$0xff]
        %v587 = vld [vmem:[%s585 + $0x8] sm:$0xff]
        %v588 = vld [vmem:[%s585 + $0x10] sm:$0xff]
        %v589 = vld [vmem:[%s585 + $0x18] sm:$0xff]
        %v590 = vld [vmem:[%s471] sm:$0xff]
        %v591 = vld [vmem:[%s471 + $0x8] sm:$0xff]
        %v592 = vld [vmem:[%s471 + $0x10] sm:$0xff]
        %v593 = vld [vmem:[%s471 + $0x18] sm:$0xff]
        %s594 = scalar_lea.vmem %s471, 32 [#allocation9]
        %v595 = vld [vmem:[%s594] sm:$0xff]
        %v596 = vld [vmem:[%s594 + $0x8] sm:$0xff]
        %v597 = vld [vmem:[%s594 + $0x10] sm:$0xff]
        %v598 = vld [vmem:[%s594 + $0x18] sm:$0xff]
        %v599 = vld [vmem:[%s551] sm:$0xff]
        %v600 = vld [vmem:[%s551 + $0x8] sm:$0xff]
        %v601 = vld [vmem:[%s551 + $0x10] sm:$0xff]
        %v602 = vld [vmem:[%s551 + $0x18] sm:$0xff]
        %v603 = vld [vmem:[%s556] sm:$0xff]
        %v604 = vld [vmem:[%s556 + $0x8] sm:$0xff]
        %v605 = vld [vmem:[%s556 + $0x10] sm:$0xff]
        %v606 = vld [vmem:[%s556 + $0x18] sm:$0xff]
        %v607 = vld [vmem:[%s556 + $0x20] sm:$0xff]
        %v608 = vld [vmem:[%s556 + $0x28] sm:$0xff]
        %v609 = vld [vmem:[%s556 + $0x30] sm:$0xff]
        %v610 = vld [vmem:[%s556 + $0x38] sm:$0xff]
        %v611 = vld [vmem:[%s480] sm:$0xff]
        %v612 = vld [vmem:[%s480 + $0x8] sm:$0xff]
        %v613 = vld [vmem:[%s559] sm:$0x1]
        %v614 = vld [vmem:[%s10] sm:$0x3]
        %v615 = vadd.f32 %v569, %v575
        %v616 = vadd.f32 %v570, %v576
        %vm617 = vcmask 261120
        %v619 = vsel %vm617, %v615, 0
        %v622 = vsel %vm617, %v616, 0
        %624 = vmatprep.subr.mxu0 0.0
        %625 = vmatpush1.msra.mxu0 0.0
        %626 = vmatprep.subr.mxu0 0.0
        %627 = vmatpush1.msra.mxu0 0.0
        %628 = vmatprep.subr.mxu0 0.0
        %629 = vmatpush1.msra.mxu0 0.0
        %630 = vmatprep.subr.mxu0 0.0
        %631 = vmatpush1.msra.mxu0 0.0
        %632 = vmatprep.subr.mxu0 0.0
        %633 = vmatpush1.msra.mxu0 0.0
        %634 = vmatprep.subr.mxu0 0.0
        %635 = vmatpush1.msra.mxu0 0.0
        %636 = vmatprep.subr.mxu0 0.0
        %637 = vmatpush1.msra.mxu0 0.0
        %638 = vmatprep.subr.mxu0 0.0
        %639 = vmatpush1.msra.mxu0 0.0
        %640 = vmatprep.subr.mxu0 0.0
        %641 = vmatpush1.msra.mxu0 0.0
        %642 = vmatprep.subr.mxu0 0.0
        %643 = vmatpush1.msra.mxu0 0.0
        %644 = vmatprep.subr.mxu0 0.0
        %645 = vmatpush1.msra.mxu0 0.0
        %646 = vmatprep.subr.mxu0 0.0
        %647 = vmatpush1.msra.mxu0 0.0
        %648 = vmatprep.subr.mxu0 0.0
        %649 = vmatpush1.msra.mxu0 %v584
        %650 = vmatprep.subr.mxu0 0.0
        %651 = vmatpush1.msra.mxu0 %v583
        %652 = vmatprep.subr.mxu0 0.0
        %653 = vmatpush1.msra.mxu0 %v582
        %654 = vmatprep.subr.mxu0 0.0
        %655 = vmatpush1.msra.mxu0 %v581
        %656 = vmatprep.subr.mxu0 0.0
        %657 = vmatpush2.msra.mxu0 0.0
        %658 = vmatprep.subr.mxu0 0.0
        %659 = vmatpush2.msra.mxu0 0.0
        %660 = vmatprep.subr.mxu0 0.0
        %661 = vmatpush2.msra.mxu0 0.0
        %662 = vmatprep.subr.mxu0 0.0
        %663 = vmatpush2.msra.mxu0 0.0
        %664 = vmatprep.subr.mxu0 0.0
        %665 = vmatpush2.msra.mxu0 0.0
        %666 = vmatprep.subr.mxu0 0.0
        %667 = vmatpush2.msra.mxu0 0.0
        %668 = vmatprep.subr.mxu0 0.0
        %669 = vmatpush2.msra.mxu0 0.0
        %670 = vmatprep.subr.mxu0 0.0
        %671 = vmatpush2.msra.mxu0 0.0
        %672 = vmatprep.subr.mxu0 0.0
        %673 = vmatpush2.msra.mxu0 0.0
        %674 = vmatprep.subr.mxu0 0.0
        %675 = vmatpush2.msra.mxu0 0.0
        %676 = vmatprep.subr.mxu0 0.0
        %677 = vmatpush2.msra.mxu0 0.0
        %678 = vmatprep.subr.mxu0 0.0
        %679 = vmatpush2.msra.mxu0 0.0
        %680 = vmatprep.subr.mxu0 0.0
        %681 = vmatpush2.msra.mxu0 0.0
        %682 = vmatprep.subr.mxu0 0.0
        %683 = vmatpush2.msra.mxu0 0.0
        %684 = vmatprep.subr.mxu0 0.0
        %685 = vmatpush2.msra.mxu0 0.0
        %686 = vmatprep.subr.mxu0 0.0
        %687 = vmatpush2.msra.mxu0 0.0
        %688 = vmatprep.mubr.f32.mxu0 0.0
        %689 = vmatmul.mubr.f32.gmra.mxu0 %v619
        %v690 = vpop.f32.mrf.mxu0
        %v691 = vadd.f32 0.0, %v690
        %v692 = vpop.f32.mrf.mxu0
        %693 = vmatprep.mubr.f32.mxu0 0.0
        %694 = vmatmul.mubr.f32.gmra.mxu0 %v622
        %v695 = vpop.f32.mrf.mxu0
        %v696 = vadd.f32 0.0, %v695
        %v697 = vpop.f32.mrf.mxu0
        %698 = vdwg.mxu0
        %v699 = vlaneseq
        %v700 = vshrl.u32 %v699, 7
        %v701 = vsub.s32 0, %v700
        %v702 = vrot.slane %v611, %v701
        %v703 = vadd.f32 %v691, %v702
        %v704 = vadd.f32 %v696, %v702
        %v705 = vlaneseq
        %v706 = vshrl.u32 %v705, 7
        %v707 = vsub.s32 1, %v706
        %v708 = vrot.slane %v611, %v707
        %710 = vrot.lane.b32.xlu0 %v708, 32
        %v711 = vpop.permute.xlu0 %710
        %v713 = vadd.f32 %v691, %v711
        %v714 = vadd.f32 %v696, %v711
        %v715 = vlaneseq
        %v716 = vshrl.u32 %v715, 7
        %v717 = vsub.s32 2, %v716
        %v718 = vrot.slane %v611, %v717
        %723 = vrot.lane.b32.xlu0 %v581, 64
        %v724 = vpop.permute.xlu0 %723
        %725 = vrot.lane.b32.xlu0 %v582, 64
        %v726 = vpop.permute.xlu0 %725
        %727 = vrot.lane.b32.xlu0 %v583, 64
        %v728 = vpop.permute.xlu0 %727
        %729 = vrot.lane.b32.xlu0 %v584, 64
        %v730 = vpop.permute.xlu0 %729
        %v736 = vsel %vm617, %v569, 0
        %v739 = vsel %vm617, %v570, 0
        %741 = vmatprep.subr.mxu0 0.0
        %742 = vmatpush1.msra.mxu0 0.0
        %743 = vmatprep.subr.mxu0 0.0
        %744 = vmatpush1.msra.mxu0 0.0
        %745 = vmatprep.subr.mxu0 0.0
        %746 = vmatpush1.msra.mxu0 0.0
        %747 = vmatprep.subr.mxu0 0.0
        %748 = vmatpush1.msra.mxu0 0.0
        %749 = vmatprep.subr.mxu0 0.0
        %750 = vmatpush1.msra.mxu0 0.0
        %751 = vmatprep.subr.mxu0 0.0
        %752 = vmatpush1.msra.mxu0 0.0
        %753 = vmatprep.subr.mxu0 0.0
        %754 = vmatpush1.msra.mxu0 0.0
        %755 = vmatprep.subr.mxu0 0.0
        %756 = vmatpush1.msra.mxu0 0.0
        %757 = vmatprep.subr.mxu0 0.0
        %758 = vmatpush1.msra.mxu0 0.0
        %759 = vmatprep.subr.mxu0 0.0
        %760 = vmatpush1.msra.mxu0 0.0
        %761 = vmatprep.subr.mxu0 0.0
        %762 = vmatpush1.msra.mxu0 0.0
        %763 = vmatprep.subr.mxu0 0.0
        %764 = vmatpush1.msra.mxu0 0.0
        %765 = vmatprep.subr.mxu0 0.0
        %766 = vmatpush1.msra.mxu0 %v730
        %767 = vmatprep.subr.mxu0 0.0
        %768 = vmatpush1.msra.mxu0 %v728
        %769 = vmatprep.subr.mxu0 0.0
        %770 = vmatpush1.msra.mxu0 %v726
        %771 = vmatprep.subr.mxu0 0.0
        %772 = vmatpush1.msra.mxu0 %v724
        %773 = vmatprep.subr.mxu0 0.0
        %774 = vmatpush2.msra.mxu0 0.0
        %775 = vmatprep.subr.mxu0 0.0
        %776 = vmatpush2.msra.mxu0 0.0
        %777 = vmatprep.subr.mxu0 0.0
        %778 = vmatpush2.msra.mxu0 0.0
        %779 = vmatprep.subr.mxu0 0.0
        %780 = vmatpush2.msra.mxu0 0.0
        %781 = vmatprep.subr.mxu0 0.0
        %782 = vmatpush2.msra.mxu0 0.0
        %783 = vmatprep.subr.mxu0 0.0
        %784 = vmatpush2.msra.mxu0 0.0
        %785 = vmatprep.subr.mxu0 0.0
        %786 = vmatpush2.msra.mxu0 0.0
        %787 = vmatprep.subr.mxu0 0.0
        %788 = vmatpush2.msra.mxu0 0.0
        %789 = vmatprep.subr.mxu0 0.0
        %790 = vmatpush2.msra.mxu0 0.0
        %791 = vmatprep.subr.mxu0 0.0
        %792 = vmatpush2.msra.mxu0 0.0
        %793 = vmatprep.subr.mxu0 0.0
        %794 = vmatpush2.msra.mxu0 0.0
        %795 = vmatprep.subr.mxu0 0.0
        %796 = vmatpush2.msra.mxu0 0.0
        %797 = vmatprep.subr.mxu0 0.0
        %798 = vmatpush2.msra.mxu0 0.0
        %799 = vmatprep.subr.mxu0 0.0
        %800 = vmatpush2.msra.mxu0 0.0
        %801 = vmatprep.subr.mxu0 0.0
        %802 = vmatpush2.msra.mxu0 0.0
        %803 = vmatprep.subr.mxu0 0.0
        %804 = vmatpush2.msra.mxu0 0.0
        %805 = vmatprep.mubr.f32.mxu0 0.0
        %806 = vmatmul.mubr.f32.gmra.mxu0 %v736
        %v807 = vpop.f32.mrf.mxu0
        %v808 = vadd.f32 %v718, %v807
        %v809 = vpop.f32.mrf.mxu0
        %810 = vmatprep.mubr.f32.mxu0 0.0
        %811 = vmatmul.mubr.f32.gmra.mxu0 %v739
        %v812 = vpop.f32.mrf.mxu0
        %v813 = vadd.f32 %v718, %v812
        %v814 = vpop.f32.mrf.mxu0
        %815 = vdwg.mxu0
        %817 = vrot.lane.b32.xlu0 %v713, 96
        %v818 = vpop.permute.xlu0 %817
        %vm819 = vcmask 64512
        %v821 = vsel %vm819, %v703, 0
        %v823 = vsel %vm819, %v818, 0
        %825 = vmatprep.subr.mxu0 0.0
        %826 = vmatpush1.xpose.msra.mxu0 0.0
        %827 = vmatprep.subr.mxu0 0.0
        %828 = vmatpush1.xpose.msra.mxu0 0.0
        %829 = vmatprep.subr.mxu0 0.0
        %830 = vmatpush1.xpose.msra.mxu0 0.0
        %831 = vmatprep.subr.mxu0 0.0
        %832 = vmatpush1.xpose.msra.mxu0 0.0
        %833 = vmatprep.subr.mxu0 0.0
        %834 = vmatpush1.xpose.msra.mxu0 0.0
        %835 = vmatprep.subr.mxu0 0.0
        %836 = vmatpush1.xpose.msra.mxu0 0.0
        %837 = vmatprep.subr.mxu0 0.0
        %838 = vmatpush1.xpose.msra.mxu0 0.0
        %839 = vmatprep.subr.mxu0 0.0
        %840 = vmatpush1.xpose.msra.mxu0 0.0
        %841 = vmatprep.subr.mxu0 0.0
        %842 = vmatpush1.xpose.msra.mxu0 0.0
        %843 = vmatprep.subr.mxu0 0.0
        %844 = vmatpush1.xpose.msra.mxu0 0.0
        %845 = vmatprep.subr.mxu0 0.0
        %846 = vmatpush1.xpose.msra.mxu0 0.0
        %847 = vmatprep.subr.mxu0 0.0
        %848 = vmatpush1.xpose.msra.mxu0 0.0
        %849 = vmatprep.subr.mxu0 0.0
        %850 = vmatpush1.xpose.msra.mxu0 0.0
        %851 = vmatprep.subr.mxu0 0.0
        %852 = vmatpush1.xpose.msra.mxu0 0.0
        %853 = vmatprep.subr.mxu0 0.0
        %854 = vmatpush1.xpose.msra.mxu0 0.0
        %855 = vmatprep.subr.mxu0 0.0
        %856 = vmatpush1.xpose.msra.mxu0 %v823
        %857 = vmatprep.subr.mxu0 0.0
        %858 = vmatpush2.xpose.msra.mxu0 0.0
        %859 = vmatprep.subr.mxu0 0.0
        %860 = vmatpush2.xpose.msra.mxu0 0.0
        %861 = vmatprep.subr.mxu0 0.0
        %862 = vmatpush2.xpose.msra.mxu0 0.0
        %863 = vmatprep.subr.mxu0 0.0
        %864 = vmatpush2.xpose.msra.mxu0 0.0
        %865 = vmatprep.subr.mxu0 0.0
        %866 = vmatpush2.xpose.msra.mxu0 0.0
        %867 = vmatprep.subr.mxu0 0.0
        %868 = vmatpush2.xpose.msra.mxu0 0.0
        %869 = vmatprep.subr.mxu0 0.0
        %870 = vmatpush2.xpose.msra.mxu0 0.0
        %871 = vmatprep.subr.mxu0 0.0
        %872 = vmatpush2.xpose.msra.mxu0 0.0
        %873 = vmatprep.subr.mxu0 0.0
        %874 = vmatpush2.xpose.msra.mxu0 0.0
        %875 = vmatprep.subr.mxu0 0.0
        %876 = vmatpush2.xpose.msra.mxu0 0.0
        %877 = vmatprep.subr.mxu0 0.0
        %878 = vmatpush2.xpose.msra.mxu0 0.0
        %879 = vmatprep.subr.mxu0 0.0
        %880 = vmatpush2.xpose.msra.mxu0 0.0
        %881 = vmatprep.subr.mxu0 0.0
        %882 = vmatpush2.xpose.msra.mxu0 0.0
        %883 = vmatprep.subr.mxu0 0.0
        %884 = vmatpush2.xpose.msra.mxu0 0.0
        %885 = vmatprep.subr.mxu0 0.0
        %886 = vmatpush2.xpose.msra.mxu0 0.0
        %887 = vmatprep.subr.mxu0 0.0
        %888 = vmatpush2.xpose.msra.mxu0 0.0
        %889 = vmatprep.mubr.f32.mxu0 0.0
        %890 = vmatmul.mubr.f32.gmra.mxu0 %v821
        %v891 = vpop.f32.mrf.mxu0
        %v892 = vadd.f32 0.0, %v891
        %v893 = vpop.f32.mrf.mxu0
        %894 = vdwg.mxu0
        %v895 = vmul.f32 %v892, 0.35355338
        %v896 = vsel %vm819, %v895, -inf
        %897 = vmax.xlane.f32.xlu0 %v896
        %v898 = vpop.xlane.xlu0 %897
        %v899 = vsub.f32 %v895, %v898
        %v900 = vmul.f32 %v899, 1.442695
        %v901 = vpow.pop %v900
        %v902 = vsel %vm819, %v901, 0.0
        %903 = vadd.xlane.f32.xlu0 %v902
        %v904 = vpop.xlane.xlu0 %903
        %v905 = vrcp.pop %v904
        %v906 = vmul.f32 %v901, %v905
        %v908 = vsel %vm819, %v906, 0
        %910 = vmatprep.subr.mxu0 0.0
        %911 = vmatpush1.msra.mxu0 0.0
        %912 = vmatprep.subr.mxu0 0.0
        %913 = vmatpush1.msra.mxu0 0.0
        %914 = vmatprep.subr.mxu0 0.0
        %915 = vmatpush1.msra.mxu0 0.0
        %916 = vmatprep.subr.mxu0 0.0
        %917 = vmatpush1.msra.mxu0 0.0
        %918 = vmatprep.subr.mxu0 0.0
        %919 = vmatpush1.msra.mxu0 0.0
        %920 = vmatprep.subr.mxu0 0.0
        %921 = vmatpush1.msra.mxu0 0.0
        %922 = vmatprep.subr.mxu0 0.0
        %923 = vmatpush1.msra.mxu0 0.0
        %924 = vmatprep.subr.mxu0 0.0
        %925 = vmatpush1.msra.mxu0 0.0
        %926 = vmatprep.subr.mxu0 0.0
        %927 = vmatpush1.msra.mxu0 0.0
        %928 = vmatprep.subr.mxu0 0.0
        %929 = vmatpush1.msra.mxu0 0.0
        %930 = vmatprep.subr.mxu0 0.0
        %931 = vmatpush1.msra.mxu0 0.0
        %932 = vmatprep.subr.mxu0 0.0
        %933 = vmatpush1.msra.mxu0 0.0
        %934 = vmatprep.subr.mxu0 0.0
        %935 = vmatpush1.msra.mxu0 0.0
        %936 = vmatprep.subr.mxu0 0.0
        %937 = vmatpush1.msra.mxu0 0.0
        %938 = vmatprep.subr.mxu0 0.0
        %939 = vmatpush1.msra.mxu0 0.0
        %940 = vmatprep.subr.mxu0 0.0
        %941 = vmatpush1.msra.mxu0 %v808
        %942 = vmatprep.subr.mxu0 0.0
        %943 = vmatpush2.msra.mxu0 0.0
        %944 = vmatprep.subr.mxu0 0.0
        %945 = vmatpush2.msra.mxu0 0.0
        %946 = vmatprep.subr.mxu0 0.0
        %947 = vmatpush2.msra.mxu0 0.0
        %948 = vmatprep.subr.mxu0 0.0
        %949 = vmatpush2.msra.mxu0 0.0
        %950 = vmatprep.subr.mxu0 0.0
        %951 = vmatpush2.msra.mxu0 0.0
        %952 = vmatprep.subr.mxu0 0.0
        %953 = vmatpush2.msra.mxu0 0.0
        %954 = vmatprep.subr.mxu0 0.0
        %955 = vmatpush2.msra.mxu0 0.0
        %956 = vmatprep.subr.mxu0 0.0
        %957 = vmatpush2.msra.mxu0 0.0
        %958 = vmatprep.subr.mxu0 0.0
        %959 = vmatpush2.msra.mxu0 0.0
        %960 = vmatprep.subr.mxu0 0.0
        %961 = vmatpush2.msra.mxu0 0.0
        %962 = vmatprep.subr.mxu0 0.0
        %963 = vmatpush2.msra.mxu0 0.0
        %964 = vmatprep.subr.mxu0 0.0
        %965 = vmatpush2.msra.mxu0 0.0
        %966 = vmatprep.subr.mxu0 0.0
        %967 = vmatpush2.msra.mxu0 0.0
        %968 = vmatprep.subr.mxu0 0.0
        %969 = vmatpush2.msra.mxu0 0.0
        %970 = vmatprep.subr.mxu0 0.0
        %971 = vmatpush2.msra.mxu0 0.0
        %972 = vmatprep.subr.mxu0 0.0
        %973 = vmatpush2.msra.mxu0 0.0
        %974 = vmatprep.mubr.f32.mxu0 0.0
        %975 = vmatmul.mubr.f32.gmra.mxu0 %v908
        %v976 = vpop.f32.mrf.mxu0
        %v977 = vadd.f32 0.0, %v976
        %v978 = vpop.f32.mrf.mxu0
        %979 = vdwg.mxu0
        %980 = vrot.lane.b32.xlu0 %v703, 120
        %v981 = vpop.permute.xlu0 %980
        %982 = vrot.lane.b32.xlu0 %v713, 88
        %v983 = vpop.permute.xlu0 %982
        %v984 = vsel %vm819, %v981, 0
        %v986 = vsel %vm819, %v983, 0
        %988 = vmatprep.subr.mxu0 0.0
        %989 = vmatpush1.xpose.msra.mxu0 0.0
        %990 = vmatprep.subr.mxu0 0.0
        %991 = vmatpush1.xpose.msra.mxu0 0.0
        %992 = vmatprep.subr.mxu0 0.0
        %993 = vmatpush1.xpose.msra.mxu0 0.0
        %994 = vmatprep.subr.mxu0 0.0
        %995 = vmatpush1.xpose.msra.mxu0 0.0
        %996 = vmatprep.subr.mxu0 0.0
        %997 = vmatpush1.xpose.msra.mxu0 0.0
        %998 = vmatprep.subr.mxu0 0.0
        %999 = vmatpush1.xpose.msra.mxu0 0.0
        %1000 = vmatprep.subr.mxu0 0.0
        %1001 = vmatpush1.xpose.msra.mxu0 0.0
        %1002 = vmatprep.subr.mxu0 0.0
        %1003 = vmatpush1.xpose.msra.mxu0 0.0
        %1004 = vmatprep.subr.mxu0 0.0
        %1005 = vmatpush1.xpose.msra.mxu0 0.0
        %1006 = vmatprep.subr.mxu0 0.0
        %1007 = vmatpush1.xpose.msra.mxu0 0.0
        %1008 = vmatprep.subr.mxu0 0.0
        %1009 = vmatpush1.xpose.msra.mxu0 0.0
        %1010 = vmatprep.subr.mxu0 0.0
        %1011 = vmatpush1.xpose.msra.mxu0 0.0
        %1012 = vmatprep.subr.mxu0 0.0
        %1013 = vmatpush1.xpose.msra.mxu0 0.0
        %1014 = vmatprep.subr.mxu0 0.0
        %1015 = vmatpush1.xpose.msra.mxu0 0.0
        %1016 = vmatprep.subr.mxu0 0.0
        %1017 = vmatpush1.xpose.msra.mxu0 0.0
        %1018 = vmatprep.subr.mxu0 0.0
        %1019 = vmatpush1.xpose.msra.mxu0 %v986
        %1020 = vmatprep.subr.mxu0 0.0
        %1021 = vmatpush2.xpose.msra.mxu0 0.0
        %1022 = vmatprep.subr.mxu0 0.0
        %1023 = vmatpush2.xpose.msra.mxu0 0.0
        %1024 = vmatprep.subr.mxu0 0.0
        %1025 = vmatpush2.xpose.msra.mxu0 0.0
        %1026 = vmatprep.subr.mxu0 0.0
        %1027 = vmatpush2.xpose.msra.mxu0 0.0
        %1028 = vmatprep.subr.mxu0 0.0
        %1029 = vmatpush2.xpose.msra.mxu0 0.0
        %1030 = vmatprep.subr.mxu0 0.0
        %1031 = vmatpush2.xpose.msra.mxu0 0.0
        %1032 = vmatprep.subr.mxu0 0.0
        %1033 = vmatpush2.xpose.msra.mxu0 0.0
        %1034 = vmatprep.subr.mxu0 0.0
        %1035 = vmatpush2.xpose.msra.mxu0 0.0
        %1036 = vmatprep.subr.mxu0 0.0
        %1037 = vmatpush2.xpose.msra.mxu0 0.0
        %1038 = vmatprep.subr.mxu0 0.0
        %1039 = vmatpush2.xpose.msra.mxu0 0.0
        %1040 = vmatprep.subr.mxu0 0.0
        %1041 = vmatpush2.xpose.msra.mxu0 0.0
        %1042 = vmatprep.subr.mxu0 0.0
        %1043 = vmatpush2.xpose.msra.mxu0 0.0
        %1044 = vmatprep.subr.mxu0 0.0
        %1045 = vmatpush2.xpose.msra.mxu0 0.0
        %1046 = vmatprep.subr.mxu0 0.0
        %1047 = vmatpush2.xpose.msra.mxu0 0.0
        %1048 = vmatprep.subr.mxu0 0.0
        %1049 = vmatpush2.xpose.msra.mxu0 0.0
        %1050 = vmatprep.subr.mxu0 0.0
        %1051 = vmatpush2.xpose.msra.mxu0 0.0
        %1052 = vmatprep.mubr.f32.mxu0 0.0
        %1053 = vmatmul.mubr.f32.gmra.mxu0 %v984
        %v1054 = vpop.f32.mrf.mxu0
        %v1055 = vadd.f32 0.0, %v1054
        %v1056 = vpop.f32.mrf.mxu0
        %1057 = vdwg.mxu0
        %v1058 = vmul.f32 %v1055, 0.35355338
        %v1059 = vsel %vm819, %v1058, -inf
        %1060 = vmax.xlane.f32.xlu0 %v1059
        %v1061 = vpop.xlane.xlu0 %1060
        %v1062 = vsub.f32 %v1058, %v1061
        %v1063 = vmul.f32 %v1062, 1.442695
        %v1064 = vpow.pop %v1063
        %v1065 = vsel %vm819, %v1064, 0.0
        %1066 = vadd.xlane.f32.xlu0 %v1065
        %v1067 = vpop.xlane.xlu0 %1066
        %v1068 = vrcp.pop %v1067
        %v1069 = vmul.f32 %v1064, %v1068
        %1071 = vrot.lane.b32.xlu0 %v808, 120
        %v1072 = vpop.permute.xlu0 %1071
        %v1075 = vsel %vm819, %v1069, 0
        %1077 = vmatprep.subr.mxu0 0.0
        %1078 = vmatpush1.msra.mxu0 0.0
        %1079 = vmatprep.subr.mxu0 0.0
        %1080 = vmatpush1.msra.mxu0 0.0
        %1081 = vmatprep.subr.mxu0 0.0
        %1082 = vmatpush1.msra.mxu0 0.0
        %1083 = vmatprep.subr.mxu0 0.0
        %1084 = vmatpush1.msra.mxu0 0.0
        %1085 = vmatprep.subr.mxu0 0.0
        %1086 = vmatpush1.msra.mxu0 0.0
        %1087 = vmatprep.subr.mxu0 0.0
        %1088 = vmatpush1.msra.mxu0 0.0
        %1089 = vmatprep.subr.mxu0 0.0
        %1090 = vmatpush1.msra.mxu0 0.0
        %1091 = vmatprep.subr.mxu0 0.0
        %1092 = vmatpush1.msra.mxu0 0.0
        %1093 = vmatprep.subr.mxu0 0.0
        %1094 = vmatpush1.msra.mxu0 0.0
        %1095 = vmatprep.subr.mxu0 0.0
        %1096 = vmatpush1.msra.mxu0 0.0
        %1097 = vmatprep.subr.mxu0 0.0
        %1098 = vmatpush1.msra.mxu0 0.0
        %1099 = vmatprep.subr.mxu0 0.0
        %1100 = vmatpush1.msra.mxu0 0.0
        %1101 = vmatprep.subr.mxu0 0.0
        %1102 = vmatpush1.msra.mxu0 0.0
        %1103 = vmatprep.subr.mxu0 0.0
        %1104 = vmatpush1.msra.mxu0 0.0
        %1105 = vmatprep.subr.mxu0 0.0
        %1106 = vmatpush1.msra.mxu0 0.0
        %1107 = vmatprep.subr.mxu0 0.0
        %1108 = vmatpush1.msra.mxu0 %v1072
        %1109 = vmatprep.subr.mxu0 0.0
        %1110 = vmatpush2.msra.mxu0 0.0
        %1111 = vmatprep.subr.mxu0 0.0
        %1112 = vmatpush2.msra.mxu0 0.0
        %1113 = vmatprep.subr.mxu0 0.0
        %1114 = vmatpush2.msra.mxu0 0.0
        %1115 = vmatprep.subr.mxu0 0.0
        %1116 = vmatpush2.msra.mxu0 0.0
        %1117 = vmatprep.subr.mxu0 0.0
        %1118 = vmatpush2.msra.mxu0 0.0
        %1119 = vmatprep.subr.mxu0 0.0
        %1120 = vmatpush2.msra.mxu0 0.0
        %1121 = vmatprep.subr.mxu0 0.0
        %1122 = vmatpush2.msra.mxu0 0.0
        %1123 = vmatprep.subr.mxu0 0.0
        %1124 = vmatpush2.msra.mxu0 0.0
        %1125 = vmatprep.subr.mxu0 0.0
        %1126 = vmatpush2.msra.mxu0 0.0
        %1127 = vmatprep.subr.mxu0 0.0
        %1128 = vmatpush2.msra.mxu0 0.0
        %1129 = vmatprep.subr.mxu0 0.0
        %1130 = vmatpush2.msra.mxu0 0.0
        %1131 = vmatprep.subr.mxu0 0.0
        %1132 = vmatpush2.msra.mxu0 0.0
        %1133 = vmatprep.subr.mxu0 0.0
        %1134 = vmatpush2.msra.mxu0 0.0
        %1135 = vmatprep.subr.mxu0 0.0
        %1136 = vmatpush2.msra.mxu0 0.0
        %1137 = vmatprep.subr.mxu0 0.0
        %1138 = vmatpush2.msra.mxu0 0.0
        %1139 = vmatprep.subr.mxu0 0.0
        %1140 = vmatpush2.msra.mxu0 0.0
        %1141 = vmatprep.mubr.f32.mxu0 0.0
        %1142 = vmatmul.mubr.f32.gmra.mxu0 %v1075
        %v1143 = vpop.f32.mrf.mxu0
        %v1144 = vadd.f32 0.0, %v1143
        %v1145 = vpop.f32.mrf.mxu0
        %1146 = vdwg.mxu0
        %1147 = vrot.lane.b32.xlu0 %v703, 112
        %v1148 = vpop.permute.xlu0 %1147
        %1149 = vrot.lane.b32.xlu0 %v713, 80
        %v1150 = vpop.permute.xlu0 %1149
        %v1151 = vsel %vm819, %v1148, 0
        %v1153 = vsel %vm819, %v1150, 0
        %1155 = vmatprep.subr.mxu0 0.0
        %1156 = vmatpush1.xpose.msra.mxu0 0.0
        %1157 = vmatprep.subr.mxu0 0.0
        %1158 = vmatpush1.xpose.msra.mxu0 0.0
        %1159 = vmatprep.subr.mxu0 0.0
        %1160 = vmatpush1.xpose.msra.mxu0 0.0
        %1161 = vmatprep.subr.mxu0 0.0
        %1162 = vmatpush1.xpose.msra.mxu0 0.0
        %1163 = vmatprep.subr.mxu0 0.0
        %1164 = vmatpush1.xpose.msra.mxu0 0.0
        %1165 = vmatprep.subr.mxu0 0.0
        %1166 = vmatpush1.xpose.msra.mxu0 0.0
        %1167 = vmatprep.subr.mxu0 0.0
        %1168 = vmatpush1.xpose.msra.mxu0 0.0
        %1169 = vmatprep.subr.mxu0 0.0
        %1170 = vmatpush1.xpose.msra.mxu0 0.0
        %1171 = vmatprep.subr.mxu0 0.0
        %1172 = vmatpush1.xpose.msra.mxu0 0.0
        %1173 = vmatprep.subr.mxu0 0.0
        %1174 = vmatpush1.xpose.msra.mxu0 0.0
        %1175 = vmatprep.subr.mxu0 0.0
        %1176 = vmatpush1.xpose.msra.mxu0 0.0
        %1177 = vmatprep.subr.mxu0 0.0
        %1178 = vmatpush1.xpose.msra.mxu0 0.0
        %1179 = vmatprep.subr.mxu0 0.0
        %1180 = vmatpush1.xpose.msra.mxu0 0.0
        %1181 = vmatprep.subr.mxu0 0.0
        %1182 = vmatpush1.xpose.msra.mxu0 0.0
        %1183 = vmatprep.subr.mxu0 0.0
        %1184 = vmatpush1.xpose.msra.mxu0 0.0
        %1185 = vmatprep.subr.mxu0 0.0
        %1186 = vmatpush1.xpose.msra.mxu0 %v1153
        %1187 = vmatprep.subr.mxu0 0.0
        %1188 = vmatpush2.xpose.msra.mxu0 0.0
        %1189 = vmatprep.subr.mxu0 0.0
        %1190 = vmatpush2.xpose.msra.mxu0 0.0
        %1191 = vmatprep.subr.mxu0 0.0
        %1192 = vmatpush2.xpose.msra.mxu0 0.0
        %1193 = vmatprep.subr.mxu0 0.0
        %1194 = vmatpush2.xpose.msra.mxu0 0.0
        %1195 = vmatprep.subr.mxu0 0.0
        %1196 = vmatpush2.xpose.msra.mxu0 0.0
        %1197 = vmatprep.subr.mxu0 0.0
        %1198 = vmatpush2.xpose.msra.mxu0 0.0
        %1199 = vmatprep.subr.mxu0 0.0
        %1200 = vmatpush2.xpose.msra.mxu0 0.0
        %1201 = vmatprep.subr.mxu0 0.0
        %1202 = vmatpush2.xpose.msra.mxu0 0.0
        %1203 = vmatprep.subr.mxu0 0.0
        %1204 = vmatpush2.xpose.msra.mxu0 0.0
        %1205 = vmatprep.subr.mxu0 0.0
        %1206 = vmatpush2.xpose.msra.mxu0 0.0
        %1207 = vmatprep.subr.mxu0 0.0
        %1208 = vmatpush2.xpose.msra.mxu0 0.0
        %1209 = vmatprep.subr.mxu0 0.0
        %1210 = vmatpush2.xpose.msra.mxu0 0.0
        %1211 = vmatprep.subr.mxu0 0.0
        %1212 = vmatpush2.xpose.msra.mxu0 0.0
        %1213 = vmatprep.subr.mxu0 0.0
        %1214 = vmatpush2.xpose.msra.mxu0 0.0
        %1215 = vmatprep.subr.mxu0 0.0
        %1216 = vmatpush2.xpose.msra.mxu0 0.0
        %1217 = vmatprep.subr.mxu0 0.0
        %1218 = vmatpush2.xpose.msra.mxu0 0.0
        %1219 = vmatprep.mubr.f32.mxu0 0.0
        %1220 = vmatmul.mubr.f32.gmra.mxu0 %v1151
        %v1221 = vpop.f32.mrf.mxu0
        %v1222 = vadd.f32 0.0, %v1221
        %v1223 = vpop.f32.mrf.mxu0
        %1224 = vdwg.mxu0
        %v1225 = vmul.f32 %v1222, 0.35355338
        %v1226 = vsel %vm819, %v1225, -inf
        %1227 = vmax.xlane.f32.xlu0 %v1226
        %v1228 = vpop.xlane.xlu0 %1227
        %v1229 = vsub.f32 %v1225, %v1228
        %v1230 = vmul.f32 %v1229, 1.442695
        %v1231 = vpow.pop %v1230
        %v1232 = vsel %vm819, %v1231, 0.0
        %1233 = vadd.xlane.f32.xlu0 %v1232
        %v1234 = vpop.xlane.xlu0 %1233
        %v1235 = vrcp.pop %v1234
        %v1236 = vmul.f32 %v1231, %v1235
        %1237 = vrot.lane.b32.xlu0 %v808, 112
        %v1238 = vpop.permute.xlu0 %1237
        %v1241 = vsel %vm819, %v1236, 0
        %1243 = vmatprep.subr.mxu0 0.0
        %1244 = vmatpush1.msra.mxu0 0.0
        %1245 = vmatprep.subr.mxu0 0.0
        %1246 = vmatpush1.msra.mxu0 0.0
        %1247 = vmatprep.subr.mxu0 0.0
        %1248 = vmatpush1.msra.mxu0 0.0
        %1249 = vmatprep.subr.mxu0 0.0
        %1250 = vmatpush1.msra.mxu0 0.0
        %1251 = vmatprep.subr.mxu0 0.0
        %1252 = vmatpush1.msra.mxu0 0.0
        %1253 = vmatprep.subr.mxu0 0.0
        %1254 = vmatpush1.msra.mxu0 0.0
        %1255 = vmatprep.subr.mxu0 0.0
        %1256 = vmatpush1.msra.mxu0 0.0
        %1257 = vmatprep.subr.mxu0 0.0
        %1258 = vmatpush1.msra.mxu0 0.0
        %1259 = vmatprep.subr.mxu0 0.0
        %1260 = vmatpush1.msra.mxu0 0.0
        %1261 = vmatprep.subr.mxu0 0.0
        %1262 = vmatpush1.msra.mxu0 0.0
        %1263 = vmatprep.subr.mxu0 0.0
        %1264 = vmatpush1.msra.mxu0 0.0
        %1265 = vmatprep.subr.mxu0 0.0
        %1266 = vmatpush1.msra.mxu0 0.0
        %1267 = vmatprep.subr.mxu0 0.0
        %1268 = vmatpush1.msra.mxu0 0.0
        %1269 = vmatprep.subr.mxu0 0.0
        %1270 = vmatpush1.msra.mxu0 0.0
        %1271 = vmatprep.subr.mxu0 0.0
        %1272 = vmatpush1.msra.mxu0 0.0
        %1273 = vmatprep.subr.mxu0 0.0
        %1274 = vmatpush1.msra.mxu0 %v1238
        %1275 = vmatprep.subr.mxu0 0.0
        %1276 = vmatpush2.msra.mxu0 0.0
        %1277 = vmatprep.subr.mxu0 0.0
        %1278 = vmatpush2.msra.mxu0 0.0
        %1279 = vmatprep.subr.mxu0 0.0
        %1280 = vmatpush2.msra.mxu0 0.0
        %1281 = vmatprep.subr.mxu0 0.0
        %1282 = vmatpush2.msra.mxu0 0.0
        %1283 = vmatprep.subr.mxu0 0.0
        %1284 = vmatpush2.msra.mxu0 0.0
        %1285 = vmatprep.subr.mxu0 0.0
        %1286 = vmatpush2.msra.mxu0 0.0
        %1287 = vmatprep.subr.mxu0 0.0
        %1288 = vmatpush2.msra.mxu0 0.0
        %1289 = vmatprep.subr.mxu0 0.0
        %1290 = vmatpush2.msra.mxu0 0.0
        %1291 = vmatprep.subr.mxu0 0.0
        %1292 = vmatpush2.msra.mxu0 0.0
        %1293 = vmatprep.subr.mxu0 0.0
        %1294 = vmatpush2.msra.mxu0 0.0
        %1295 = vmatprep.subr.mxu0 0.0
        %1296 = vmatpush2.msra.mxu0 0.0
        %1297 = vmatprep.subr.mxu0 0.0
        %1298 = vmatpush2.msra.mxu0 0.0
        %1299 = vmatprep.subr.mxu0 0.0
        %1300 = vmatpush2.msra.mxu0 0.0
        %1301 = vmatprep.subr.mxu0 0.0
        %1302 = vmatpush2.msra.mxu0 0.0
        %1303 = vmatprep.subr.mxu0 0.0
        %1304 = vmatpush2.msra.mxu0 0.0
        %1305 = vmatprep.subr.mxu0 0.0
        %1306 = vmatpush2.msra.mxu0 0.0
        %1307 = vmatprep.mubr.f32.mxu0 0.0
        %1308 = vmatmul.mubr.f32.gmra.mxu0 %v1241
        %v1309 = vpop.f32.mrf.mxu0
        %v1310 = vadd.f32 0.0, %v1309
        %v1311 = vpop.f32.mrf.mxu0
        %1312 = vdwg.mxu0
        %1313 = vrot.lane.b32.xlu0 %v703, 104
        %v1314 = vpop.permute.xlu0 %1313
        %1315 = vrot.lane.b32.xlu0 %v713, 72
        %v1316 = vpop.permute.xlu0 %1315
        %v1317 = vsel %vm819, %v1314, 0
        %v1319 = vsel %vm819, %v1316, 0
        %1321 = vmatprep.subr.mxu0 0.0
        %1322 = vmatpush1.xpose.msra.mxu0 0.0
        %1323 = vmatprep.subr.mxu0 0.0
        %1324 = vmatpush1.xpose.msra.mxu0 0.0
        %1325 = vmatprep.subr.mxu0 0.0
        %1326 = vmatpush1.xpose.msra.mxu0 0.0
        %1327 = vmatprep.subr.mxu0 0.0
        %1328 = vmatpush1.xpose.msra.mxu0 0.0
        %1329 = vmatprep.subr.mxu0 0.0
        %1330 = vmatpush1.xpose.msra.mxu0 0.0
        %1331 = vmatprep.subr.mxu0 0.0
        %1332 = vmatpush1.xpose.msra.mxu0 0.0
        %1333 = vmatprep.subr.mxu0 0.0
        %1334 = vmatpush1.xpose.msra.mxu0 0.0
        %1335 = vmatprep.subr.mxu0 0.0
        %1336 = vmatpush1.xpose.msra.mxu0 0.0
        %1337 = vmatprep.subr.mxu0 0.0
        %1338 = vmatpush1.xpose.msra.mxu0 0.0
        %1339 = vmatprep.subr.mxu0 0.0
        %1340 = vmatpush1.xpose.msra.mxu0 0.0
        %1341 = vmatprep.subr.mxu0 0.0
        %1342 = vmatpush1.xpose.msra.mxu0 0.0
        %1343 = vmatprep.subr.mxu0 0.0
        %1344 = vmatpush1.xpose.msra.mxu0 0.0
        %1345 = vmatprep.subr.mxu0 0.0
        %1346 = vmatpush1.xpose.msra.mxu0 0.0
        %1347 = vmatprep.subr.mxu0 0.0
        %1348 = vmatpush1.xpose.msra.mxu0 0.0
        %1349 = vmatprep.subr.mxu0 0.0
        %1350 = vmatpush1.xpose.msra.mxu0 0.0
        %1351 = vmatprep.subr.mxu0 0.0
        %1352 = vmatpush1.xpose.msra.mxu0 %v1319
        %1353 = vmatprep.subr.mxu0 0.0
        %1354 = vmatpush2.xpose.msra.mxu0 0.0
        %1355 = vmatprep.subr.mxu0 0.0
        %1356 = vmatpush2.xpose.msra.mxu0 0.0
        %1357 = vmatprep.subr.mxu0 0.0
        %1358 = vmatpush2.xpose.msra.mxu0 0.0
        %1359 = vmatprep.subr.mxu0 0.0
        %1360 = vmatpush2.xpose.msra.mxu0 0.0
        %1361 = vmatprep.subr.mxu0 0.0
        %1362 = vmatpush2.xpose.msra.mxu0 0.0
        %1363 = vmatprep.subr.mxu0 0.0
        %1364 = vmatpush2.xpose.msra.mxu0 0.0
        %1365 = vmatprep.subr.mxu0 0.0
        %1366 = vmatpush2.xpose.msra.mxu0 0.0
        %1367 = vmatprep.subr.mxu0 0.0
        %1368 = vmatpush2.xpose.msra.mxu0 0.0
        %1369 = vmatprep.subr.mxu0 0.0
        %1370 = vmatpush2.xpose.msra.mxu0 0.0
        %1371 = vmatprep.subr.mxu0 0.0
        %1372 = vmatpush2.xpose.msra.mxu0 0.0
        %1373 = vmatprep.subr.mxu0 0.0
        %1374 = vmatpush2.xpose.msra.mxu0 0.0
        %1375 = vmatprep.subr.mxu0 0.0
        %1376 = vmatpush2.xpose.msra.mxu0 0.0
        %1377 = vmatprep.subr.mxu0 0.0
        %1378 = vmatpush2.xpose.msra.mxu0 0.0
        %1379 = vmatprep.subr.mxu0 0.0
        %1380 = vmatpush2.xpose.msra.mxu0 0.0
        %1381 = vmatprep.subr.mxu0 0.0
        %1382 = vmatpush2.xpose.msra.mxu0 0.0
        %1383 = vmatprep.subr.mxu0 0.0
        %1384 = vmatpush2.xpose.msra.mxu0 0.0
        %1385 = vmatprep.mubr.f32.mxu0 0.0
        %1386 = vmatmul.mubr.f32.gmra.mxu0 %v1317
        %v1387 = vpop.f32.mrf.mxu0
        %v1388 = vadd.f32 0.0, %v1387
        %v1389 = vpop.f32.mrf.mxu0
        %1390 = vdwg.mxu0
        %v1391 = vmul.f32 %v1388, 0.35355338
        %v1392 = vsel %vm819, %v1391, -inf
        %1393 = vmax.xlane.f32.xlu0 %v1392
        %v1394 = vpop.xlane.xlu0 %1393
        %v1395 = vsub.f32 %v1391, %v1394
        %v1396 = vmul.f32 %v1395, 1.442695
        %v1397 = vpow.pop %v1396
        %v1398 = vsel %vm819, %v1397, 0.0
        %1399 = vadd.xlane.f32.xlu0 %v1398
        %v1400 = vpop.xlane.xlu0 %1399
        %v1401 = vrcp.pop %v1400
        %v1402 = vmul.f32 %v1397, %v1401
        %1403 = vrot.lane.b32.xlu0 %v808, 104
        %v1404 = vpop.permute.xlu0 %1403
        %v1407 = vsel %vm819, %v1402, 0
        %1409 = vmatprep.subr.mxu0 0.0
        %1410 = vmatpush1.msra.mxu0 0.0
        %1411 = vmatprep.subr.mxu0 0.0
        %1412 = vmatpush1.msra.mxu0 0.0
        %1413 = vmatprep.subr.mxu0 0.0
        %1414 = vmatpush1.msra.mxu0 0.0
        %1415 = vmatprep.subr.mxu0 0.0
        %1416 = vmatpush1.msra.mxu0 0.0
        %1417 = vmatprep.subr.mxu0 0.0
        %1418 = vmatpush1.msra.mxu0 0.0
        %1419 = vmatprep.subr.mxu0 0.0
        %1420 = vmatpush1.msra.mxu0 0.0
        %1421 = vmatprep.subr.mxu0 0.0
        %1422 = vmatpush1.msra.mxu0 0.0
        %1423 = vmatprep.subr.mxu0 0.0
        %1424 = vmatpush1.msra.mxu0 0.0
        %1425 = vmatprep.subr.mxu0 0.0
        %1426 = vmatpush1.msra.mxu0 0.0
        %1427 = vmatprep.subr.mxu0 0.0
        %1428 = vmatpush1.msra.mxu0 0.0
        %1429 = vmatprep.subr.mxu0 0.0
        %1430 = vmatpush1.msra.mxu0 0.0
        %1431 = vmatprep.subr.mxu0 0.0
        %1432 = vmatpush1.msra.mxu0 0.0
        %1433 = vmatprep.subr.mxu0 0.0
        %1434 = vmatpush1.msra.mxu0 0.0
        %1435 = vmatprep.subr.mxu0 0.0
        %1436 = vmatpush1.msra.mxu0 0.0
        %1437 = vmatprep.subr.mxu0 0.0
        %1438 = vmatpush1.msra.mxu0 0.0
        %1439 = vmatprep.subr.mxu0 0.0
        %1440 = vmatpush1.msra.mxu0 %v1404
        %1441 = vmatprep.subr.mxu0 0.0
        %1442 = vmatpush2.msra.mxu0 0.0
        %1443 = vmatprep.subr.mxu0 0.0
        %1444 = vmatpush2.msra.mxu0 0.0
        %1445 = vmatprep.subr.mxu0 0.0
        %1446 = vmatpush2.msra.mxu0 0.0
        %1447 = vmatprep.subr.mxu0 0.0
        %1448 = vmatpush2.msra.mxu0 0.0
        %1449 = vmatprep.subr.mxu0 0.0
        %1450 = vmatpush2.msra.mxu0 0.0
        %1451 = vmatprep.subr.mxu0 0.0
        %1452 = vmatpush2.msra.mxu0 0.0
        %1453 = vmatprep.subr.mxu0 0.0
        %1454 = vmatpush2.msra.mxu0 0.0
        %1455 = vmatprep.subr.mxu0 0.0
        %1456 = vmatpush2.msra.mxu0 0.0
        %1457 = vmatprep.subr.mxu0 0.0
        %1458 = vmatpush2.msra.mxu0 0.0
        %1459 = vmatprep.subr.mxu0 0.0
        %1460 = vmatpush2.msra.mxu0 0.0
        %1461 = vmatprep.subr.mxu0 0.0
        %1462 = vmatpush2.msra.mxu0 0.0
        %1463 = vmatprep.subr.mxu0 0.0
        %1464 = vmatpush2.msra.mxu0 0.0
        %1465 = vmatprep.subr.mxu0 0.0
        %1466 = vmatpush2.msra.mxu0 0.0
        %1467 = vmatprep.subr.mxu0 0.0
        %1468 = vmatpush2.msra.mxu0 0.0
        %1469 = vmatprep.subr.mxu0 0.0
        %1470 = vmatpush2.msra.mxu0 0.0
        %1471 = vmatprep.subr.mxu0 0.0
        %1472 = vmatpush2.msra.mxu0 0.0
        %1473 = vmatprep.mubr.f32.mxu0 0.0
        %1474 = vmatmul.mubr.f32.gmra.mxu0 %v1407
        %v1475 = vpop.f32.mrf.mxu0
        %v1476 = vadd.f32 0.0, %v1475
        %v1477 = vpop.f32.mrf.mxu0
        %1478 = vdwg.mxu0
        %1480 = vrot.lane.b32.xlu0 %v1144, 8
        %v1481 = vpop.permute.xlu0 %1480
        %1484 = vrot.lane.b32.xlu0 %v1310, 16
        %v1485 = vpop.permute.xlu0 %1484
        %1488 = vrot.lane.b32.xlu0 %v1476, 24
        %v1489 = vpop.permute.xlu0 %1488
        %v1491 = vsel %vm819, %v977, %v1481
        %vm1492 = vcmask 130048
        %v1493 = vsel %vm1492, %v1491, %v1485
        %vm1494 = vcmask 195584
        %v1495 = vsel %vm1494, %v1493, %v1489
        %1497 = vrot.lane.b32.xlu0 %v714, 96
        %v1498 = vpop.permute.xlu0 %1497
        %v1500 = vsel %vm819, %v704, 0
        %v1502 = vsel %vm819, %v1498, 0
        %1504 = vmatprep.subr.mxu0 0.0
        %1505 = vmatpush1.xpose.msra.mxu0 0.0
        %1506 = vmatprep.subr.mxu0 0.0
        %1507 = vmatpush1.xpose.msra.mxu0 0.0
        %1508 = vmatprep.subr.mxu0 0.0
        %1509 = vmatpush1.xpose.msra.mxu0 0.0
        %1510 = vmatprep.subr.mxu0 0.0
        %1511 = vmatpush1.xpose.msra.mxu0 0.0
        %1512 = vmatprep.subr.mxu0 0.0
        %1513 = vmatpush1.xpose.msra.mxu0 0.0
        %1514 = vmatprep.subr.mxu0 0.0
        %1515 = vmatpush1.xpose.msra.mxu0 0.0
        %1516 = vmatprep.subr.mxu0 0.0
        %1517 = vmatpush1.xpose.msra.mxu0 0.0
        %1518 = vmatprep.subr.mxu0 0.0
        %1519 = vmatpush1.xpose.msra.mxu0 0.0
        %1520 = vmatprep.subr.mxu0 0.0
        %1521 = vmatpush1.xpose.msra.mxu0 0.0
        %1522 = vmatprep.subr.mxu0 0.0
        %1523 = vmatpush1.xpose.msra.mxu0 0.0
        %1524 = vmatprep.subr.mxu0 0.0
        %1525 = vmatpush1.xpose.msra.mxu0 0.0
        %1526 = vmatprep.subr.mxu0 0.0
        %1527 = vmatpush1.xpose.msra.mxu0 0.0
        %1528 = vmatprep.subr.mxu0 0.0
        %1529 = vmatpush1.xpose.msra.mxu0 0.0
        %1530 = vmatprep.subr.mxu0 0.0
        %1531 = vmatpush1.xpose.msra.mxu0 0.0
        %1532 = vmatprep.subr.mxu0 0.0
        %1533 = vmatpush1.xpose.msra.mxu0 0.0
        %1534 = vmatprep.subr.mxu0 0.0
        %1535 = vmatpush1.xpose.msra.mxu0 %v1502
        %1536 = vmatprep.subr.mxu0 0.0
        %1537 = vmatpush2.xpose.msra.mxu0 0.0
        %1538 = vmatprep.subr.mxu0 0.0
        %1539 = vmatpush2.xpose.msra.mxu0 0.0
        %1540 = vmatprep.subr.mxu0 0.0
        %1541 = vmatpush2.xpose.msra.mxu0 0.0
        %1542 = vmatprep.subr.mxu0 0.0
        %1543 = vmatpush2.xpose.msra.mxu0 0.0
        %1544 = vmatprep.subr.mxu0 0.0
        %1545 = vmatpush2.xpose.msra.mxu0 0.0
        %1546 = vmatprep.subr.mxu0 0.0
        %1547 = vmatpush2.xpose.msra.mxu0 0.0
        %1548 = vmatprep.subr.mxu0 0.0
        %1549 = vmatpush2.xpose.msra.mxu0 0.0
        %1550 = vmatprep.subr.mxu0 0.0
        %1551 = vmatpush2.xpose.msra.mxu0 0.0
        %1552 = vmatprep.subr.mxu0 0.0
        %1553 = vmatpush2.xpose.msra.mxu0 0.0
        %1554 = vmatprep.subr.mxu0 0.0
        %1555 = vmatpush2.xpose.msra.mxu0 0.0
        %1556 = vmatprep.subr.mxu0 0.0
        %1557 = vmatpush2.xpose.msra.mxu0 0.0
        %1558 = vmatprep.subr.mxu0 0.0
        %1559 = vmatpush2.xpose.msra.mxu0 0.0
        %1560 = vmatprep.subr.mxu0 0.0
        %1561 = vmatpush2.xpose.msra.mxu0 0.0
        %1562 = vmatprep.subr.mxu0 0.0
        %1563 = vmatpush2.xpose.msra.mxu0 0.0
        %1564 = vmatprep.subr.mxu0 0.0
        %1565 = vmatpush2.xpose.msra.mxu0 0.0
        %1566 = vmatprep.subr.mxu0 0.0
        %1567 = vmatpush2.xpose.msra.mxu0 0.0
        %1568 = vmatprep.mubr.f32.mxu0 0.0
        %1569 = vmatmul.mubr.f32.gmra.mxu0 %v1500
        %v1570 = vpop.f32.mrf.mxu0
        %v1571 = vadd.f32 0.0, %v1570
        %v1572 = vpop.f32.mrf.mxu0
        %1573 = vdwg.mxu0
        %v1574 = vmul.f32 %v1571, 0.35355338
        %v1575 = vsel %vm819, %v1574, -inf
        %1576 = vmax.xlane.f32.xlu0 %v1575
        %v1577 = vpop.xlane.xlu0 %1576
        %v1578 = vsub.f32 %v1574, %v1577
        %v1579 = vmul.f32 %v1578, 1.442695
        %v1580 = vpow.pop %v1579
        %v1581 = vsel %vm819, %v1580, 0.0
        %1582 = vadd.xlane.f32.xlu0 %v1581
        %v1583 = vpop.xlane.xlu0 %1582
        %v1584 = vrcp.pop %v1583
        %v1585 = vmul.f32 %v1580, %v1584
        %v1587 = vsel %vm819, %v1585, 0
        %1589 = vmatprep.subr.mxu0 0.0
        %1590 = vmatpush1.msra.mxu0 0.0
        %1591 = vmatprep.subr.mxu0 0.0
        %1592 = vmatpush1.msra.mxu0 0.0
        %1593 = vmatprep.subr.mxu0 0.0
        %1594 = vmatpush1.msra.mxu0 0.0
        %1595 = vmatprep.subr.mxu0 0.0
        %1596 = vmatpush1.msra.mxu0 0.0
        %1597 = vmatprep.subr.mxu0 0.0
        %1598 = vmatpush1.msra.mxu0 0.0
        %1599 = vmatprep.subr.mxu0 0.0
        %1600 = vmatpush1.msra.mxu0 0.0
        %1601 = vmatprep.subr.mxu0 0.0
        %1602 = vmatpush1.msra.mxu0 0.0
        %1603 = vmatprep.subr.mxu0 0.0
        %1604 = vmatpush1.msra.mxu0 0.0
        %1605 = vmatprep.subr.mxu0 0.0
        %1606 = vmatpush1.msra.mxu0 0.0
        %1607 = vmatprep.subr.mxu0 0.0
        %1608 = vmatpush1.msra.mxu0 0.0
        %1609 = vmatprep.subr.mxu0 0.0
        %1610 = vmatpush1.msra.mxu0 0.0
        %1611 = vmatprep.subr.mxu0 0.0
        %1612 = vmatpush1.msra.mxu0 0.0
        %1613 = vmatprep.subr.mxu0 0.0
        %1614 = vmatpush1.msra.mxu0 0.0
        %1615 = vmatprep.subr.mxu0 0.0
        %1616 = vmatpush1.msra.mxu0 0.0
        %1617 = vmatprep.subr.mxu0 0.0
        %1618 = vmatpush1.msra.mxu0 0.0
        %1619 = vmatprep.subr.mxu0 0.0
        %1620 = vmatpush1.msra.mxu0 %v813
        %1621 = vmatprep.subr.mxu0 0.0
        %1622 = vmatpush2.msra.mxu0 0.0
        %1623 = vmatprep.subr.mxu0 0.0
        %1624 = vmatpush2.msra.mxu0 0.0
        %1625 = vmatprep.subr.mxu0 0.0
        %1626 = vmatpush2.msra.mxu0 0.0
        %1627 = vmatprep.subr.mxu0 0.0
        %1628 = vmatpush2.msra.mxu0 0.0
        %1629 = vmatprep.subr.mxu0 0.0
        %1630 = vmatpush2.msra.mxu0 0.0
        %1631 = vmatprep.subr.mxu0 0.0
        %1632 = vmatpush2.msra.mxu0 0.0
        %1633 = vmatprep.subr.mxu0 0.0
        %1634 = vmatpush2.msra.mxu0 0.0
        %1635 = vmatprep.subr.mxu0 0.0
        %1636 = vmatpush2.msra.mxu0 0.0
        %1637 = vmatprep.subr.mxu0 0.0
        %1638 = vmatpush2.msra.mxu0 0.0
        %1639 = vmatprep.subr.mxu0 0.0
        %1640 = vmatpush2.msra.mxu0 0.0
        %1641 = vmatprep.subr.mxu0 0.0
        %1642 = vmatpush2.msra.mxu0 0.0
        %1643 = vmatprep.subr.mxu0 0.0
        %1644 = vmatpush2.msra.mxu0 0.0
        %1645 = vmatprep.subr.mxu0 0.0
        %1646 = vmatpush2.msra.mxu0 0.0
        %1647 = vmatprep.subr.mxu0 0.0
        %1648 = vmatpush2.msra.mxu0 0.0
        %1649 = vmatprep.subr.mxu0 0.0
        %1650 = vmatpush2.msra.mxu0 0.0
        %1651 = vmatprep.subr.mxu0 0.0
        %1652 = vmatpush2.msra.mxu0 0.0
        %1653 = vmatprep.mubr.f32.mxu0 0.0
        %1654 = vmatmul.mubr.f32.gmra.mxu0 %v1587
        %v1655 = vpop.f32.mrf.mxu0
        %v1656 = vadd.f32 0.0, %v1655
        %v1657 = vpop.f32.mrf.mxu0
        %1658 = vdwg.mxu0
        %1659 = vrot.lane.b32.xlu0 %v704, 120
        %v1660 = vpop.permute.xlu0 %1659
        %1661 = vrot.lane.b32.xlu0 %v714, 88
        %v1662 = vpop.permute.xlu0 %1661
        %v1663 = vsel %vm819, %v1660, 0
        %v1665 = vsel %vm819, %v1662, 0
        %1667 = vmatprep.subr.mxu0 0.0
        %1668 = vmatpush1.xpose.msra.mxu0 0.0
        %1669 = vmatprep.subr.mxu0 0.0
        %1670 = vmatpush1.xpose.msra.mxu0 0.0
        %1671 = vmatprep.subr.mxu0 0.0
        %1672 = vmatpush1.xpose.msra.mxu0 0.0
        %1673 = vmatprep.subr.mxu0 0.0
        %1674 = vmatpush1.xpose.msra.mxu0 0.0
        %1675 = vmatprep.subr.mxu0 0.0
        %1676 = vmatpush1.xpose.msra.mxu0 0.0
        %1677 = vmatprep.subr.mxu0 0.0
        %1678 = vmatpush1.xpose.msra.mxu0 0.0
        %1679 = vmatprep.subr.mxu0 0.0
        %1680 = vmatpush1.xpose.msra.mxu0 0.0
        %1681 = vmatprep.subr.mxu0 0.0
        %1682 = vmatpush1.xpose.msra.mxu0 0.0
        %1683 = vmatprep.subr.mxu0 0.0
        %1684 = vmatpush1.xpose.msra.mxu0 0.0
        %1685 = vmatprep.subr.mxu0 0.0
        %1686 = vmatpush1.xpose.msra.mxu0 0.0
        %1687 = vmatprep.subr.mxu0 0.0
        %1688 = vmatpush1.xpose.msra.mxu0 0.0
        %1689 = vmatprep.subr.mxu0 0.0
        %1690 = vmatpush1.xpose.msra.mxu0 0.0
        %1691 = vmatprep.subr.mxu0 0.0
        %1692 = vmatpush1.xpose.msra.mxu0 0.0
        %1693 = vmatprep.subr.mxu0 0.0
        %1694 = vmatpush1.xpose.msra.mxu0 0.0
        %1695 = vmatprep.subr.mxu0 0.0
        %1696 = vmatpush1.xpose.msra.mxu0 0.0
        %1697 = vmatprep.subr.mxu0 0.0
        %1698 = vmatpush1.xpose.msra.mxu0 %v1665
        %1699 = vmatprep.subr.mxu0 0.0
        %1700 = vmatpush2.xpose.msra.mxu0 0.0
        %1701 = vmatprep.subr.mxu0 0.0
        %1702 = vmatpush2.xpose.msra.mxu0 0.0
        %1703 = vmatprep.subr.mxu0 0.0
        %1704 = vmatpush2.xpose.msra.mxu0 0.0
        %1705 = vmatprep.subr.mxu0 0.0
        %1706 = vmatpush2.xpose.msra.mxu0 0.0
        %1707 = vmatprep.subr.mxu0 0.0
        %1708 = vmatpush2.xpose.msra.mxu0 0.0
        %1709 = vmatprep.subr.mxu0 0.0
        %1710 = vmatpush2.xpose.msra.mxu0 0.0
        %1711 = vmatprep.subr.mxu0 0.0
        %1712 = vmatpush2.xpose.msra.mxu0 0.0
        %1713 = vmatprep.subr.mxu0 0.0
        %1714 = vmatpush2.xpose.msra.mxu0 0.0
        %1715 = vmatprep.subr.mxu0 0.0
        %1716 = vmatpush2.xpose.msra.mxu0 0.0
        %1717 = vmatprep.subr.mxu0 0.0
        %1718 = vmatpush2.xpose.msra.mxu0 0.0
        %1719 = vmatprep.subr.mxu0 0.0
        %1720 = vmatpush2.xpose.msra.mxu0 0.0
        %1721 = vmatprep.subr.mxu0 0.0
        %1722 = vmatpush2.xpose.msra.mxu0 0.0
        %1723 = vmatprep.subr.mxu0 0.0
        %1724 = vmatpush2.xpose.msra.mxu0 0.0
        %1725 = vmatprep.subr.mxu0 0.0
        %1726 = vmatpush2.xpose.msra.mxu0 0.0
        %1727 = vmatprep.subr.mxu0 0.0
        %1728 = vmatpush2.xpose.msra.mxu0 0.0
        %1729 = vmatprep.subr.mxu0 0.0
        %1730 = vmatpush2.xpose.msra.mxu0 0.0
        %1731 = vmatprep.mubr.f32.mxu0 0.0
        %1732 = vmatmul.mubr.f32.gmra.mxu0 %v1663
        %v1733 = vpop.f32.mrf.mxu0
        %v1734 = vadd.f32 0.0, %v1733
        %v1735 = vpop.f32.mrf.mxu0
        %1736 = vdwg.mxu0
        %v1737 = vmul.f32 %v1734, 0.35355338
        %v1738 = vsel %vm819, %v1737, -inf
        %1739 = vmax.xlane.f32.xlu0 %v1738
        %v1740 = vpop.xlane.xlu0 %1739
        %v1741 = vsub.f32 %v1737, %v1740
        %v1742 = vmul.f32 %v1741, 1.442695
        %v1743 = vpow.pop %v1742
        %v1744 = vsel %vm819, %v1743, 0.0
        %1745 = vadd.xlane.f32.xlu0 %v1744
        %v1746 = vpop.xlane.xlu0 %1745
        %v1747 = vrcp.pop %v1746
        %v1748 = vmul.f32 %v1743, %v1747
        %1750 = vrot.lane.b32.xlu0 %v813, 120
        %v1751 = vpop.permute.xlu0 %1750
        %v1754 = vsel %vm819, %v1748, 0
        %1756 = vmatprep.subr.mxu0 0.0
        %1757 = vmatpush1.msra.mxu0 0.0
        %1758 = vmatprep.subr.mxu0 0.0
        %1759 = vmatpush1.msra.mxu0 0.0
        %1760 = vmatprep.subr.mxu0 0.0
        %1761 = vmatpush1.msra.mxu0 0.0
        %1762 = vmatprep.subr.mxu0 0.0
        %1763 = vmatpush1.msra.mxu0 0.0
        %1764 = vmatprep.subr.mxu0 0.0
        %1765 = vmatpush1.msra.mxu0 0.0
        %1766 = vmatprep.subr.mxu0 0.0
        %1767 = vmatpush1.msra.mxu0 0.0
        %1768 = vmatprep.subr.mxu0 0.0
        %1769 = vmatpush1.msra.mxu0 0.0
        %1770 = vmatprep.subr.mxu0 0.0
        %1771 = vmatpush1.msra.mxu0 0.0
        %1772 = vmatprep.subr.mxu0 0.0
        %1773 = vmatpush1.msra.mxu0 0.0
        %1774 = vmatprep.subr.mxu0 0.0
        %1775 = vmatpush1.msra.mxu0 0.0
        %1776 = vmatprep.subr.mxu0 0.0
        %1777 = vmatpush1.msra.mxu0 0.0
        %1778 = vmatprep.subr.mxu0 0.0
        %1779 = vmatpush1.msra.mxu0 0.0
        %1780 = vmatprep.subr.mxu0 0.0
        %1781 = vmatpush1.msra.mxu0 0.0
        %1782 = vmatprep.subr.mxu0 0.0
        %1783 = vmatpush1.msra.mxu0 0.0
        %1784 = vmatprep.subr.mxu0 0.0
        %1785 = vmatpush1.msra.mxu0 0.0
        %1786 = vmatprep.subr.mxu0 0.0
        %1787 = vmatpush1.msra.mxu0 %v1751
        %1788 = vmatprep.subr.mxu0 0.0
        %1789 = vmatpush2.msra.mxu0 0.0
        %1790 = vmatprep.subr.mxu0 0.0
        %1791 = vmatpush2.msra.mxu0 0.0
        %1792 = vmatprep.subr.mxu0 0.0
        %1793 = vmatpush2.msra.mxu0 0.0
        %1794 = vmatprep.subr.mxu0 0.0
        %1795 = vmatpush2.msra.mxu0 0.0
        %1796 = vmatprep.subr.mxu0 0.0
        %1797 = vmatpush2.msra.mxu0 0.0
        %1798 = vmatprep.subr.mxu0 0.0
        %1799 = vmatpush2.msra.mxu0 0.0
        %1800 = vmatprep.subr.mxu0 0.0
        %1801 = vmatpush2.msra.mxu0 0.0
        %1802 = vmatprep.subr.mxu0 0.0
        %1803 = vmatpush2.msra.mxu0 0.0
        %1804 = vmatprep.subr.mxu0 0.0
        %1805 = vmatpush2.msra.mxu0 0.0
        %1806 = vmatprep.subr.mxu0 0.0
        %1807 = vmatpush2.msra.mxu0 0.0
        %1808 = vmatprep.subr.mxu0 0.0
        %1809 = vmatpush2.msra.mxu0 0.0
        %1810 = vmatprep.subr.mxu0 0.0
        %1811 = vmatpush2.msra.mxu0 0.0
        %1812 = vmatprep.subr.mxu0 0.0
        %1813 = vmatpush2.msra.mxu0 0.0
        %1814 = vmatprep.subr.mxu0 0.0
        %1815 = vmatpush2.msra.mxu0 0.0
        %1816 = vmatprep.subr.mxu0 0.0
        %1817 = vmatpush2.msra.mxu0 0.0
        %1818 = vmatprep.subr.mxu0 0.0
        %1819 = vmatpush2.msra.mxu0 0.0
        %1820 = vmatprep.mubr.f32.mxu0 0.0
        %1821 = vmatmul.mubr.f32.gmra.mxu0 %v1754
        %v1822 = vpop.f32.mrf.mxu0
        %v1823 = vadd.f32 0.0, %v1822
        %v1824 = vpop.f32.mrf.mxu0
        %1825 = vdwg.mxu0
        %1826 = vrot.lane.b32.xlu0 %v704, 112
        %v1827 = vpop.permute.xlu0 %1826
        %1828 = vrot.lane.b32.xlu0 %v714, 80
        %v1829 = vpop.permute.xlu0 %1828
        %v1830 = vsel %vm819, %v1827, 0
        %v1832 = vsel %vm819, %v1829, 0
        %1834 = vmatprep.subr.mxu0 0.0
        %1835 = vmatpush1.xpose.msra.mxu0 0.0
        %1836 = vmatprep.subr.mxu0 0.0
        %1837 = vmatpush1.xpose.msra.mxu0 0.0
        %1838 = vmatprep.subr.mxu0 0.0
        %1839 = vmatpush1.xpose.msra.mxu0 0.0
        %1840 = vmatprep.subr.mxu0 0.0
        %1841 = vmatpush1.xpose.msra.mxu0 0.0
        %1842 = vmatprep.subr.mxu0 0.0
        %1843 = vmatpush1.xpose.msra.mxu0 0.0
        %1844 = vmatprep.subr.mxu0 0.0
        %1845 = vmatpush1.xpose.msra.mxu0 0.0
        %1846 = vmatprep.subr.mxu0 0.0
        %1847 = vmatpush1.xpose.msra.mxu0 0.0
        %1848 = vmatprep.subr.mxu0 0.0
        %1849 = vmatpush1.xpose.msra.mxu0 0.0
        %1850 = vmatprep.subr.mxu0 0.0
        %1851 = vmatpush1.xpose.msra.mxu0 0.0
        %1852 = vmatprep.subr.mxu0 0.0
        %1853 = vmatpush1.xpose.msra.mxu0 0.0
        %1854 = vmatprep.subr.mxu0 0.0
        %1855 = vmatpush1.xpose.msra.mxu0 0.0
        %1856 = vmatprep.subr.mxu0 0.0
        %1857 = vmatpush1.xpose.msra.mxu0 0.0
        %1858 = vmatprep.subr.mxu0 0.0
        %1859 = vmatpush1.xpose.msra.mxu0 0.0
        %1860 = vmatprep.subr.mxu0 0.0
        %1861 = vmatpush1.xpose.msra.mxu0 0.0
        %1862 = vmatprep.subr.mxu0 0.0
        %1863 = vmatpush1.xpose.msra.mxu0 0.0
        %1864 = vmatprep.subr.mxu0 0.0
        %1865 = vmatpush1.xpose.msra.mxu0 %v1832
        %1866 = vmatprep.subr.mxu0 0.0
        %1867 = vmatpush2.xpose.msra.mxu0 0.0
        %1868 = vmatprep.subr.mxu0 0.0
        %1869 = vmatpush2.xpose.msra.mxu0 0.0
        %1870 = vmatprep.subr.mxu0 0.0
        %1871 = vmatpush2.xpose.msra.mxu0 0.0
        %1872 = vmatprep.subr.mxu0 0.0
        %1873 = vmatpush2.xpose.msra.mxu0 0.0
        %1874 = vmatprep.subr.mxu0 0.0
        %1875 = vmatpush2.xpose.msra.mxu0 0.0
        %1876 = vmatprep.subr.mxu0 0.0
        %1877 = vmatpush2.xpose.msra.mxu0 0.0
        %1878 = vmatprep.subr.mxu0 0.0
        %1879 = vmatpush2.xpose.msra.mxu0 0.0
        %1880 = vmatprep.subr.mxu0 0.0
        %1881 = vmatpush2.xpose.msra.mxu0 0.0
        %1882 = vmatprep.subr.mxu0 0.0
        %1883 = vmatpush2.xpose.msra.mxu0 0.0
        %1884 = vmatprep.subr.mxu0 0.0
        %1885 = vmatpush2.xpose.msra.mxu0 0.0
        %1886 = vmatprep.subr.mxu0 0.0
        %1887 = vmatpush2.xpose.msra.mxu0 0.0
        %1888 = vmatprep.subr.mxu0 0.0
        %1889 = vmatpush2.xpose.msra.mxu0 0.0
        %1890 = vmatprep.subr.mxu0 0.0
        %1891 = vmatpush2.xpose.msra.mxu0 0.0
        %1892 = vmatprep.subr.mxu0 0.0
        %1893 = vmatpush2.xpose.msra.mxu0 0.0
        %1894 = vmatprep.subr.mxu0 0.0
        %1895 = vmatpush2.xpose.msra.mxu0 0.0
        %1896 = vmatprep.subr.mxu0 0.0
        %1897 = vmatpush2.xpose.msra.mxu0 0.0
        %1898 = vmatprep.mubr.f32.mxu0 0.0
        %1899 = vmatmul.mubr.f32.gmra.mxu0 %v1830
        %v1900 = vpop.f32.mrf.mxu0
        %v1901 = vadd.f32 0.0, %v1900
        %v1902 = vpop.f32.mrf.mxu0
        %1903 = vdwg.mxu0
        %v1904 = vmul.f32 %v1901, 0.35355338
        %v1905 = vsel %vm819, %v1904, -inf
        %1906 = vmax.xlane.f32.xlu0 %v1905
        %v1907 = vpop.xlane.xlu0 %1906
        %v1908 = vsub.f32 %v1904, %v1907
        %v1909 = vmul.f32 %v1908, 1.442695
        %v1910 = vpow.pop %v1909
        %v1911 = vsel %vm819, %v1910, 0.0
        %1912 = vadd.xlane.f32.xlu0 %v1911
        %v1913 = vpop.xlane.xlu0 %1912
        %v1914 = vrcp.pop %v1913
        %v1915 = vmul.f32 %v1910, %v1914
        %1916 = vrot.lane.b32.xlu0 %v813, 112
        %v1917 = vpop.permute.xlu0 %1916
        %v1920 = vsel %vm819, %v1915, 0
        %1922 = vmatprep.subr.mxu0 0.0
        %1923 = vmatpush1.msra.mxu0 0.0
        %1924 = vmatprep.subr.mxu0 0.0
        %1925 = vmatpush1.msra.mxu0 0.0
        %1926 = vmatprep.subr.mxu0 0.0
        %1927 = vmatpush1.msra.mxu0 0.0
        %1928 = vmatprep.subr.mxu0 0.0
        %1929 = vmatpush1.msra.mxu0 0.0
        %1930 = vmatprep.subr.mxu0 0.0
        %1931 = vmatpush1.msra.mxu0 0.0
        %1932 = vmatprep.subr.mxu0 0.0
        %1933 = vmatpush1.msra.mxu0 0.0
        %1934 = vmatprep.subr.mxu0 0.0
        %1935 = vmatpush1.msra.mxu0 0.0
        %1936 = vmatprep.subr.mxu0 0.0
        %1937 = vmatpush1.msra.mxu0 0.0
        %1938 = vmatprep.subr.mxu0 0.0
        %1939 = vmatpush1.msra.mxu0 0.0
        %1940 = vmatprep.subr.mxu0 0.0
        %1941 = vmatpush1.msra.mxu0 0.0
        %1942 = vmatprep.subr.mxu0 0.0
        %1943 = vmatpush1.msra.mxu0 0.0
        %1944 = vmatprep.subr.mxu0 0.0
        %1945 = vmatpush1.msra.mxu0 0.0
        %1946 = vmatprep.subr.mxu0 0.0
        %1947 = vmatpush1.msra.mxu0 0.0
        %1948 = vmatprep.subr.mxu0 0.0
        %1949 = vmatpush1.msra.mxu0 0.0
        %1950 = vmatprep.subr.mxu0 0.0
        %1951 = vmatpush1.msra.mxu0 0.0
        %1952 = vmatprep.subr.mxu0 0.0
        %1953 = vmatpush1.msra.mxu0 %v1917
        %1954 = vmatprep.subr.mxu0 0.0
        %1955 = vmatpush2.msra.mxu0 0.0
        %1956 = vmatprep.subr.mxu0 0.0
        %1957 = vmatpush2.msra.mxu0 0.0
        %1958 = vmatprep.subr.mxu0 0.0
        %1959 = vmatpush2.msra.mxu0 0.0
        %1960 = vmatprep.subr.mxu0 0.0
        %1961 = vmatpush2.msra.mxu0 0.0
        %1962 = vmatprep.subr.mxu0 0.0
        %1963 = vmatpush2.msra.mxu0 0.0
        %1964 = vmatprep.subr.mxu0 0.0
        %1965 = vmatpush2.msra.mxu0 0.0
        %1966 = vmatprep.subr.mxu0 0.0
        %1967 = vmatpush2.msra.mxu0 0.0
        %1968 = vmatprep.subr.mxu0 0.0
        %1969 = vmatpush2.msra.mxu0 0.0
        %1970 = vmatprep.subr.mxu0 0.0
        %1971 = vmatpush2.msra.mxu0 0.0
        %1972 = vmatprep.subr.mxu0 0.0
        %1973 = vmatpush2.msra.mxu0 0.0
        %1974 = vmatprep.subr.mxu0 0.0
        %1975 = vmatpush2.msra.mxu0 0.0
        %1976 = vmatprep.subr.mxu0 0.0
        %1977 = vmatpush2.msra.mxu0 0.0
        %1978 = vmatprep.subr.mxu0 0.0
        %1979 = vmatpush2.msra.mxu0 0.0
        %1980 = vmatprep.subr.mxu0 0.0
        %1981 = vmatpush2.msra.mxu0 0.0
        %1982 = vmatprep.subr.mxu0 0.0
        %1983 = vmatpush2.msra.mxu0 0.0
        %1984 = vmatprep.subr.mxu0 0.0
        %1985 = vmatpush2.msra.mxu0 0.0
        %1986 = vmatprep.mubr.f32.mxu0 0.0
        %1987 = vmatmul.mubr.f32.gmra.mxu0 %v1920
        %v1988 = vpop.f32.mrf.mxu0
        %v1989 = vadd.f32 0.0, %v1988
        %v1990 = vpop.f32.mrf.mxu0
        %1991 = vdwg.mxu0
        %1992 = vrot.lane.b32.xlu0 %v704, 104
        %v1993 = vpop.permute.xlu0 %1992
        %1994 = vrot.lane.b32.xlu0 %v714, 72
        %v1995 = vpop.permute.xlu0 %1994
        %v1996 = vsel %vm819, %v1993, 0
        %v1998 = vsel %vm819, %v1995, 0
        %2000 = vmatprep.subr.mxu0 0.0
        %2001 = vmatpush1.xpose.msra.mxu0 0.0
        %2002 = vmatprep.subr.mxu0 0.0
        %2003 = vmatpush1.xpose.msra.mxu0 0.0
        %2004 = vmatprep.subr.mxu0 0.0
        %2005 = vmatpush1.xpose.msra.mxu0 0.0
        %2006 = vmatprep.subr.mxu0 0.0
        %2007 = vmatpush1.xpose.msra.mxu0 0.0
        %2008 = vmatprep.subr.mxu0 0.0
        %2009 = vmatpush1.xpose.msra.mxu0 0.0
        %2010 = vmatprep.subr.mxu0 0.0
        %2011 = vmatpush1.xpose.msra.mxu0 0.0
        %2012 = vmatprep.subr.mxu0 0.0
        %2013 = vmatpush1.xpose.msra.mxu0 0.0
        %2014 = vmatprep.subr.mxu0 0.0
        %2015 = vmatpush1.xpose.msra.mxu0 0.0
        %2016 = vmatprep.subr.mxu0 0.0
        %2017 = vmatpush1.xpose.msra.mxu0 0.0
        %2018 = vmatprep.subr.mxu0 0.0
        %2019 = vmatpush1.xpose.msra.mxu0 0.0
        %2020 = vmatprep.subr.mxu0 0.0
        %2021 = vmatpush1.xpose.msra.mxu0 0.0
        %2022 = vmatprep.subr.mxu0 0.0
        %2023 = vmatpush1.xpose.msra.mxu0 0.0
        %2024 = vmatprep.subr.mxu0 0.0
        %2025 = vmatpush1.xpose.msra.mxu0 0.0
        %2026 = vmatprep.subr.mxu0 0.0
        %2027 = vmatpush1.xpose.msra.mxu0 0.0
        %2028 = vmatprep.subr.mxu0 0.0
        %2029 = vmatpush1.xpose.msra.mxu0 0.0
        %2030 = vmatprep.subr.mxu0 0.0
        %2031 = vmatpush1.xpose.msra.mxu0 %v1998
        %2032 = vmatprep.subr.mxu0 0.0
        %2033 = vmatpush2.xpose.msra.mxu0 0.0
        %2034 = vmatprep.subr.mxu0 0.0
        %2035 = vmatpush2.xpose.msra.mxu0 0.0
        %2036 = vmatprep.subr.mxu0 0.0
        %2037 = vmatpush2.xpose.msra.mxu0 0.0
        %2038 = vmatprep.subr.mxu0 0.0
        %2039 = vmatpush2.xpose.msra.mxu0 0.0
        %2040 = vmatprep.subr.mxu0 0.0
        %2041 = vmatpush2.xpose.msra.mxu0 0.0
        %2042 = vmatprep.subr.mxu0 0.0
        %2043 = vmatpush2.xpose.msra.mxu0 0.0
        %2044 = vmatprep.subr.mxu0 0.0
        %2045 = vmatpush2.xpose.msra.mxu0 0.0
        %2046 = vmatprep.subr.mxu0 0.0
        %2047 = vmatpush2.xpose.msra.mxu0 0.0
        %2048 = vmatprep.subr.mxu0 0.0
        %2049 = vmatpush2.xpose.msra.mxu0 0.0
        %2050 = vmatprep.subr.mxu0 0.0
        %2051 = vmatpush2.xpose.msra.mxu0 0.0
        %2052 = vmatprep.subr.mxu0 0.0
        %2053 = vmatpush2.xpose.msra.mxu0 0.0
        %2054 = vmatprep.subr.mxu0 0.0
        %2055 = vmatpush2.xpose.msra.mxu0 0.0
        %2056 = vmatprep.subr.mxu0 0.0
        %2057 = vmatpush2.xpose.msra.mxu0 0.0
        %2058 = vmatprep.subr.mxu0 0.0
        %2059 = vmatpush2.xpose.msra.mxu0 0.0
        %2060 = vmatprep.subr.mxu0 0.0
        %2061 = vmatpush2.xpose.msra.mxu0 0.0
        %2062 = vmatprep.subr.mxu0 0.0
        %2063 = vmatpush2.xpose.msra.mxu0 0.0
        %2064 = vmatprep.mubr.f32.mxu0 0.0
        %2065 = vmatmul.mubr.f32.gmra.mxu0 %v1996
        %v2066 = vpop.f32.mrf.mxu0
        %v2067 = vadd.f32 0.0, %v2066
        %v2068 = vpop.f32.mrf.mxu0
        %2069 = vdwg.mxu0
        %v2070 = vmul.f32 %v2067, 0.35355338
        %v2071 = vsel %vm819, %v2070, -inf
        %2072 = vmax.xlane.f32.xlu0 %v2071
        %v2073 = vpop.xlane.xlu0 %2072
        %v2074 = vsub.f32 %v2070, %v2073
        %v2075 = vmul.f32 %v2074, 1.442695
        %v2076 = vpow.pop %v2075
        %v2077 = vsel %vm819, %v2076, 0.0
        %2078 = vadd.xlane.f32.xlu0 %v2077
        %v2079 = vpop.xlane.xlu0 %2078
        %v2080 = vrcp.pop %v2079
        %v2081 = vmul.f32 %v2076, %v2080
        %2082 = vrot.lane.b32.xlu0 %v813, 104
        %v2083 = vpop.permute.xlu0 %2082
        %v2086 = vsel %vm819, %v2081, 0
        %2088 = vmatprep.subr.mxu0 0.0
        %2089 = vmatpush1.msra.mxu0 0.0
        %2090 = vmatprep.subr.mxu0 0.0
        %2091 = vmatpush1.msra.mxu0 0.0
        %2092 = vmatprep.subr.mxu0 0.0
        %2093 = vmatpush1.msra.mxu0 0.0
        %2094 = vmatprep.subr.mxu0 0.0
        %2095 = vmatpush1.msra.mxu0 0.0
        %2096 = vmatprep.subr.mxu0 0.0
        %2097 = vmatpush1.msra.mxu0 0.0
        %2098 = vmatprep.subr.mxu0 0.0
        %2099 = vmatpush1.msra.mxu0 0.0
        %2100 = vmatprep.subr.mxu0 0.0
        %2101 = vmatpush1.msra.mxu0 0.0
        %2102 = vmatprep.subr.mxu0 0.0
        %2103 = vmatpush1.msra.mxu0 0.0
        %2104 = vmatprep.subr.mxu0 0.0
        %2105 = vmatpush1.msra.mxu0 0.0
        %2106 = vmatprep.subr.mxu0 0.0
        %2107 = vmatpush1.msra.mxu0 0.0
        %2108 = vmatprep.subr.mxu0 0.0
        %2109 = vmatpush1.msra.mxu0 0.0
        %2110 = vmatprep.subr.mxu0 0.0
        %2111 = vmatpush1.msra.mxu0 0.0
        %2112 = vmatprep.subr.mxu0 0.0
        %2113 = vmatpush1.msra.mxu0 0.0
        %2114 = vmatprep.subr.mxu0 0.0
        %2115 = vmatpush1.msra.mxu0 0.0
        %2116 = vmatprep.subr.mxu0 0.0
        %2117 = vmatpush1.msra.mxu0 0.0
        %2118 = vmatprep.subr.mxu0 0.0
        %2119 = vmatpush1.msra.mxu0 %v2083
        %2120 = vmatprep.subr.mxu0 0.0
        %2121 = vmatpush2.msra.mxu0 0.0
        %2122 = vmatprep.subr.mxu0 0.0
        %2123 = vmatpush2.msra.mxu0 0.0
        %2124 = vmatprep.subr.mxu0 0.0
        %2125 = vmatpush2.msra.mxu0 0.0
        %2126 = vmatprep.subr.mxu0 0.0
        %2127 = vmatpush2.msra.mxu0 0.0
        %2128 = vmatprep.subr.mxu0 0.0
        %2129 = vmatpush2.msra.mxu0 0.0
        %2130 = vmatprep.subr.mxu0 0.0
        %2131 = vmatpush2.msra.mxu0 0.0
        %2132 = vmatprep.subr.mxu0 0.0
        %2133 = vmatpush2.msra.mxu0 0.0
        %2134 = vmatprep.subr.mxu0 0.0
        %2135 = vmatpush2.msra.mxu0 0.0
        %2136 = vmatprep.subr.mxu0 0.0
        %2137 = vmatpush2.msra.mxu0 0.0
        %2138 = vmatprep.subr.mxu0 0.0
        %2139 = vmatpush2.msra.mxu0 0.0
        %2140 = vmatprep.subr.mxu0 0.0
        %2141 = vmatpush2.msra.mxu0 0.0
        %2142 = vmatprep.subr.mxu0 0.0
        %2143 = vmatpush2.msra.mxu0 0.0
        %2144 = vmatprep.subr.mxu0 0.0
        %2145 = vmatpush2.msra.mxu0 0.0
        %2146 = vmatprep.subr.mxu0 0.0
        %2147 = vmatpush2.msra.mxu0 0.0
        %2148 = vmatprep.subr.mxu0 0.0
        %2149 = vmatpush2.msra.mxu0 0.0
        %2150 = vmatprep.subr.mxu0 0.0
        %2151 = vmatpush2.msra.mxu0 0.0
        %2152 = vmatprep.mubr.f32.mxu0 0.0
        %2153 = vmatmul.mubr.f32.gmra.mxu0 %v2086
        %v2154 = vpop.f32.mrf.mxu0
        %v2155 = vadd.f32 0.0, %v2154
        %v2156 = vpop.f32.mrf.mxu0
        %2157 = vdwg.mxu0
        %2159 = vrot.lane.b32.xlu0 %v1823, 8
        %v2160 = vpop.permute.xlu0 %2159
        %2163 = vrot.lane.b32.xlu0 %v1989, 16
        %v2164 = vpop.permute.xlu0 %2163
        %2167 = vrot.lane.b32.xlu0 %v2155, 24
        %v2168 = vpop.permute.xlu0 %2167
        %v2170 = vsel %vm819, %v1656, %v2160
        %v2171 = vsel %vm1492, %v2170, %v2164
        %v2172 = vsel %vm1494, %v2171, %v2168
        %v2173 = vlaneseq
        %v2174 = vshrl.u32 %v2173, 7
        %v2175 = vsub.s32 3, %v2174
        %v2176 = vrot.slane %v611, %v2175
        %v2178 = vsel %vm617, %v1495, 0
        %v2181 = vsel %vm617, %v2172, 0
        %2183 = vmatprep.subr.mxu0 0.0
        %2184 = vmatpush1.msra.mxu0 0.0
        %2185 = vmatprep.subr.mxu0 0.0
        %2186 = vmatpush1.msra.mxu0 0.0
        %2187 = vmatprep.subr.mxu0 0.0
        %2188 = vmatpush1.msra.mxu0 0.0
        %2189 = vmatprep.subr.mxu0 0.0
        %2190 = vmatpush1.msra.mxu0 0.0
        %2191 = vmatprep.subr.mxu0 0.0
        %2192 = vmatpush1.msra.mxu0 0.0
        %2193 = vmatprep.subr.mxu0 0.0
        %2194 = vmatpush1.msra.mxu0 0.0
        %2195 = vmatprep.subr.mxu0 0.0
        %2196 = vmatpush1.msra.mxu0 0.0
        %2197 = vmatprep.subr.mxu0 0.0
        %2198 = vmatpush1.msra.mxu0 0.0
        %2199 = vmatprep.subr.mxu0 0.0
        %2200 = vmatpush1.msra.mxu0 0.0
        %2201 = vmatprep.subr.mxu0 0.0
        %2202 = vmatpush1.msra.mxu0 0.0
        %2203 = vmatprep.subr.mxu0 0.0
        %2204 = vmatpush1.msra.mxu0 0.0
        %2205 = vmatprep.subr.mxu0 0.0
        %2206 = vmatpush1.msra.mxu0 0.0
        %2207 = vmatprep.subr.mxu0 0.0
        %2208 = vmatpush1.msra.mxu0 %v593
        %2209 = vmatprep.subr.mxu0 0.0
        %2210 = vmatpush1.msra.mxu0 %v592
        %2211 = vmatprep.subr.mxu0 0.0
        %2212 = vmatpush1.msra.mxu0 %v591
        %2213 = vmatprep.subr.mxu0 0.0
        %2214 = vmatpush1.msra.mxu0 %v590
        %2215 = vmatprep.subr.mxu0 0.0
        %2216 = vmatpush2.msra.mxu0 0.0
        %2217 = vmatprep.subr.mxu0 0.0
        %2218 = vmatpush2.msra.mxu0 0.0
        %2219 = vmatprep.subr.mxu0 0.0
        %2220 = vmatpush2.msra.mxu0 0.0
        %2221 = vmatprep.subr.mxu0 0.0
        %2222 = vmatpush2.msra.mxu0 0.0
        %2223 = vmatprep.subr.mxu0 0.0
        %2224 = vmatpush2.msra.mxu0 0.0
        %2225 = vmatprep.subr.mxu0 0.0
        %2226 = vmatpush2.msra.mxu0 0.0
        %2227 = vmatprep.subr.mxu0 0.0
        %2228 = vmatpush2.msra.mxu0 0.0
        %2229 = vmatprep.subr.mxu0 0.0
        %2230 = vmatpush2.msra.mxu0 0.0
        %2231 = vmatprep.subr.mxu0 0.0
        %2232 = vmatpush2.msra.mxu0 0.0
        %2233 = vmatprep.subr.mxu0 0.0
        %2234 = vmatpush2.msra.mxu0 0.0
        %2235 = vmatprep.subr.mxu0 0.0
        %2236 = vmatpush2.msra.mxu0 0.0
        %2237 = vmatprep.subr.mxu0 0.0
        %2238 = vmatpush2.msra.mxu0 0.0
        %2239 = vmatprep.subr.mxu0 0.0
        %2240 = vmatpush2.msra.mxu0 0.0
        %2241 = vmatprep.subr.mxu0 0.0
        %2242 = vmatpush2.msra.mxu0 0.0
        %2243 = vmatprep.subr.mxu0 0.0
        %2244 = vmatpush2.msra.mxu0 0.0
        %2245 = vmatprep.subr.mxu0 0.0
        %2246 = vmatpush2.msra.mxu0 0.0
        %2247 = vmatprep.mubr.f32.mxu0 0.0
        %2248 = vmatmul.mubr.f32.gmra.mxu0 %v2178
        %v2249 = vpop.f32.mrf.mxu0
        %v2250 = vadd.f32 %v2176, %v2249
        %v2251 = vpop.f32.mrf.mxu0
        %2252 = vmatprep.mubr.f32.mxu0 0.0
        %2253 = vmatmul.mubr.f32.gmra.mxu0 %v2181
        %v2254 = vpop.f32.mrf.mxu0
        %v2255 = vadd.f32 %v2176, %v2254
        %v2256 = vpop.f32.mrf.mxu0
        %2257 = vdwg.mxu0
        %v2258 = vadd.f32 %v569, %v2250
        %v2259 = vadd.f32 %v570, %v2255
        %v2260 = vsel %vm617, %v2258, 0.0
        %2261 = vadd.xlane.f32.xlu0 %v2260
        %v2262 = vpop.xlane.xlu0 %2261
        %v2263 = vsel %vm617, %v2259, 0.0
        %2264 = vadd.xlane.f32.xlu0 %v2263
        %v2265 = vpop.xlane.xlu0 %2264
        %v2266 = vrcp.pop 32.0
        %v2267 = vmul.f32 %v2262, %v2266
        %v2268 = vmul.f32 %v2265, %v2266
        %v2269 = vsub.f32 %v2258, %v2267
        %v2270 = vsub.f32 %v2259, %v2268
        %v2271 = vmul.f32 %v2269, %v2269
        %v2272 = vmul.f32 %v2270, %v2270
        %v2273 = vsel %vm617, %v2271, 0.0
        %2274 = vadd.xlane.f32.xlu0 %v2273
        %v2275 = vpop.xlane.xlu0 %2274
        %v2276 = vsel %vm617, %v2272, 0.0
        %2277 = vadd.xlane.f32.xlu0 %v2276
        %v2278 = vpop.xlane.xlu0 %2277
        %v2279 = vmul.f32 %v2275, %v2266
        %v2280 = vmul.f32 %v2278, %v2266
        %v2281 = vadd.f32 %v2279, 1e-05
        %v2282 = vadd.f32 %v2280, 1e-05
        %v2283 = vrsqrt.pop %v2281
        %v2284 = vrsqrt.pop %v2282
        %v2285 = vmul.f32 %v2269, %v2283
        %v2286 = vmul.f32 %v2270, %v2284
        %v2287 = vlaneseq
        %v2288 = vshrl.u32 %v2287, 7
        %v2289 = vsub.s32 1, %v2288
        %v2290 = vrot.slane %v612, %v2289
        %v2291 = vmul.f32 %v2285, %v2290
        %v2292 = vmul.f32 %v2286, %v2290
        %v2293 = vlaneseq
        %v2294 = vshrl.u32 %v2293, 7
        %v2295 = vsub.s32 2, %v2294
        %v2296 = vrot.slane %v612, %v2295
        %v2297 = vadd.f32 %v2291, %v2296
        %v2298 = vadd.f32 %v2292, %v2296
        %v2299 = vadd.f32 %v571, %v577
        %v2300 = vadd.f32 %v572, %v578
        %v2301 = vadd.f32 %v573, %v579
        %v2302 = vadd.f32 %v574, %v580
        %v2303 = vadd.f32 %v2297, %v575
        %v2304 = vadd.f32 %v2298, %v576
        %v2305 = vlaneseq
        %v2306 = vshrl.u32 %v2305, 7
        %v2307 = vsub.s32 4, %v2306
        %v2308 = vrot.slane %v611, %v2307
        %v2310 = vsel %vm617, %v2303, 0
        %v2313 = vsel %vm617, %v2304, 0
        %2315 = vmatprep.subr.mxu0 0.0
        %2316 = vmatpush1.msra.mxu0 0.0
        %2317 = vmatprep.subr.mxu0 0.0
        %2318 = vmatpush1.msra.mxu0 0.0
        %2319 = vmatprep.subr.mxu0 0.0
        %2320 = vmatpush1.msra.mxu0 0.0
        %2321 = vmatprep.subr.mxu0 0.0
        %2322 = vmatpush1.msra.mxu0 0.0
        %2323 = vmatprep.subr.mxu0 0.0
        %2324 = vmatpush1.msra.mxu0 0.0
        %2325 = vmatprep.subr.mxu0 0.0
        %2326 = vmatpush1.msra.mxu0 0.0
        %2327 = vmatprep.subr.mxu0 0.0
        %2328 = vmatpush1.msra.mxu0 0.0
        %2329 = vmatprep.subr.mxu0 0.0
        %2330 = vmatpush1.msra.mxu0 0.0
        %2331 = vmatprep.subr.mxu0 0.0
        %2332 = vmatpush1.msra.mxu0 0.0
        %2333 = vmatprep.subr.mxu0 0.0
        %2334 = vmatpush1.msra.mxu0 0.0
        %2335 = vmatprep.subr.mxu0 0.0
        %2336 = vmatpush1.msra.mxu0 0.0
        %2337 = vmatprep.subr.mxu0 0.0
        %2338 = vmatpush1.msra.mxu0 0.0
        %2339 = vmatprep.subr.mxu0 0.0
        %2340 = vmatpush1.msra.mxu0 %v589
        %2341 = vmatprep.subr.mxu0 0.0
        %2342 = vmatpush1.msra.mxu0 %v588
        %2343 = vmatprep.subr.mxu0 0.0
        %2344 = vmatpush1.msra.mxu0 %v587
        %2345 = vmatprep.subr.mxu0 0.0
        %2346 = vmatpush1.msra.mxu0 %v586
        %2347 = vmatprep.subr.mxu0 0.0
        %2348 = vmatpush2.msra.mxu0 0.0
        %2349 = vmatprep.subr.mxu0 0.0
        %2350 = vmatpush2.msra.mxu0 0.0
        %2351 = vmatprep.subr.mxu0 0.0
        %2352 = vmatpush2.msra.mxu0 0.0
        %2353 = vmatprep.subr.mxu0 0.0
        %2354 = vmatpush2.msra.mxu0 0.0
        %2355 = vmatprep.subr.mxu0 0.0
        %2356 = vmatpush2.msra.mxu0 0.0
        %2357 = vmatprep.subr.mxu0 0.0
        %2358 = vmatpush2.msra.mxu0 0.0
        %2359 = vmatprep.subr.mxu0 0.0
        %2360 = vmatpush2.msra.mxu0 0.0
        %2361 = vmatprep.subr.mxu0 0.0
        %2362 = vmatpush2.msra.mxu0 0.0
        %2363 = vmatprep.subr.mxu0 0.0
        %2364 = vmatpush2.msra.mxu0 0.0
        %2365 = vmatprep.subr.mxu0 0.0
        %2366 = vmatpush2.msra.mxu0 0.0
        %2367 = vmatprep.subr.mxu0 0.0
        %2368 = vmatpush2.msra.mxu0 0.0
        %2369 = vmatprep.subr.mxu0 0.0
        %2370 = vmatpush2.msra.mxu0 0.0
        %2371 = vmatprep.subr.mxu0 0.0
        %2372 = vmatpush2.msra.mxu0 0.0
        %2373 = vmatprep.subr.mxu0 0.0
        %2374 = vmatpush2.msra.mxu0 0.0
        %2375 = vmatprep.subr.mxu0 0.0
        %2376 = vmatpush2.msra.mxu0 0.0
        %2377 = vmatprep.subr.mxu0 0.0
        %2378 = vmatpush2.msra.mxu0 0.0
        %2379 = vmatprep.mubr.f32.mxu0 0.0
        %2380 = vmatmul.mubr.f32.gmra.mxu0 %v2310
        %v2381 = vpop.f32.mrf.mxu0
        %v2382 = vadd.f32 %v2308, %v2381
        %v2383 = vpop.f32.mrf.mxu0
        %2384 = vmatprep.mubr.f32.mxu0 0.0
        %2385 = vmatmul.mubr.f32.gmra.mxu0 %v2313
        %v2386 = vpop.f32.mrf.mxu0
        %v2387 = vadd.f32 %v2308, %v2386
        %v2388 = vpop.f32.mrf.mxu0
        %2389 = vdwg.mxu0
        %v2390 = vlaneseq
        %v2391 = vshrl.u32 %v2390, 7
        %v2392 = vsub.s32 5, %v2391
        %v2393 = vrot.slane %v611, %v2392
        %2398 = vrot.lane.b32.xlu0 %v586, 96
        %v2399 = vpop.permute.xlu0 %2398
        %2400 = vrot.lane.b32.xlu0 %v587, 96
        %v2401 = vpop.permute.xlu0 %2400
        %2402 = vrot.lane.b32.xlu0 %v588, 96
        %v2403 = vpop.permute.xlu0 %2402
        %2404 = vrot.lane.b32.xlu0 %v589, 96
        %v2405 = vpop.permute.xlu0 %2404
        %v2411 = vsel %vm617, %v2299, 0
        %v2414 = vsel %vm617, %v2300, 0
        %v2417 = vsel %vm617, %v2301, 0
        %v2420 = vsel %vm617, %v2302, 0
        %2422 = vmatprep.subr.mxu0 0.0
        %2423 = vmatpush1.msra.mxu0 0.0
        %2424 = vmatprep.subr.mxu0 0.0
        %2425 = vmatpush1.msra.mxu0 0.0
        %2426 = vmatprep.subr.mxu0 0.0
        %2427 = vmatpush1.msra.mxu0 0.0
        %2428 = vmatprep.subr.mxu0 0.0
        %2429 = vmatpush1.msra.mxu0 0.0
        %2430 = vmatprep.subr.mxu0 0.0
        %2431 = vmatpush1.msra.mxu0 0.0
        %2432 = vmatprep.subr.mxu0 0.0
        %2433 = vmatpush1.msra.mxu0 0.0
        %2434 = vmatprep.subr.mxu0 0.0
        %2435 = vmatpush1.msra.mxu0 0.0
        %2436 = vmatprep.subr.mxu0 0.0
        %2437 = vmatpush1.msra.mxu0 0.0
        %2438 = vmatprep.subr.mxu0 0.0
        %2439 = vmatpush1.msra.mxu0 0.0
        %2440 = vmatprep.subr.mxu0 0.0
        %2441 = vmatpush1.msra.mxu0 0.0
        %2442 = vmatprep.subr.mxu0 0.0
        %2443 = vmatpush1.msra.mxu0 0.0
        %2444 = vmatprep.subr.mxu0 0.0
        %2445 = vmatpush1.msra.mxu0 0.0
        %2446 = vmatprep.subr.mxu0 0.0
        %2447 = vmatpush1.msra.mxu0 %v2405
        %2448 = vmatprep.subr.mxu0 0.0
        %2449 = vmatpush1.msra.mxu0 %v2403
        %2450 = vmatprep.subr.mxu0 0.0
        %2451 = vmatpush1.msra.mxu0 %v2401
        %2452 = vmatprep.subr.mxu0 0.0
        %2453 = vmatpush1.msra.mxu0 %v2399
        %2454 = vmatprep.subr.mxu0 0.0
        %2455 = vmatpush2.msra.mxu0 0.0
        %2456 = vmatprep.subr.mxu0 0.0
        %2457 = vmatpush2.msra.mxu0 0.0
        %2458 = vmatprep.subr.mxu0 0.0
        %2459 = vmatpush2.msra.mxu0 0.0
        %2460 = vmatprep.subr.mxu0 0.0
        %2461 = vmatpush2.msra.mxu0 0.0
        %2462 = vmatprep.subr.mxu0 0.0
        %2463 = vmatpush2.msra.mxu0 0.0
        %2464 = vmatprep.subr.mxu0 0.0
        %2465 = vmatpush2.msra.mxu0 0.0
        %2466 = vmatprep.subr.mxu0 0.0
        %2467 = vmatpush2.msra.mxu0 0.0
        %2468 = vmatprep.subr.mxu0 0.0
        %2469 = vmatpush2.msra.mxu0 0.0
        %2470 = vmatprep.subr.mxu0 0.0
        %2471 = vmatpush2.msra.mxu0 0.0
        %2472 = vmatprep.subr.mxu0 0.0
        %2473 = vmatpush2.msra.mxu0 0.0
        %2474 = vmatprep.subr.mxu0 0.0
        %2475 = vmatpush2.msra.mxu0 0.0
        %2476 = vmatprep.subr.mxu0 0.0
        %2477 = vmatpush2.msra.mxu0 0.0
        %2478 = vmatprep.subr.mxu0 0.0
        %2479 = vmatpush2.msra.mxu0 0.0
        %2480 = vmatprep.subr.mxu0 0.0
        %2481 = vmatpush2.msra.mxu0 0.0
        %2482 = vmatprep.subr.mxu0 0.0
        %2483 = vmatpush2.msra.mxu0 0.0
        %2484 = vmatprep.subr.mxu0 0.0
        %2485 = vmatpush2.msra.mxu0 0.0
        %2486 = vmatprep.mubr.f32.mxu0 0.0
        %2487 = vmatmul.mubr.f32.gmra.mxu0 %v2411
        %v2488 = vpop.f32.mrf.mxu0
        %v2489 = vadd.f32 %v2393, %v2488
        %v2490 = vpop.f32.mrf.mxu0
        %2491 = vmatprep.mubr.f32.mxu0 0.0
        %2492 = vmatmul.mubr.f32.gmra.mxu0 %v2414
        %v2493 = vpop.f32.mrf.mxu0
        %v2494 = vadd.f32 %v2393, %v2493
        %v2495 = vpop.f32.mrf.mxu0
        %2496 = vmatprep.mubr.f32.mxu0 0.0
        %2497 = vmatmul.mubr.f32.gmra.mxu0 %v2417
        %v2498 = vpop.f32.mrf.mxu0
        %v2499 = vadd.f32 %v2393, %v2498
        %v2500 = vpop.f32.mrf.mxu0
        %2501 = vmatprep.mubr.f32.mxu0 0.0
        %2502 = vmatmul.mubr.f32.gmra.mxu0 %v2420
        %v2503 = vpop.f32.mrf.mxu0
        %v2504 = vadd.f32 %v2393, %v2503
        %v2505 = vpop.f32.mrf.mxu0
        %2506 = vdwg.mxu0
        %v2507 = vlaneseq
        %v2508 = vshrl.u32 %v2507, 7
        %v2509 = vsub.s32 6, %v2508
        %v2510 = vrot.slane %v611, %v2509
        %2511 = vrot.lane.b32.xlu0 %v586, 64
        %v2512 = vpop.permute.xlu0 %2511
        %2513 = vrot.lane.b32.xlu0 %v587, 64
        %v2514 = vpop.permute.xlu0 %2513
        %2515 = vrot.lane.b32.xlu0 %v588, 64
        %v2516 = vpop.permute.xlu0 %2515
        %2517 = vrot.lane.b32.xlu0 %v589, 64
        %v2518 = vpop.permute.xlu0 %2517
        %v2524 = vsel %vm617, %v571, 0
        %v2527 = vsel %vm617, %v572, 0
        %v2530 = vsel %vm617, %v573, 0
        %v2533 = vsel %vm617, %v574, 0
        %2535 = vmatprep.subr.mxu0 0.0
        %2536 = vmatpush1.msra.mxu0 0.0
        %2537 = vmatprep.subr.mxu0 0.0
        %2538 = vmatpush1.msra.mxu0 0.0
        %2539 = vmatprep.subr.mxu0 0.0
        %2540 = vmatpush1.msra.mxu0 0.0
        %2541 = vmatprep.subr.mxu0 0.0
        %2542 = vmatpush1.msra.mxu0 0.0
        %2543 = vmatprep.subr.mxu0 0.0
        %2544 = vmatpush1.msra.mxu0 0.0
        %2545 = vmatprep.subr.mxu0 0.0
        %2546 = vmatpush1.msra.mxu0 0.0
        %2547 = vmatprep.subr.mxu0 0.0
        %2548 = vmatpush1.msra.mxu0 0.0
        %2549 = vmatprep.subr.mxu0 0.0
        %2550 = vmatpush1.msra.mxu0 0.0
        %2551 = vmatprep.subr.mxu0 0.0
        %2552 = vmatpush1.msra.mxu0 0.0
        %2553 = vmatprep.subr.mxu0 0.0
        %2554 = vmatpush1.msra.mxu0 0.0
        %2555 = vmatprep.subr.mxu0 0.0
        %2556 = vmatpush1.msra.mxu0 0.0
        %2557 = vmatprep.subr.mxu0 0.0
        %2558 = vmatpush1.msra.mxu0 0.0
        %2559 = vmatprep.subr.mxu0 0.0
        %2560 = vmatpush1.msra.mxu0 %v2518
        %2561 = vmatprep.subr.mxu0 0.0
        %2562 = vmatpush1.msra.mxu0 %v2516
        %2563 = vmatprep.subr.mxu0 0.0
        %2564 = vmatpush1.msra.mxu0 %v2514
        %2565 = vmatprep.subr.mxu0 0.0
        %2566 = vmatpush1.msra.mxu0 %v2512
        %2567 = vmatprep.subr.mxu0 0.0
        %2568 = vmatpush2.msra.mxu0 0.0
        %2569 = vmatprep.subr.mxu0 0.0
        %2570 = vmatpush2.msra.mxu0 0.0
        %2571 = vmatprep.subr.mxu0 0.0
        %2572 = vmatpush2.msra.mxu0 0.0
        %2573 = vmatprep.subr.mxu0 0.0
        %2574 = vmatpush2.msra.mxu0 0.0
        %2575 = vmatprep.subr.mxu0 0.0
        %2576 = vmatpush2.msra.mxu0 0.0
        %2577 = vmatprep.subr.mxu0 0.0
        %2578 = vmatpush2.msra.mxu0 0.0
        %2579 = vmatprep.subr.mxu0 0.0
        %2580 = vmatpush2.msra.mxu0 0.0
        %2581 = vmatprep.subr.mxu0 0.0
        %2582 = vmatpush2.msra.mxu0 0.0
        %2583 = vmatprep.subr.mxu0 0.0
        %2584 = vmatpush2.msra.mxu0 0.0
        %2585 = vmatprep.subr.mxu0 0.0
        %2586 = vmatpush2.msra.mxu0 0.0
        %2587 = vmatprep.subr.mxu0 0.0
        %2588 = vmatpush2.msra.mxu0 0.0
        %2589 = vmatprep.subr.mxu0 0.0
        %2590 = vmatpush2.msra.mxu0 0.0
        %2591 = vmatprep.subr.mxu0 0.0
        %2592 = vmatpush2.msra.mxu0 0.0
        %2593 = vmatprep.subr.mxu0 0.0
        %2594 = vmatpush2.msra.mxu0 0.0
        %2595 = vmatprep.subr.mxu0 0.0
        %2596 = vmatpush2.msra.mxu0 0.0
        %2597 = vmatprep.subr.mxu0 0.0
        %2598 = vmatpush2.msra.mxu0 0.0
        %2599 = vmatprep.mubr.f32.mxu0 0.0
        %2600 = vmatmul.mubr.f32.gmra.mxu0 %v2524
        %v2601 = vpop.f32.mrf.mxu0
        %v2602 = vadd.f32 %v2510, %v2601
        %v2603 = vpop.f32.mrf.mxu0
        %2604 = vmatprep.mubr.f32.mxu0 0.0
        %2605 = vmatmul.mubr.f32.gmra.mxu0 %v2527
        %v2606 = vpop.f32.mrf.mxu0
        %v2607 = vadd.f32 %v2510, %v2606
        %v2608 = vpop.f32.mrf.mxu0
        %2609 = vmatprep.mubr.f32.mxu0 0.0
        %2610 = vmatmul.mubr.f32.gmra.mxu0 %v2530
        %v2611 = vpop.f32.mrf.mxu0
        %v2612 = vadd.f32 %v2510, %v2611
        %v2613 = vpop.f32.mrf.mxu0
        %2614 = vmatprep.mubr.f32.mxu0 0.0
        %2615 = vmatmul.mubr.f32.gmra.mxu0 %v2533
        %v2616 = vpop.f32.mrf.mxu0
        %v2617 = vadd.f32 %v2510, %v2616
        %v2618 = vpop.f32.mrf.mxu0
        %2619 = vdwg.mxu0
        %v2621 = vsel %vm819, %v2382, 0
        %v2624 = vsel %vm819, %v2489, 0
        %v2627 = vsel %vm819, %v2494, 0
        %2629 = vmatprep.subr.mxu0 0.0
        %2630 = vmatpush1.xpose.msra.mxu0 0.0
        %2631 = vmatprep.subr.mxu0 0.0
        %2632 = vmatpush1.xpose.msra.mxu0 0.0
        %2633 = vmatprep.subr.mxu0 0.0
        %2634 = vmatpush1.xpose.msra.mxu0 0.0
        %2635 = vmatprep.subr.mxu0 0.0
        %2636 = vmatpush1.xpose.msra.mxu0 0.0
        %2637 = vmatprep.subr.mxu0 0.0
        %2638 = vmatpush1.xpose.msra.mxu0 0.0
        %2639 = vmatprep.subr.mxu0 0.0
        %2640 = vmatpush1.xpose.msra.mxu0 0.0
        %2641 = vmatprep.subr.mxu0 0.0
        %2642 = vmatpush1.xpose.msra.mxu0 0.0
        %2643 = vmatprep.subr.mxu0 0.0
        %2644 = vmatpush1.xpose.msra.mxu0 0.0
        %2645 = vmatprep.subr.mxu0 0.0
        %2646 = vmatpush1.xpose.msra.mxu0 0.0
        %2647 = vmatprep.subr.mxu0 0.0
        %2648 = vmatpush1.xpose.msra.mxu0 0.0
        %2649 = vmatprep.subr.mxu0 0.0
        %2650 = vmatpush1.xpose.msra.mxu0 0.0
        %2651 = vmatprep.subr.mxu0 0.0
        %2652 = vmatpush1.xpose.msra.mxu0 0.0
        %2653 = vmatprep.subr.mxu0 0.0
        %2654 = vmatpush1.xpose.msra.mxu0 0.0
        %2655 = vmatprep.subr.mxu0 0.0
        %2656 = vmatpush1.xpose.msra.mxu0 0.0
        %2657 = vmatprep.subr.mxu0 0.0
        %2658 = vmatpush1.xpose.msra.mxu0 %v2627
        %2659 = vmatprep.subr.mxu0 0.0
        %2660 = vmatpush1.xpose.msra.mxu0 %v2624
        %2661 = vmatprep.subr.mxu0 0.0
        %2662 = vmatpush2.xpose.msra.mxu0 0.0
        %2663 = vmatprep.subr.mxu0 0.0
        %2664 = vmatpush2.xpose.msra.mxu0 0.0
        %2665 = vmatprep.subr.mxu0 0.0
        %2666 = vmatpush2.xpose.msra.mxu0 0.0
        %2667 = vmatprep.subr.mxu0 0.0
        %2668 = vmatpush2.xpose.msra.mxu0 0.0
        %2669 = vmatprep.subr.mxu0 0.0
        %2670 = vmatpush2.xpose.msra.mxu0 0.0
        %2671 = vmatprep.subr.mxu0 0.0
        %2672 = vmatpush2.xpose.msra.mxu0 0.0
        %2673 = vmatprep.subr.mxu0 0.0
        %2674 = vmatpush2.xpose.msra.mxu0 0.0
        %2675 = vmatprep.subr.mxu0 0.0
        %2676 = vmatpush2.xpose.msra.mxu0 0.0
        %2677 = vmatprep.subr.mxu0 0.0
        %2678 = vmatpush2.xpose.msra.mxu0 0.0
        %2679 = vmatprep.subr.mxu0 0.0
        %2680 = vmatpush2.xpose.msra.mxu0 0.0
        %2681 = vmatprep.subr.mxu0 0.0
        %2682 = vmatpush2.xpose.msra.mxu0 0.0
        %2683 = vmatprep.subr.mxu0 0.0
        %2684 = vmatpush2.xpose.msra.mxu0 0.0
        %2685 = vmatprep.subr.mxu0 0.0
        %2686 = vmatpush2.xpose.msra.mxu0 0.0
        %2687 = vmatprep.subr.mxu0 0.0
        %2688 = vmatpush2.xpose.msra.mxu0 0.0
        %2689 = vmatprep.subr.mxu0 0.0
        %2690 = vmatpush2.xpose.msra.mxu0 0.0
        %2691 = vmatprep.subr.mxu0 0.0
        %2692 = vmatpush2.xpose.msra.mxu0 0.0
        %2693 = vmatprep.mubr.f32.mxu0 0.0
        %2694 = vmatmul.mubr.f32.gmra.mxu0 %v2621
        %v2695 = vpop.f32.mrf.mxu0
        %v2696 = vadd.f32 0.0, %v2695
        %v2697 = vpop.f32.mrf.mxu0
        %2698 = vdwg.mxu0
        %v2699 = vmul.f32 %v2696, 0.35355338
        %v2700 = vsel %vm1492, %v2699, -inf
        %2701 = vmax.xlane.f32.xlu0 %v2700
        %v2702 = vpop.xlane.xlu0 %2701
        %v2703 = vsub.f32 %v2699, %v2702
        %v2704 = vmul.f32 %v2703, 1.442695
        %v2705 = vpow.pop %v2704
        %v2706 = vsel %vm1492, %v2705, 0.0
        %2707 = vadd.xlane.f32.xlu0 %v2706
        %v2708 = vpop.xlane.xlu0 %2707
        %v2709 = vrcp.pop %v2708
        %v2710 = vmul.f32 %v2705, %v2709
        %v2712 = vsel %vm1492, %v2710, 0
        %2714 = vmatprep.subr.mxu0 0.0
        %2715 = vmatpush1.msra.mxu0 0.0
        %2716 = vmatprep.subr.mxu0 0.0
        %2717 = vmatpush1.msra.mxu0 0.0
        %2718 = vmatprep.subr.mxu0 0.0
        %2719 = vmatpush1.msra.mxu0 0.0
        %2720 = vmatprep.subr.mxu0 0.0
        %2721 = vmatpush1.msra.mxu0 0.0
        %2722 = vmatprep.subr.mxu0 0.0
        %2723 = vmatpush1.msra.mxu0 0.0
        %2724 = vmatprep.subr.mxu0 0.0
        %2725 = vmatpush1.msra.mxu0 0.0
        %2726 = vmatprep.subr.mxu0 0.0
        %2727 = vmatpush1.msra.mxu0 0.0
        %2728 = vmatprep.subr.mxu0 0.0
        %2729 = vmatpush1.msra.mxu0 0.0
        %2730 = vmatprep.subr.mxu0 0.0
        %2731 = vmatpush1.msra.mxu0 0.0
        %2732 = vmatprep.subr.mxu0 0.0
        %2733 = vmatpush1.msra.mxu0 0.0
        %2734 = vmatprep.subr.mxu0 0.0
        %2735 = vmatpush1.msra.mxu0 0.0
        %2736 = vmatprep.subr.mxu0 0.0
        %2737 = vmatpush1.msra.mxu0 0.0
        %2738 = vmatprep.subr.mxu0 0.0
        %2739 = vmatpush1.msra.mxu0 0.0
        %2740 = vmatprep.subr.mxu0 0.0
        %2741 = vmatpush1.msra.mxu0 0.0
        %2742 = vmatprep.subr.mxu0 0.0
        %2743 = vmatpush1.msra.mxu0 %v2607
        %2744 = vmatprep.subr.mxu0 0.0
        %2745 = vmatpush1.msra.mxu0 %v2602
        %2746 = vmatprep.subr.mxu0 0.0
        %2747 = vmatpush2.msra.mxu0 0.0
        %2748 = vmatprep.subr.mxu0 0.0
        %2749 = vmatpush2.msra.mxu0 0.0
        %2750 = vmatprep.subr.mxu0 0.0
        %2751 = vmatpush2.msra.mxu0 0.0
        %2752 = vmatprep.subr.mxu0 0.0
        %2753 = vmatpush2.msra.mxu0 0.0
        %2754 = vmatprep.subr.mxu0 0.0
        %2755 = vmatpush2.msra.mxu0 0.0
        %2756 = vmatprep.subr.mxu0 0.0
        %2757 = vmatpush2.msra.mxu0 0.0
        %2758 = vmatprep.subr.mxu0 0.0
        %2759 = vmatpush2.msra.mxu0 0.0
        %2760 = vmatprep.subr.mxu0 0.0
        %2761 = vmatpush2.msra.mxu0 0.0
        %2762 = vmatprep.subr.mxu0 0.0
        %2763 = vmatpush2.msra.mxu0 0.0
        %2764 = vmatprep.subr.mxu0 0.0
        %2765 = vmatpush2.msra.mxu0 0.0
        %2766 = vmatprep.subr.mxu0 0.0
        %2767 = vmatpush2.msra.mxu0 0.0
        %2768 = vmatprep.subr.mxu0 0.0
        %2769 = vmatpush2.msra.mxu0 0.0
        %2770 = vmatprep.subr.mxu0 0.0
        %2771 = vmatpush2.msra.mxu0 0.0
        %2772 = vmatprep.subr.mxu0 0.0
        %2773 = vmatpush2.msra.mxu0 0.0
        %2774 = vmatprep.subr.mxu0 0.0
        %2775 = vmatpush2.msra.mxu0 0.0
        %2776 = vmatprep.subr.mxu0 0.0
        %2777 = vmatpush2.msra.mxu0 0.0
        %2778 = vmatprep.mubr.f32.mxu0 0.0
        %2779 = vmatmul.mubr.f32.gmra.mxu0 %v2712
        %v2780 = vpop.f32.mrf.mxu0
        %v2781 = vadd.f32 0.0, %v2780
        %v2782 = vpop.f32.mrf.mxu0
        %2783 = vdwg.mxu0
        %2784 = vrot.lane.b32.xlu0 %v2382, 120
        %v2785 = vpop.permute.xlu0 %2784
        %2786 = vrot.lane.b32.xlu0 %v2489, 120
        %v2787 = vpop.permute.xlu0 %2786
        %2788 = vrot.lane.b32.xlu0 %v2494, 120
        %v2789 = vpop.permute.xlu0 %2788
        %v2790 = vsel %vm819, %v2785, 0
        %v2792 = vsel %vm819, %v2787, 0
        %v2794 = vsel %vm819, %v2789, 0
        %2796 = vmatprep.subr.mxu0 0.0
        %2797 = vmatpush1.xpose.msra.mxu0 0.0
        %2798 = vmatprep.subr.mxu0 0.0
        %2799 = vmatpush1.xpose.msra.mxu0 0.0
        %2800 = vmatprep.subr.mxu0 0.0
        %2801 = vmatpush1.xpose.msra.mxu0 0.0
        %2802 = vmatprep.subr.mxu0 0.0
        %2803 = vmatpush1.xpose.msra.mxu0 0.0
        %2804 = vmatprep.subr.mxu0 0.0
        %2805 = vmatpush1.xpose.msra.mxu0 0.0
        %2806 = vmatprep.subr.mxu0 0.0
        %2807 = vmatpush1.xpose.msra.mxu0 0.0
        %2808 = vmatprep.subr.mxu0 0.0
        %2809 = vmatpush1.xpose.msra.mxu0 0.0
        %2810 = vmatprep.subr.mxu0 0.0
        %2811 = vmatpush1.xpose.msra.mxu0 0.0
        %2812 = vmatprep.subr.mxu0 0.0
        %2813 = vmatpush1.xpose.msra.mxu0 0.0
        %2814 = vmatprep.subr.mxu0 0.0
        %2815 = vmatpush1.xpose.msra.mxu0 0.0
        %2816 = vmatprep.subr.mxu0 0.0
        %2817 = vmatpush1.xpose.msra.mxu0 0.0
        %2818 = vmatprep.subr.mxu0 0.0
        %2819 = vmatpush1.xpose.msra.mxu0 0.0
        %2820 = vmatprep.subr.mxu0 0.0
        %2821 = vmatpush1.xpose.msra.mxu0 0.0
        %2822 = vmatprep.subr.mxu0 0.0
        %2823 = vmatpush1.xpose.msra.mxu0 0.0
        %2824 = vmatprep.subr.mxu0 0.0
        %2825 = vmatpush1.xpose.msra.mxu0 %v2794
        %2826 = vmatprep.subr.mxu0 0.0
        %2827 = vmatpush1.xpose.msra.mxu0 %v2792
        %2828 = vmatprep.subr.mxu0 0.0
        %2829 = vmatpush2.xpose.msra.mxu0 0.0
        %2830 = vmatprep.subr.mxu0 0.0
        %2831 = vmatpush2.xpose.msra.mxu0 0.0
        %2832 = vmatprep.subr.mxu0 0.0
        %2833 = vmatpush2.xpose.msra.mxu0 0.0
        %2834 = vmatprep.subr.mxu0 0.0
        %2835 = vmatpush2.xpose.msra.mxu0 0.0
        %2836 = vmatprep.subr.mxu0 0.0
        %2837 = vmatpush2.xpose.msra.mxu0 0.0
        %2838 = vmatprep.subr.mxu0 0.0
        %2839 = vmatpush2.xpose.msra.mxu0 0.0
        %2840 = vmatprep.subr.mxu0 0.0
        %2841 = vmatpush2.xpose.msra.mxu0 0.0
        %2842 = vmatprep.subr.mxu0 0.0
        %2843 = vmatpush2.xpose.msra.mxu0 0.0
        %2844 = vmatprep.subr.mxu0 0.0
        %2845 = vmatpush2.xpose.msra.mxu0 0.0
        %2846 = vmatprep.subr.mxu0 0.0
        %2847 = vmatpush2.xpose.msra.mxu0 0.0
        %2848 = vmatprep.subr.mxu0 0.0
        %2849 = vmatpush2.xpose.msra.mxu0 0.0
        %2850 = vmatprep.subr.mxu0 0.0
        %2851 = vmatpush2.xpose.msra.mxu0 0.0
        %2852 = vmatprep.subr.mxu0 0.0
        %2853 = vmatpush2.xpose.msra.mxu0 0.0
        %2854 = vmatprep.subr.mxu0 0.0
        %2855 = vmatpush2.xpose.msra.mxu0 0.0
        %2856 = vmatprep.subr.mxu0 0.0
        %2857 = vmatpush2.xpose.msra.mxu0 0.0
        %2858 = vmatprep.subr.mxu0 0.0
        %2859 = vmatpush2.xpose.msra.mxu0 0.0
        %2860 = vmatprep.mubr.f32.mxu0 0.0
        %2861 = vmatmul.mubr.f32.gmra.mxu0 %v2790
        %v2862 = vpop.f32.mrf.mxu0
        %v2863 = vadd.f32 0.0, %v2862
        %v2864 = vpop.f32.mrf.mxu0
        %2865 = vdwg.mxu0
        %v2866 = vmul.f32 %v2863, 0.35355338
        %v2867 = vsel %vm1492, %v2866, -inf
        %2868 = vmax.xlane.f32.xlu0 %v2867
        %v2869 = vpop.xlane.xlu0 %2868
        %v2870 = vsub.f32 %v2866, %v2869
        %v2871 = vmul.f32 %v2870, 1.442695
        %v2872 = vpow.pop %v2871
        %v2873 = vsel %vm1492, %v2872, 0.0
        %2874 = vadd.xlane.f32.xlu0 %v2873
        %v2875 = vpop.xlane.xlu0 %2874
        %v2876 = vrcp.pop %v2875
        %v2877 = vmul.f32 %v2872, %v2876
        %2880 = vrot.lane.b32.xlu0 %v2602, 120
        %v2881 = vpop.permute.xlu0 %2880
        %2882 = vrot.lane.b32.xlu0 %v2607, 120
        %v2883 = vpop.permute.xlu0 %2882
        %v2887 = vsel %vm1492, %v2877, 0
        %2889 = vmatprep.subr.mxu0 0.0
        %2890 = vmatpush1.msra.mxu0 0.0
        %2891 = vmatprep.subr.mxu0 0.0
        %2892 = vmatpush1.msra.mxu0 0.0
        %2893 = vmatprep.subr.mxu0 0.0
        %2894 = vmatpush1.msra.mxu0 0.0
        %2895 = vmatprep.subr.mxu0 0.0
        %2896 = vmatpush1.msra.mxu0 0.0
        %2897 = vmatprep.subr.mxu0 0.0
        %2898 = vmatpush1.msra.mxu0 0.0
        %2899 = vmatprep.subr.mxu0 0.0
        %2900 = vmatpush1.msra.mxu0 0.0
        %2901 = vmatprep.subr.mxu0 0.0
        %2902 = vmatpush1.msra.mxu0 0.0
        %2903 = vmatprep.subr.mxu0 0.0
        %2904 = vmatpush1.msra.mxu0 0.0
        %2905 = vmatprep.subr.mxu0 0.0
        %2906 = vmatpush1.msra.mxu0 0.0
        %2907 = vmatprep.subr.mxu0 0.0
        %2908 = vmatpush1.msra.mxu0 0.0
        %2909 = vmatprep.subr.mxu0 0.0
        %2910 = vmatpush1.msra.mxu0 0.0
        %2911 = vmatprep.subr.mxu0 0.0
        %2912 = vmatpush1.msra.mxu0 0.0
        %2913 = vmatprep.subr.mxu0 0.0
        %2914 = vmatpush1.msra.mxu0 0.0
        %2915 = vmatprep.subr.mxu0 0.0
        %2916 = vmatpush1.msra.mxu0 0.0
        %2917 = vmatprep.subr.mxu0 0.0
        %2918 = vmatpush1.msra.mxu0 %v2883
        %2919 = vmatprep.subr.mxu0 0.0
        %2920 = vmatpush1.msra.mxu0 %v2881
        %2921 = vmatprep.subr.mxu0 0.0
        %2922 = vmatpush2.msra.mxu0 0.0
        %2923 = vmatprep.subr.mxu0 0.0
        %2924 = vmatpush2.msra.mxu0 0.0
        %2925 = vmatprep.subr.mxu0 0.0
        %2926 = vmatpush2.msra.mxu0 0.0
        %2927 = vmatprep.subr.mxu0 0.0
        %2928 = vmatpush2.msra.mxu0 0.0
        %2929 = vmatprep.subr.mxu0 0.0
        %2930 = vmatpush2.msra.mxu0 0.0
        %2931 = vmatprep.subr.mxu0 0.0
        %2932 = vmatpush2.msra.mxu0 0.0
        %2933 = vmatprep.subr.mxu0 0.0
        %2934 = vmatpush2.msra.mxu0 0.0
        %2935 = vmatprep.subr.mxu0 0.0
        %2936 = vmatpush2.msra.mxu0 0.0
        %2937 = vmatprep.subr.mxu0 0.0
        %2938 = vmatpush2.msra.mxu0 0.0
        %2939 = vmatprep.subr.mxu0 0.0
        %2940 = vmatpush2.msra.mxu0 0.0
        %2941 = vmatprep.subr.mxu0 0.0
        %2942 = vmatpush2.msra.mxu0 0.0
        %2943 = vmatprep.subr.mxu0 0.0
        %2944 = vmatpush2.msra.mxu0 0.0
        %2945 = vmatprep.subr.mxu0 0.0
        %2946 = vmatpush2.msra.mxu0 0.0
        %2947 = vmatprep.subr.mxu0 0.0
        %2948 = vmatpush2.msra.mxu0 0.0
        %2949 = vmatprep.subr.mxu0 0.0
        %2950 = vmatpush2.msra.mxu0 0.0
        %2951 = vmatprep.subr.mxu0 0.0
        %2952 = vmatpush2.msra.mxu0 0.0
        %2953 = vmatprep.mubr.f32.mxu0 0.0
        %2954 = vmatmul.mubr.f32.gmra.mxu0 %v2887
        %v2955 = vpop.f32.mrf.mxu0
        %v2956 = vadd.f32 0.0, %v2955
        %v2957 = vpop.f32.mrf.mxu0
        %2958 = vdwg.mxu0
        %2959 = vrot.lane.b32.xlu0 %v2382, 112
        %v2960 = vpop.permute.xlu0 %2959
        %2961 = vrot.lane.b32.xlu0 %v2489, 112
        %v2962 = vpop.permute.xlu0 %2961
        %2963 = vrot.lane.b32.xlu0 %v2494, 112
        %v2964 = vpop.permute.xlu0 %2963
        %v2965 = vsel %vm819, %v2960, 0
        %v2967 = vsel %vm819, %v2962, 0
        %v2969 = vsel %vm819, %v2964, 0
        %2971 = vmatprep.subr.mxu0 0.0
        %2972 = vmatpush1.xpose.msra.mxu0 0.0
        %2973 = vmatprep.subr.mxu0 0.0
        %2974 = vmatpush1.xpose.msra.mxu0 0.0
        %2975 = vmatprep.subr.mxu0 0.0
        %2976 = vmatpush1.xpose.msra.mxu0 0.0
        %2977 = vmatprep.subr.mxu0 0.0
        %2978 = vmatpush1.xpose.msra.mxu0 0.0
        %2979 = vmatprep.subr.mxu0 0.0
        %2980 = vmatpush1.xpose.msra.mxu0 0.0
        %2981 = vmatprep.subr.mxu0 0.0
        %2982 = vmatpush1.xpose.msra.mxu0 0.0
        %2983 = vmatprep.subr.mxu0 0.0
        %2984 = vmatpush1.xpose.msra.mxu0 0.0
        %2985 = vmatprep.subr.mxu0 0.0
        %2986 = vmatpush1.xpose.msra.mxu0 0.0
        %2987 = vmatprep.subr.mxu0 0.0
        %2988 = vmatpush1.xpose.msra.mxu0 0.0
        %2989 = vmatprep.subr.mxu0 0.0
        %2990 = vmatpush1.xpose.msra.mxu0 0.0
        %2991 = vmatprep.subr.mxu0 0.0
        %2992 = vmatpush1.xpose.msra.mxu0 0.0
        %2993 = vmatprep.subr.mxu0 0.0
        %2994 = vmatpush1.xpose.msra.mxu0 0.0
        %2995 = vmatprep.subr.mxu0 0.0
        %2996 = vmatpush1.xpose.msra.mxu0 0.0
        %2997 = vmatprep.subr.mxu0 0.0
        %2998 = vmatpush1.xpose.msra.mxu0 0.0
        %2999 = vmatprep.subr.mxu0 0.0
        %3000 = vmatpush1.xpose.msra.mxu0 %v2969
        %3001 = vmatprep.subr.mxu0 0.0
        %3002 = vmatpush1.xpose.msra.mxu0 %v2967
        %3003 = vmatprep.subr.mxu0 0.0
        %3004 = vmatpush2.xpose.msra.mxu0 0.0
        %3005 = vmatprep.subr.mxu0 0.0
        %3006 = vmatpush2.xpose.msra.mxu0 0.0
        %3007 = vmatprep.subr.mxu0 0.0
        %3008 = vmatpush2.xpose.msra.mxu0 0.0
        %3009 = vmatprep.subr.mxu0 0.0
        %3010 = vmatpush2.xpose.msra.mxu0 0.0
        %3011 = vmatprep.subr.mxu0 0.0
        %3012 = vmatpush2.xpose.msra.mxu0 0.0
        %3013 = vmatprep.subr.mxu0 0.0
        %3014 = vmatpush2.xpose.msra.mxu0 0.0
        %3015 = vmatprep.subr.mxu0 0.0
        %3016 = vmatpush2.xpose.msra.mxu0 0.0
        %3017 = vmatprep.subr.mxu0 0.0
        %3018 = vmatpush2.xpose.msra.mxu0 0.0
        %3019 = vmatprep.subr.mxu0 0.0
        %3020 = vmatpush2.xpose.msra.mxu0 0.0
        %3021 = vmatprep.subr.mxu0 0.0
        %3022 = vmatpush2.xpose.msra.mxu0 0.0
        %3023 = vmatprep.subr.mxu0 0.0
        %3024 = vmatpush2.xpose.msra.mxu0 0.0
        %3025 = vmatprep.subr.mxu0 0.0
        %3026 = vmatpush2.xpose.msra.mxu0 0.0
        %3027 = vmatprep.subr.mxu0 0.0
        %3028 = vmatpush2.xpose.msra.mxu0 0.0
        %3029 = vmatprep.subr.mxu0 0.0
        %3030 = vmatpush2.xpose.msra.mxu0 0.0
        %3031 = vmatprep.subr.mxu0 0.0
        %3032 = vmatpush2.xpose.msra.mxu0 0.0
        %3033 = vmatprep.subr.mxu0 0.0
        %3034 = vmatpush2.xpose.msra.mxu0 0.0
        %3035 = vmatprep.mubr.f32.mxu0 0.0
        %3036 = vmatmul.mubr.f32.gmra.mxu0 %v2965
        %v3037 = vpop.f32.mrf.mxu0
        %v3038 = vadd.f32 0.0, %v3037
        %v3039 = vpop.f32.mrf.mxu0
        %3040 = vdwg.mxu0
        %v3041 = vmul.f32 %v3038, 0.35355338
        %v3042 = vsel %vm1492, %v3041, -inf
        %3043 = vmax.xlane.f32.xlu0 %v3042
        %v3044 = vpop.xlane.xlu0 %3043
        %v3045 = vsub.f32 %v3041, %v3044
        %v3046 = vmul.f32 %v3045, 1.442695
        %v3047 = vpow.pop %v3046
        %v3048 = vsel %vm1492, %v3047, 0.0
        %3049 = vadd.xlane.f32.xlu0 %v3048
        %v3050 = vpop.xlane.xlu0 %3049
        %v3051 = vrcp.pop %v3050
        %v3052 = vmul.f32 %v3047, %v3051
        %3053 = vrot.lane.b32.xlu0 %v2602, 112
        %v3054 = vpop.permute.xlu0 %3053
        %3055 = vrot.lane.b32.xlu0 %v2607, 112
        %v3056 = vpop.permute.xlu0 %3055
        %v3060 = vsel %vm1492, %v3052, 0
        %3062 = vmatprep.subr.mxu0 0.0
        %3063 = vmatpush1.msra.mxu0 0.0
        %3064 = vmatprep.subr.mxu0 0.0
        %3065 = vmatpush1.msra.mxu0 0.0
        %3066 = vmatprep.subr.mxu0 0.0
        %3067 = vmatpush1.msra.mxu0 0.0
        %3068 = vmatprep.subr.mxu0 0.0
        %3069 = vmatpush1.msra.mxu0 0.0
        %3070 = vmatprep.subr.mxu0 0.0
        %3071 = vmatpush1.msra.mxu0 0.0
        %3072 = vmatprep.subr.mxu0 0.0
        %3073 = vmatpush1.msra.mxu0 0.0
        %3074 = vmatprep.subr.mxu0 0.0
        %3075 = vmatpush1.msra.mxu0 0.0
        %3076 = vmatprep.subr.mxu0 0.0
        %3077 = vmatpush1.msra.mxu0 0.0
        %3078 = vmatprep.subr.mxu0 0.0
        %3079 = vmatpush1.msra.mxu0 0.0
        %3080 = vmatprep.subr.mxu0 0.0
        %3081 = vmatpush1.msra.mxu0 0.0
        %3082 = vmatprep.subr.mxu0 0.0
        %3083 = vmatpush1.msra.mxu0 0.0
        %3084 = vmatprep.subr.mxu0 0.0
        %3085 = vmatpush1.msra.mxu0 0.0
        %3086 = vmatprep.subr.mxu0 0.0
        %3087 = vmatpush1.msra.mxu0 0.0
        %3088 = vmatprep.subr.mxu0 0.0
        %3089 = vmatpush1.msra.mxu0 0.0
        %3090 = vmatprep.subr.mxu0 0.0
        %3091 = vmatpush1.msra.mxu0 %v3056
        %3092 = vmatprep.subr.mxu0 0.0
        %3093 = vmatpush1.msra.mxu0 %v3054
        %3094 = vmatprep.subr.mxu0 0.0
        %3095 = vmatpush2.msra.mxu0 0.0
        %3096 = vmatprep.subr.mxu0 0.0
        %3097 = vmatpush2.msra.mxu0 0.0
        %3098 = vmatprep.subr.mxu0 0.0
        %3099 = vmatpush2.msra.mxu0 0.0
        %3100 = vmatprep.subr.mxu0 0.0
        %3101 = vmatpush2.msra.mxu0 0.0
        %3102 = vmatprep.subr.mxu0 0.0
        %3103 = vmatpush2.msra.mxu0 0.0
        %3104 = vmatprep.subr.mxu0 0.0
        %3105 = vmatpush2.msra.mxu0 0.0
        %3106 = vmatprep.subr.mxu0 0.0
        %3107 = vmatpush2.msra.mxu0 0.0
        %3108 = vmatprep.subr.mxu0 0.0
        %3109 = vmatpush2.msra.mxu0 0.0
        %3110 = vmatprep.subr.mxu0 0.0
        %3111 = vmatpush2.msra.mxu0 0.0
        %3112 = vmatprep.subr.mxu0 0.0
        %3113 = vmatpush2.msra.mxu0 0.0
        %3114 = vmatprep.subr.mxu0 0.0
        %3115 = vmatpush2.msra.mxu0 0.0
        %3116 = vmatprep.subr.mxu0 0.0
        %3117 = vmatpush2.msra.mxu0 0.0
        %3118 = vmatprep.subr.mxu0 0.0
        %3119 = vmatpush2.msra.mxu0 0.0
        %3120 = vmatprep.subr.mxu0 0.0
        %3121 = vmatpush2.msra.mxu0 0.0
        %3122 = vmatprep.subr.mxu0 0.0
        %3123 = vmatpush2.msra.mxu0 0.0
        %3124 = vmatprep.subr.mxu0 0.0
        %3125 = vmatpush2.msra.mxu0 0.0
        %3126 = vmatprep.mubr.f32.mxu0 0.0
        %3127 = vmatmul.mubr.f32.gmra.mxu0 %v3060
        %v3128 = vpop.f32.mrf.mxu0
        %v3129 = vadd.f32 0.0, %v3128
        %v3130 = vpop.f32.mrf.mxu0
        %3131 = vdwg.mxu0
        %3132 = vrot.lane.b32.xlu0 %v2382, 104
        %v3133 = vpop.permute.xlu0 %3132
        %3134 = vrot.lane.b32.xlu0 %v2489, 104
        %v3135 = vpop.permute.xlu0 %3134
        %3136 = vrot.lane.b32.xlu0 %v2494, 104
        %v3137 = vpop.permute.xlu0 %3136
        %v3138 = vsel %vm819, %v3133, 0
        %v3140 = vsel %vm819, %v3135, 0
        %v3142 = vsel %vm819, %v3137, 0
        %3144 = vmatprep.subr.mxu0 0.0
        %3145 = vmatpush1.xpose.msra.mxu0 0.0
        %3146 = vmatprep.subr.mxu0 0.0
        %3147 = vmatpush1.xpose.msra.mxu0 0.0
        %3148 = vmatprep.subr.mxu0 0.0
        %3149 = vmatpush1.xpose.msra.mxu0 0.0
        %3150 = vmatprep.subr.mxu0 0.0
        %3151 = vmatpush1.xpose.msra.mxu0 0.0
        %3152 = vmatprep.subr.mxu0 0.0
        %3153 = vmatpush1.xpose.msra.mxu0 0.0
        %3154 = vmatprep.subr.mxu0 0.0
        %3155 = vmatpush1.xpose.msra.mxu0 0.0
        %3156 = vmatprep.subr.mxu0 0.0
        %3157 = vmatpush1.xpose.msra.mxu0 0.0
        %3158 = vmatprep.subr.mxu0 0.0
        %3159 = vmatpush1.xpose.msra.mxu0 0.0
        %3160 = vmatprep.subr.mxu0 0.0
        %3161 = vmatpush1.xpose.msra.mxu0 0.0
        %3162 = vmatprep.subr.mxu0 0.0
        %3163 = vmatpush1.xpose.msra.mxu0 0.0
        %3164 = vmatprep.subr.mxu0 0.0
        %3165 = vmatpush1.xpose.msra.mxu0 0.0
        %3166 = vmatprep.subr.mxu0 0.0
        %3167 = vmatpush1.xpose.msra.mxu0 0.0
        %3168 = vmatprep.subr.mxu0 0.0
        %3169 = vmatpush1.xpose.msra.mxu0 0.0
        %3170 = vmatprep.subr.mxu0 0.0
        %3171 = vmatpush1.xpose.msra.mxu0 0.0
        %3172 = vmatprep.subr.mxu0 0.0
        %3173 = vmatpush1.xpose.msra.mxu0 %v3142
        %3174 = vmatprep.subr.mxu0 0.0
        %3175 = vmatpush1.xpose.msra.mxu0 %v3140
        %3176 = vmatprep.subr.mxu0 0.0
        %3177 = vmatpush2.xpose.msra.mxu0 0.0
        %3178 = vmatprep.subr.mxu0 0.0
        %3179 = vmatpush2.xpose.msra.mxu0 0.0
        %3180 = vmatprep.subr.mxu0 0.0
        %3181 = vmatpush2.xpose.msra.mxu0 0.0
        %3182 = vmatprep.subr.mxu0 0.0
        %3183 = vmatpush2.xpose.msra.mxu0 0.0
        %3184 = vmatprep.subr.mxu0 0.0
        %3185 = vmatpush2.xpose.msra.mxu0 0.0
        %3186 = vmatprep.subr.mxu0 0.0
        %3187 = vmatpush2.xpose.msra.mxu0 0.0
        %3188 = vmatprep.subr.mxu0 0.0
        %3189 = vmatpush2.xpose.msra.mxu0 0.0
        %3190 = vmatprep.subr.mxu0 0.0
        %3191 = vmatpush2.xpose.msra.mxu0 0.0
        %3192 = vmatprep.subr.mxu0 0.0
        %3193 = vmatpush2.xpose.msra.mxu0 0.0
        %3194 = vmatprep.subr.mxu0 0.0
        %3195 = vmatpush2.xpose.msra.mxu0 0.0
        %3196 = vmatprep.subr.mxu0 0.0
        %3197 = vmatpush2.xpose.msra.mxu0 0.0
        %3198 = vmatprep.subr.mxu0 0.0
        %3199 = vmatpush2.xpose.msra.mxu0 0.0
        %3200 = vmatprep.subr.mxu0 0.0
        %3201 = vmatpush2.xpose.msra.mxu0 0.0
        %3202 = vmatprep.subr.mxu0 0.0
        %3203 = vmatpush2.xpose.msra.mxu0 0.0
        %3204 = vmatprep.subr.mxu0 0.0
        %3205 = vmatpush2.xpose.msra.mxu0 0.0
        %3206 = vmatprep.subr.mxu0 0.0
        %3207 = vmatpush2.xpose.msra.mxu0 0.0
        %3208 = vmatprep.mubr.f32.mxu0 0.0
        %3209 = vmatmul.mubr.f32.gmra.mxu0 %v3138
        %v3210 = vpop.f32.mrf.mxu0
        %v3211 = vadd.f32 0.0, %v3210
        %v3212 = vpop.f32.mrf.mxu0
        %3213 = vdwg.mxu0
        %v3214 = vmul.f32 %v3211, 0.35355338
        %v3215 = vsel %vm1492, %v3214, -inf
        %3216 = vmax.xlane.f32.xlu0 %v3215
        %v3217 = vpop.xlane.xlu0 %3216
        %v3218 = vsub.f32 %v3214, %v3217
        %v3219 = vmul.f32 %v3218, 1.442695
        %v3220 = vpow.pop %v3219
        %v3221 = vsel %vm1492, %v3220, 0.0
        %3222 = vadd.xlane.f32.xlu0 %v3221
        %v3223 = vpop.xlane.xlu0 %3222
        %v3224 = vrcp.pop %v3223
        %v3225 = vmul.f32 %v3220, %v3224
        %3226 = vrot.lane.b32.xlu0 %v2602, 104
        %v3227 = vpop.permute.xlu0 %3226
        %3228 = vrot.lane.b32.xlu0 %v2607, 104
        %v3229 = vpop.permute.xlu0 %3228
        %v3233 = vsel %vm1492, %v3225, 0
        %3235 = vmatprep.subr.mxu0 0.0
        %3236 = vmatpush1.msra.mxu0 0.0
        %3237 = vmatprep.subr.mxu0 0.0
        %3238 = vmatpush1.msra.mxu0 0.0
        %3239 = vmatprep.subr.mxu0 0.0
        %3240 = vmatpush1.msra.mxu0 0.0
        %3241 = vmatprep.subr.mxu0 0.0
        %3242 = vmatpush1.msra.mxu0 0.0
        %3243 = vmatprep.subr.mxu0 0.0
        %3244 = vmatpush1.msra.mxu0 0.0
        %3245 = vmatprep.subr.mxu0 0.0
        %3246 = vmatpush1.msra.mxu0 0.0
        %3247 = vmatprep.subr.mxu0 0.0
        %3248 = vmatpush1.msra.mxu0 0.0
        %3249 = vmatprep.subr.mxu0 0.0
        %3250 = vmatpush1.msra.mxu0 0.0
        %3251 = vmatprep.subr.mxu0 0.0
        %3252 = vmatpush1.msra.mxu0 0.0
        %3253 = vmatprep.subr.mxu0 0.0
        %3254 = vmatpush1.msra.mxu0 0.0
        %3255 = vmatprep.subr.mxu0 0.0
        %3256 = vmatpush1.msra.mxu0 0.0
        %3257 = vmatprep.subr.mxu0 0.0
        %3258 = vmatpush1.msra.mxu0 0.0
        %3259 = vmatprep.subr.mxu0 0.0
        %3260 = vmatpush1.msra.mxu0 0.0
        %3261 = vmatprep.subr.mxu0 0.0
        %3262 = vmatpush1.msra.mxu0 0.0
        %3263 = vmatprep.subr.mxu0 0.0
        %3264 = vmatpush1.msra.mxu0 %v3229
        %3265 = vmatprep.subr.mxu0 0.0
        %3266 = vmatpush1.msra.mxu0 %v3227
        %3267 = vmatprep.subr.mxu0 0.0
        %3268 = vmatpush2.msra.mxu0 0.0
        %3269 = vmatprep.subr.mxu0 0.0
        %3270 = vmatpush2.msra.mxu0 0.0
        %3271 = vmatprep.subr.mxu0 0.0
        %3272 = vmatpush2.msra.mxu0 0.0
        %3273 = vmatprep.subr.mxu0 0.0
        %3274 = vmatpush2.msra.mxu0 0.0
        %3275 = vmatprep.subr.mxu0 0.0
        %3276 = vmatpush2.msra.mxu0 0.0
        %3277 = vmatprep.subr.mxu0 0.0
        %3278 = vmatpush2.msra.mxu0 0.0
        %3279 = vmatprep.subr.mxu0 0.0
        %3280 = vmatpush2.msra.mxu0 0.0
        %3281 = vmatprep.subr.mxu0 0.0
        %3282 = vmatpush2.msra.mxu0 0.0
        %3283 = vmatprep.subr.mxu0 0.0
        %3284 = vmatpush2.msra.mxu0 0.0
        %3285 = vmatprep.subr.mxu0 0.0
        %3286 = vmatpush2.msra.mxu0 0.0
        %3287 = vmatprep.subr.mxu0 0.0
        %3288 = vmatpush2.msra.mxu0 0.0
        %3289 = vmatprep.subr.mxu0 0.0
        %3290 = vmatpush2.msra.mxu0 0.0
        %3291 = vmatprep.subr.mxu0 0.0
        %3292 = vmatpush2.msra.mxu0 0.0
        %3293 = vmatprep.subr.mxu0 0.0
        %3294 = vmatpush2.msra.mxu0 0.0
        %3295 = vmatprep.subr.mxu0 0.0
        %3296 = vmatpush2.msra.mxu0 0.0
        %3297 = vmatprep.subr.mxu0 0.0
        %3298 = vmatpush2.msra.mxu0 0.0
        %3299 = vmatprep.mubr.f32.mxu0 0.0
        %3300 = vmatmul.mubr.f32.gmra.mxu0 %v3233
        %v3301 = vpop.f32.mrf.mxu0
        %v3302 = vadd.f32 0.0, %v3301
        %v3303 = vpop.f32.mrf.mxu0
        %3304 = vdwg.mxu0
        %3306 = vrot.lane.b32.xlu0 %v2956, 8
        %v3307 = vpop.permute.xlu0 %3306
        %3310 = vrot.lane.b32.xlu0 %v3129, 16
        %v3311 = vpop.permute.xlu0 %3310
        %3314 = vrot.lane.b32.xlu0 %v3302, 24
        %v3315 = vpop.permute.xlu0 %3314
        %v3317 = vsel %vm819, %v2781, %v3307
        %v3318 = vsel %vm1492, %v3317, %v3311
        %v3319 = vsel %vm1494, %v3318, %v3315
        %v3321 = vsel %vm819, %v2387, 0
        %v3324 = vsel %vm819, %v2499, 0
        %v3327 = vsel %vm819, %v2504, 0
        %3329 = vmatprep.subr.mxu0 0.0
        %3330 = vmatpush1.xpose.msra.mxu0 0.0
        %3331 = vmatprep.subr.mxu0 0.0
        %3332 = vmatpush1.xpose.msra.mxu0 0.0
        %3333 = vmatprep.subr.mxu0 0.0
        %3334 = vmatpush1.xpose.msra.mxu0 0.0
        %3335 = vmatprep.subr.mxu0 0.0
        %3336 = vmatpush1.xpose.msra.mxu0 0.0
        %3337 = vmatprep.subr.mxu0 0.0
        %3338 = vmatpush1.xpose.msra.mxu0 0.0
        %3339 = vmatprep.subr.mxu0 0.0
        %3340 = vmatpush1.xpose.msra.mxu0 0.0
        %3341 = vmatprep.subr.mxu0 0.0
        %3342 = vmatpush1.xpose.msra.mxu0 0.0
        %3343 = vmatprep.subr.mxu0 0.0
        %3344 = vmatpush1.xpose.msra.mxu0 0.0
        %3345 = vmatprep.subr.mxu0 0.0
        %3346 = vmatpush1.xpose.msra.mxu0 0.0
        %3347 = vmatprep.subr.mxu0 0.0
        %3348 = vmatpush1.xpose.msra.mxu0 0.0
        %3349 = vmatprep.subr.mxu0 0.0
        %3350 = vmatpush1.xpose.msra.mxu0 0.0
        %3351 = vmatprep.subr.mxu0 0.0
        %3352 = vmatpush1.xpose.msra.mxu0 0.0
        %3353 = vmatprep.subr.mxu0 0.0
        %3354 = vmatpush1.xpose.msra.mxu0 0.0
        %3355 = vmatprep.subr.mxu0 0.0
        %3356 = vmatpush1.xpose.msra.mxu0 0.0
        %3357 = vmatprep.subr.mxu0 0.0
        %3358 = vmatpush1.xpose.msra.mxu0 %v3327
        %3359 = vmatprep.subr.mxu0 0.0
        %3360 = vmatpush1.xpose.msra.mxu0 %v3324
        %3361 = vmatprep.subr.mxu0 0.0
        %3362 = vmatpush2.xpose.msra.mxu0 0.0
        %3363 = vmatprep.subr.mxu0 0.0
        %3364 = vmatpush2.xpose.msra.mxu0 0.0
        %3365 = vmatprep.subr.mxu0 0.0
        %3366 = vmatpush2.xpose.msra.mxu0 0.0
        %3367 = vmatprep.subr.mxu0 0.0
        %3368 = vmatpush2.xpose.msra.mxu0 0.0
        %3369 = vmatprep.subr.mxu0 0.0
        %3370 = vmatpush2.xpose.msra.mxu0 0.0
        %3371 = vmatprep.subr.mxu0 0.0
        %3372 = vmatpush2.xpose.msra.mxu0 0.0
        %3373 = vmatprep.subr.mxu0 0.0
        %3374 = vmatpush2.xpose.msra.mxu0 0.0
        %3375 = vmatprep.subr.mxu0 0.0
        %3376 = vmatpush2.xpose.msra.mxu0 0.0
        %3377 = vmatprep.subr.mxu0 0.0
        %3378 = vmatpush2.xpose.msra.mxu0 0.0
        %3379 = vmatprep.subr.mxu0 0.0
        %3380 = vmatpush2.xpose.msra.mxu0 0.0
        %3381 = vmatprep.subr.mxu0 0.0
        %3382 = vmatpush2.xpose.msra.mxu0 0.0
        %3383 = vmatprep.subr.mxu0 0.0
        %3384 = vmatpush2.xpose.msra.mxu0 0.0
        %3385 = vmatprep.subr.mxu0 0.0
        %3386 = vmatpush2.xpose.msra.mxu0 0.0
        %3387 = vmatprep.subr.mxu0 0.0
        %3388 = vmatpush2.xpose.msra.mxu0 0.0
        %3389 = vmatprep.subr.mxu0 0.0
        %3390 = vmatpush2.xpose.msra.mxu0 0.0
        %3391 = vmatprep.subr.mxu0 0.0
        %3392 = vmatpush2.xpose.msra.mxu0 0.0
        %3393 = vmatprep.mubr.f32.mxu0 0.0
        %3394 = vmatmul.mubr.f32.gmra.mxu0 %v3321
        %v3395 = vpop.f32.mrf.mxu0
        %v3396 = vadd.f32 0.0, %v3395
        %v3397 = vpop.f32.mrf.mxu0
        %3398 = vdwg.mxu0
        %v3399 = vmul.f32 %v3396, 0.35355338
        %v3400 = vsel %vm1492, %v3399, -inf
        %3401 = vmax.xlane.f32.xlu0 %v3400
        %v3402 = vpop.xlane.xlu0 %3401
        %v3403 = vsub.f32 %v3399, %v3402
        %v3404 = vmul.f32 %v3403, 1.442695
        %v3405 = vpow.pop %v3404
        %v3406 = vsel %vm1492, %v3405, 0.0
        %3407 = vadd.xlane.f32.xlu0 %v3406
        %v3408 = vpop.xlane.xlu0 %3407
        %v3409 = vrcp.pop %v3408
        %v3410 = vmul.f32 %v3405, %v3409
        %v3412 = vsel %vm1492, %v3410, 0
        %3414 = vmatprep.subr.mxu0 0.0
        %3415 = vmatpush1.msra.mxu0 0.0
        %3416 = vmatprep.subr.mxu0 0.0
        %3417 = vmatpush1.msra.mxu0 0.0
        %3418 = vmatprep.subr.mxu0 0.0
        %3419 = vmatpush1.msra.mxu0 0.0
        %3420 = vmatprep.subr.mxu0 0.0
        %3421 = vmatpush1.msra.mxu0 0.0
        %3422 = vmatprep.subr.mxu0 0.0
        %3423 = vmatpush1.msra.mxu0 0.0
        %3424 = vmatprep.subr.mxu0 0.0
        %3425 = vmatpush1.msra.mxu0 0.0
        %3426 = vmatprep.subr.mxu0 0.0
        %3427 = vmatpush1.msra.mxu0 0.0
        %3428 = vmatprep.subr.mxu0 0.0
        %3429 = vmatpush1.msra.mxu0 0.0
        %3430 = vmatprep.subr.mxu0 0.0
        %3431 = vmatpush1.msra.mxu0 0.0
        %3432 = vmatprep.subr.mxu0 0.0
        %3433 = vmatpush1.msra.mxu0 0.0
        %3434 = vmatprep.subr.mxu0 0.0
        %3435 = vmatpush1.msra.mxu0 0.0
        %3436 = vmatprep.subr.mxu0 0.0
        %3437 = vmatpush1.msra.mxu0 0.0
        %3438 = vmatprep.subr.mxu0 0.0
        %3439 = vmatpush1.msra.mxu0 0.0
        %3440 = vmatprep.subr.mxu0 0.0
        %3441 = vmatpush1.msra.mxu0 0.0
        %3442 = vmatprep.subr.mxu0 0.0
        %3443 = vmatpush1.msra.mxu0 %v2617
        %3444 = vmatprep.subr.mxu0 0.0
        %3445 = vmatpush1.msra.mxu0 %v2612
        %3446 = vmatprep.subr.mxu0 0.0
        %3447 = vmatpush2.msra.mxu0 0.0
        %3448 = vmatprep.subr.mxu0 0.0
        %3449 = vmatpush2.msra.mxu0 0.0
        %3450 = vmatprep.subr.mxu0 0.0
        %3451 = vmatpush2.msra.mxu0 0.0
        %3452 = vmatprep.subr.mxu0 0.0
        %3453 = vmatpush2.msra.mxu0 0.0
        %3454 = vmatprep.subr.mxu0 0.0
        %3455 = vmatpush2.msra.mxu0 0.0
        %3456 = vmatprep.subr.mxu0 0.0
        %3457 = vmatpush2.msra.mxu0 0.0
        %3458 = vmatprep.subr.mxu0 0.0
        %3459 = vmatpush2.msra.mxu0 0.0
        %3460 = vmatprep.subr.mxu0 0.0
        %3461 = vmatpush2.msra.mxu0 0.0
        %3462 = vmatprep.subr.mxu0 0.0
        %3463 = vmatpush2.msra.mxu0 0.0
        %3464 = vmatprep.subr.mxu0 0.0
        %3465 = vmatpush2.msra.mxu0 0.0
        %3466 = vmatprep.subr.mxu0 0.0
        %3467 = vmatpush2.msra.mxu0 0.0
        %3468 = vmatprep.subr.mxu0 0.0
        %3469 = vmatpush2.msra.mxu0 0.0
        %3470 = vmatprep.subr.mxu0 0.0
        %3471 = vmatpush2.msra.mxu0 0.0
        %3472 = vmatprep.subr.mxu0 0.0
        %3473 = vmatpush2.msra.mxu0 0.0
        %3474 = vmatprep.subr.mxu0 0.0
        %3475 = vmatpush2.msra.mxu0 0.0
        %3476 = vmatprep.subr.mxu0 0.0
        %3477 = vmatpush2.msra.mxu0 0.0
        %3478 = vmatprep.mubr.f32.mxu0 0.0
        %3479 = vmatmul.mubr.f32.gmra.mxu0 %v3412
        %v3480 = vpop.f32.mrf.mxu0
        %v3481 = vadd.f32 0.0, %v3480
        %v3482 = vpop.f32.mrf.mxu0
        %3483 = vdwg.mxu0
        %3484 = vrot.lane.b32.xlu0 %v2387, 120
        %v3485 = vpop.permute.xlu0 %3484
        %3486 = vrot.lane.b32.xlu0 %v2499, 120
        %v3487 = vpop.permute.xlu0 %3486
        %3488 = vrot.lane.b32.xlu0 %v2504, 120
        %v3489 = vpop.permute.xlu0 %3488
        %v3490 = vsel %vm819, %v3485, 0
        %v3492 = vsel %vm819, %v3487, 0
        %v3494 = vsel %vm819, %v3489, 0
        %3496 = vmatprep.subr.mxu0 0.0
        %3497 = vmatpush1.xpose.msra.mxu0 0.0
        %3498 = vmatprep.subr.mxu0 0.0
        %3499 = vmatpush1.xpose.msra.mxu0 0.0
        %3500 = vmatprep.subr.mxu0 0.0
        %3501 = vmatpush1.xpose.msra.mxu0 0.0
        %3502 = vmatprep.subr.mxu0 0.0
        %3503 = vmatpush1.xpose.msra.mxu0 0.0
        %3504 = vmatprep.subr.mxu0 0.0
        %3505 = vmatpush1.xpose.msra.mxu0 0.0
        %3506 = vmatprep.subr.mxu0 0.0
        %3507 = vmatpush1.xpose.msra.mxu0 0.0
        %3508 = vmatprep.subr.mxu0 0.0
        %3509 = vmatpush1.xpose.msra.mxu0 0.0
        %3510 = vmatprep.subr.mxu0 0.0
        %3511 = vmatpush1.xpose.msra.mxu0 0.0
        %3512 = vmatprep.subr.mxu0 0.0
        %3513 = vmatpush1.xpose.msra.mxu0 0.0
        %3514 = vmatprep.subr.mxu0 0.0
        %3515 = vmatpush1.xpose.msra.mxu0 0.0
        %3516 = vmatprep.subr.mxu0 0.0
        %3517 = vmatpush1.xpose.msra.mxu0 0.0
        %3518 = vmatprep.subr.mxu0 0.0
        %3519 = vmatpush1.xpose.msra.mxu0 0.0
        %3520 = vmatprep.subr.mxu0 0.0
        %3521 = vmatpush1.xpose.msra.mxu0 0.0
        %3522 = vmatprep.subr.mxu0 0.0
        %3523 = vmatpush1.xpose.msra.mxu0 0.0
        %3524 = vmatprep.subr.mxu0 0.0
        %3525 = vmatpush1.xpose.msra.mxu0 %v3494
        %3526 = vmatprep.subr.mxu0 0.0
        %3527 = vmatpush1.xpose.msra.mxu0 %v3492
        %3528 = vmatprep.subr.mxu0 0.0
        %3529 = vmatpush2.xpose.msra.mxu0 0.0
        %3530 = vmatprep.subr.mxu0 0.0
        %3531 = vmatpush2.xpose.msra.mxu0 0.0
        %3532 = vmatprep.subr.mxu0 0.0
        %3533 = vmatpush2.xpose.msra.mxu0 0.0
        %3534 = vmatprep.subr.mxu0 0.0
        %3535 = vmatpush2.xpose.msra.mxu0 0.0
        %3536 = vmatprep.subr.mxu0 0.0
        %3537 = vmatpush2.xpose.msra.mxu0 0.0
        %3538 = vmatprep.subr.mxu0 0.0
        %3539 = vmatpush2.xpose.msra.mxu0 0.0
        %3540 = vmatprep.subr.mxu0 0.0
        %3541 = vmatpush2.xpose.msra.mxu0 0.0
        %3542 = vmatprep.subr.mxu0 0.0
        %3543 = vmatpush2.xpose.msra.mxu0 0.0
        %3544 = vmatprep.subr.mxu0 0.0
        %3545 = vmatpush2.xpose.msra.mxu0 0.0
        %3546 = vmatprep.subr.mxu0 0.0
        %3547 = vmatpush2.xpose.msra.mxu0 0.0
        %3548 = vmatprep.subr.mxu0 0.0
        %3549 = vmatpush2.xpose.msra.mxu0 0.0
        %3550 = vmatprep.subr.mxu0 0.0
        %3551 = vmatpush2.xpose.msra.mxu0 0.0
        %3552 = vmatprep.subr.mxu0 0.0
        %3553 = vmatpush2.xpose.msra.mxu0 0.0
        %3554 = vmatprep.subr.mxu0 0.0
        %3555 = vmatpush2.xpose.msra.mxu0 0.0
        %3556 = vmatprep.subr.mxu0 0.0
        %3557 = vmatpush2.xpose.msra.mxu0 0.0
        %3558 = vmatprep.subr.mxu0 0.0
        %3559 = vmatpush2.xpose.msra.mxu0 0.0
        %3560 = vmatprep.mubr.f32.mxu0 0.0
        %3561 = vmatmul.mubr.f32.gmra.mxu0 %v3490
        %v3562 = vpop.f32.mrf.mxu0
        %v3563 = vadd.f32 0.0, %v3562
        %v3564 = vpop.f32.mrf.mxu0
        %3565 = vdwg.mxu0
        %v3566 = vmul.f32 %v3563, 0.35355338
        %v3567 = vsel %vm1492, %v3566, -inf
        %3568 = vmax.xlane.f32.xlu0 %v3567
        %v3569 = vpop.xlane.xlu0 %3568
        %v3570 = vsub.f32 %v3566, %v3569
        %v3571 = vmul.f32 %v3570, 1.442695
        %v3572 = vpow.pop %v3571
        %v3573 = vsel %vm1492, %v3572, 0.0
        %3574 = vadd.xlane.f32.xlu0 %v3573
        %v3575 = vpop.xlane.xlu0 %3574
        %v3576 = vrcp.pop %v3575
        %v3577 = vmul.f32 %v3572, %v3576
        %3580 = vrot.lane.b32.xlu0 %v2612, 120
        %v3581 = vpop.permute.xlu0 %3580
        %3582 = vrot.lane.b32.xlu0 %v2617, 120
        %v3583 = vpop.permute.xlu0 %3582
        %v3587 = vsel %vm1492, %v3577, 0
        %3589 = vmatprep.subr.mxu0 0.0
        %3590 = vmatpush1.msra.mxu0 0.0
        %3591 = vmatprep.subr.mxu0 0.0
        %3592 = vmatpush1.msra.mxu0 0.0
        %3593 = vmatprep.subr.mxu0 0.0
        %3594 = vmatpush1.msra.mxu0 0.0
        %3595 = vmatprep.subr.mxu0 0.0
        %3596 = vmatpush1.msra.mxu0 0.0
        %3597 = vmatprep.subr.mxu0 0.0
        %3598 = vmatpush1.msra.mxu0 0.0
        %3599 = vmatprep.subr.mxu0 0.0
        %3600 = vmatpush1.msra.mxu0 0.0
        %3601 = vmatprep.subr.mxu0 0.0
        %3602 = vmatpush1.msra.mxu0 0.0
        %3603 = vmatprep.subr.mxu0 0.0
        %3604 = vmatpush1.msra.mxu0 0.0
        %3605 = vmatprep.subr.mxu0 0.0
        %3606 = vmatpush1.msra.mxu0 0.0
        %3607 = vmatprep.subr.mxu0 0.0
        %3608 = vmatpush1.msra.mxu0 0.0
        %3609 = vmatprep.subr.mxu0 0.0
        %3610 = vmatpush1.msra.mxu0 0.0
        %3611 = vmatprep.subr.mxu0 0.0
        %3612 = vmatpush1.msra.mxu0 0.0
        %3613 = vmatprep.subr.mxu0 0.0
        %3614 = vmatpush1.msra.mxu0 0.0
        %3615 = vmatprep.subr.mxu0 0.0
        %3616 = vmatpush1.msra.mxu0 0.0
        %3617 = vmatprep.subr.mxu0 0.0
        %3618 = vmatpush1.msra.mxu0 %v3583
        %3619 = vmatprep.subr.mxu0 0.0
        %3620 = vmatpush1.msra.mxu0 %v3581
        %3621 = vmatprep.subr.mxu0 0.0
        %3622 = vmatpush2.msra.mxu0 0.0
        %3623 = vmatprep.subr.mxu0 0.0
        %3624 = vmatpush2.msra.mxu0 0.0
        %3625 = vmatprep.subr.mxu0 0.0
        %3626 = vmatpush2.msra.mxu0 0.0
        %3627 = vmatprep.subr.mxu0 0.0
        %3628 = vmatpush2.msra.mxu0 0.0
        %3629 = vmatprep.subr.mxu0 0.0
        %3630 = vmatpush2.msra.mxu0 0.0
        %3631 = vmatprep.subr.mxu0 0.0
        %3632 = vmatpush2.msra.mxu0 0.0
        %3633 = vmatprep.subr.mxu0 0.0
        %3634 = vmatpush2.msra.mxu0 0.0
        %3635 = vmatprep.subr.mxu0 0.0
        %3636 = vmatpush2.msra.mxu0 0.0
        %3637 = vmatprep.subr.mxu0 0.0
        %3638 = vmatpush2.msra.mxu0 0.0
        %3639 = vmatprep.subr.mxu0 0.0
        %3640 = vmatpush2.msra.mxu0 0.0
        %3641 = vmatprep.subr.mxu0 0.0
        %3642 = vmatpush2.msra.mxu0 0.0
        %3643 = vmatprep.subr.mxu0 0.0
        %3644 = vmatpush2.msra.mxu0 0.0
        %3645 = vmatprep.subr.mxu0 0.0
        %3646 = vmatpush2.msra.mxu0 0.0
        %3647 = vmatprep.subr.mxu0 0.0
        %3648 = vmatpush2.msra.mxu0 0.0
        %3649 = vmatprep.subr.mxu0 0.0
        %3650 = vmatpush2.msra.mxu0 0.0
        %3651 = vmatprep.subr.mxu0 0.0
        %3652 = vmatpush2.msra.mxu0 0.0
        %3653 = vmatprep.mubr.f32.mxu0 0.0
        %3654 = vmatmul.mubr.f32.gmra.mxu0 %v3587
        %v3655 = vpop.f32.mrf.mxu0
        %v3656 = vadd.f32 0.0, %v3655
        %v3657 = vpop.f32.mrf.mxu0
        %3658 = vdwg.mxu0
        %3659 = vrot.lane.b32.xlu0 %v2387, 112
        %v3660 = vpop.permute.xlu0 %3659
        %3661 = vrot.lane.b32.xlu0 %v2499, 112
        %v3662 = vpop.permute.xlu0 %3661
        %3663 = vrot.lane.b32.xlu0 %v2504, 112
        %v3664 = vpop.permute.xlu0 %3663
        %v3665 = vsel %vm819, %v3660, 0
        %v3667 = vsel %vm819, %v3662, 0
        %v3669 = vsel %vm819, %v3664, 0
        %3671 = vmatprep.subr.mxu0 0.0
        %3672 = vmatpush1.xpose.msra.mxu0 0.0
        %3673 = vmatprep.subr.mxu0 0.0
        %3674 = vmatpush1.xpose.msra.mxu0 0.0
        %3675 = vmatprep.subr.mxu0 0.0
        %3676 = vmatpush1.xpose.msra.mxu0 0.0
        %3677 = vmatprep.subr.mxu0 0.0
        %3678 = vmatpush1.xpose.msra.mxu0 0.0
        %3679 = vmatprep.subr.mxu0 0.0
        %3680 = vmatpush1.xpose.msra.mxu0 0.0
        %3681 = vmatprep.subr.mxu0 0.0
        %3682 = vmatpush1.xpose.msra.mxu0 0.0
        %3683 = vmatprep.subr.mxu0 0.0
        %3684 = vmatpush1.xpose.msra.mxu0 0.0
        %3685 = vmatprep.subr.mxu0 0.0
        %3686 = vmatpush1.xpose.msra.mxu0 0.0
        %3687 = vmatprep.subr.mxu0 0.0
        %3688 = vmatpush1.xpose.msra.mxu0 0.0
        %3689 = vmatprep.subr.mxu0 0.0
        %3690 = vmatpush1.xpose.msra.mxu0 0.0
        %3691 = vmatprep.subr.mxu0 0.0
        %3692 = vmatpush1.xpose.msra.mxu0 0.0
        %3693 = vmatprep.subr.mxu0 0.0
        %3694 = vmatpush1.xpose.msra.mxu0 0.0
        %3695 = vmatprep.subr.mxu0 0.0
        %3696 = vmatpush1.xpose.msra.mxu0 0.0
        %3697 = vmatprep.subr.mxu0 0.0
        %3698 = vmatpush1.xpose.msra.mxu0 0.0
        %3699 = vmatprep.subr.mxu0 0.0
        %3700 = vmatpush1.xpose.msra.mxu0 %v3669
        %3701 = vmatprep.subr.mxu0 0.0
        %3702 = vmatpush1.xpose.msra.mxu0 %v3667
        %3703 = vmatprep.subr.mxu0 0.0
        %3704 = vmatpush2.xpose.msra.mxu0 0.0
        %3705 = vmatprep.subr.mxu0 0.0
        %3706 = vmatpush2.xpose.msra.mxu0 0.0
        %3707 = vmatprep.subr.mxu0 0.0
        %3708 = vmatpush2.xpose.msra.mxu0 0.0
        %3709 = vmatprep.subr.mxu0 0.0
        %3710 = vmatpush2.xpose.msra.mxu0 0.0
        %3711 = vmatprep.subr.mxu0 0.0
        %3712 = vmatpush2.xpose.msra.mxu0 0.0
        %3713 = vmatprep.subr.mxu0 0.0
        %3714 = vmatpush2.xpose.msra.mxu0 0.0
        %3715 = vmatprep.subr.mxu0 0.0
        %3716 = vmatpush2.xpose.msra.mxu0 0.0
        %3717 = vmatprep.subr.mxu0 0.0
        %3718 = vmatpush2.xpose.msra.mxu0 0.0
        %3719 = vmatprep.subr.mxu0 0.0
        %3720 = vmatpush2.xpose.msra.mxu0 0.0
        %3721 = vmatprep.subr.mxu0 0.0
        %3722 = vmatpush2.xpose.msra.mxu0 0.0
        %3723 = vmatprep.subr.mxu0 0.0
        %3724 = vmatpush2.xpose.msra.mxu0 0.0
        %3725 = vmatprep.subr.mxu0 0.0
        %3726 = vmatpush2.xpose.msra.mxu0 0.0
        %3727 = vmatprep.subr.mxu0 0.0
        %3728 = vmatpush2.xpose.msra.mxu0 0.0
        %3729 = vmatprep.subr.mxu0 0.0
        %3730 = vmatpush2.xpose.msra.mxu0 0.0
        %3731 = vmatprep.subr.mxu0 0.0
        %3732 = vmatpush2.xpose.msra.mxu0 0.0
        %3733 = vmatprep.subr.mxu0 0.0
        %3734 = vmatpush2.xpose.msra.mxu0 0.0
        %3735 = vmatprep.mubr.f32.mxu0 0.0
        %3736 = vmatmul.mubr.f32.gmra.mxu0 %v3665
        %v3737 = vpop.f32.mrf.mxu0
        %v3738 = vadd.f32 0.0, %v3737
        %v3739 = vpop.f32.mrf.mxu0
        %3740 = vdwg.mxu0
        %v3741 = vmul.f32 %v3738, 0.35355338
        %v3742 = vsel %vm1492, %v3741, -inf
        %3743 = vmax.xlane.f32.xlu0 %v3742
        %v3744 = vpop.xlane.xlu0 %3743
        %v3745 = vsub.f32 %v3741, %v3744
        %v3746 = vmul.f32 %v3745, 1.442695
        %v3747 = vpow.pop %v3746
        %v3748 = vsel %vm1492, %v3747, 0.0
        %3749 = vadd.xlane.f32.xlu0 %v3748
        %v3750 = vpop.xlane.xlu0 %3749
        %v3751 = vrcp.pop %v3750
        %v3752 = vmul.f32 %v3747, %v3751
        %3753 = vrot.lane.b32.xlu0 %v2612, 112
        %v3754 = vpop.permute.xlu0 %3753
        %3755 = vrot.lane.b32.xlu0 %v2617, 112
        %v3756 = vpop.permute.xlu0 %3755
        %v3760 = vsel %vm1492, %v3752, 0
        %3762 = vmatprep.subr.mxu0 0.0
        %3763 = vmatpush1.msra.mxu0 0.0
        %3764 = vmatprep.subr.mxu0 0.0
        %3765 = vmatpush1.msra.mxu0 0.0
        %3766 = vmatprep.subr.mxu0 0.0
        %3767 = vmatpush1.msra.mxu0 0.0
        %3768 = vmatprep.subr.mxu0 0.0
        %3769 = vmatpush1.msra.mxu0 0.0
        %3770 = vmatprep.subr.mxu0 0.0
        %3771 = vmatpush1.msra.mxu0 0.0
        %3772 = vmatprep.subr.mxu0 0.0
        %3773 = vmatpush1.msra.mxu0 0.0
        %3774 = vmatprep.subr.mxu0 0.0
        %3775 = vmatpush1.msra.mxu0 0.0
        %3776 = vmatprep.subr.mxu0 0.0
        %3777 = vmatpush1.msra.mxu0 0.0
        %3778 = vmatprep.subr.mxu0 0.0
        %3779 = vmatpush1.msra.mxu0 0.0
        %3780 = vmatprep.subr.mxu0 0.0
        %3781 = vmatpush1.msra.mxu0 0.0
        %3782 = vmatprep.subr.mxu0 0.0
        %3783 = vmatpush1.msra.mxu0 0.0
        %3784 = vmatprep.subr.mxu0 0.0
        %3785 = vmatpush1.msra.mxu0 0.0
        %3786 = vmatprep.subr.mxu0 0.0
        %3787 = vmatpush1.msra.mxu0 0.0
        %3788 = vmatprep.subr.mxu0 0.0
        %3789 = vmatpush1.msra.mxu0 0.0
        %3790 = vmatprep.subr.mxu0 0.0
        %3791 = vmatpush1.msra.mxu0 %v3756
        %3792 = vmatprep.subr.mxu0 0.0
        %3793 = vmatpush1.msra.mxu0 %v3754
        %3794 = vmatprep.subr.mxu0 0.0
        %3795 = vmatpush2.msra.mxu0 0.0
        %3796 = vmatprep.subr.mxu0 0.0
        %3797 = vmatpush2.msra.mxu0 0.0
        %3798 = vmatprep.subr.mxu0 0.0
        %3799 = vmatpush2.msra.mxu0 0.0
        %3800 = vmatprep.subr.mxu0 0.0
        %3801 = vmatpush2.msra.mxu0 0.0
        %3802 = vmatprep.subr.mxu0 0.0
        %3803 = vmatpush2.msra.mxu0 0.0
        %3804 = vmatprep.subr.mxu0 0.0
        %3805 = vmatpush2.msra.mxu0 0.0
        %3806 = vmatprep.subr.mxu0 0.0
        %3807 = vmatpush2.msra.mxu0 0.0
        %3808 = vmatprep.subr.mxu0 0.0
        %3809 = vmatpush2.msra.mxu0 0.0
        %3810 = vmatprep.subr.mxu0 0.0
        %3811 = vmatpush2.msra.mxu0 0.0
        %3812 = vmatprep.subr.mxu0 0.0
        %3813 = vmatpush2.msra.mxu0 0.0
        %3814 = vmatprep.subr.mxu0 0.0
        %3815 = vmatpush2.msra.mxu0 0.0
        %3816 = vmatprep.subr.mxu0 0.0
        %3817 = vmatpush2.msra.mxu0 0.0
        %3818 = vmatprep.subr.mxu0 0.0
        %3819 = vmatpush2.msra.mxu0 0.0
        %3820 = vmatprep.subr.mxu0 0.0
        %3821 = vmatpush2.msra.mxu0 0.0
        %3822 = vmatprep.subr.mxu0 0.0
        %3823 = vmatpush2.msra.mxu0 0.0
        %3824 = vmatprep.subr.mxu0 0.0
        %3825 = vmatpush2.msra.mxu0 0.0
        %3826 = vmatprep.mubr.f32.mxu0 0.0
        %3827 = vmatmul.mubr.f32.gmra.mxu0 %v3760
        %v3828 = vpop.f32.mrf.mxu0
        %v3829 = vadd.f32 0.0, %v3828
        %v3830 = vpop.f32.mrf.mxu0
        %3831 = vdwg.mxu0
        %3832 = vrot.lane.b32.xlu0 %v2387, 104
        %v3833 = vpop.permute.xlu0 %3832
        %3834 = vrot.lane.b32.xlu0 %v2499, 104
        %v3835 = vpop.permute.xlu0 %3834
        %3836 = vrot.lane.b32.xlu0 %v2504, 104
        %v3837 = vpop.permute.xlu0 %3836
        %v3838 = vsel %vm819, %v3833, 0
        %v3840 = vsel %vm819, %v3835, 0
        %v3842 = vsel %vm819, %v3837, 0
        %3844 = vmatprep.subr.mxu0 0.0
        %3845 = vmatpush1.xpose.msra.mxu0 0.0
        %3846 = vmatprep.subr.mxu0 0.0
        %3847 = vmatpush1.xpose.msra.mxu0 0.0
        %3848 = vmatprep.subr.mxu0 0.0
        %3849 = vmatpush1.xpose.msra.mxu0 0.0
        %3850 = vmatprep.subr.mxu0 0.0
        %3851 = vmatpush1.xpose.msra.mxu0 0.0
        %3852 = vmatprep.subr.mxu0 0.0
        %3853 = vmatpush1.xpose.msra.mxu0 0.0
        %3854 = vmatprep.subr.mxu0 0.0
        %3855 = vmatpush1.xpose.msra.mxu0 0.0
        %3856 = vmatprep.subr.mxu0 0.0
        %3857 = vmatpush1.xpose.msra.mxu0 0.0
        %3858 = vmatprep.subr.mxu0 0.0
        %3859 = vmatpush1.xpose.msra.mxu0 0.0
        %3860 = vmatprep.subr.mxu0 0.0
        %3861 = vmatpush1.xpose.msra.mxu0 0.0
        %3862 = vmatprep.subr.mxu0 0.0
        %3863 = vmatpush1.xpose.msra.mxu0 0.0
        %3864 = vmatprep.subr.mxu0 0.0
        %3865 = vmatpush1.xpose.msra.mxu0 0.0
        %3866 = vmatprep.subr.mxu0 0.0
        %3867 = vmatpush1.xpose.msra.mxu0 0.0
        %3868 = vmatprep.subr.mxu0 0.0
        %3869 = vmatpush1.xpose.msra.mxu0 0.0
        %3870 = vmatprep.subr.mxu0 0.0
        %3871 = vmatpush1.xpose.msra.mxu0 0.0
        %3872 = vmatprep.subr.mxu0 0.0
        %3873 = vmatpush1.xpose.msra.mxu0 %v3842
        %3874 = vmatprep.subr.mxu0 0.0
        %3875 = vmatpush1.xpose.msra.mxu0 %v3840
        %3876 = vmatprep.subr.mxu0 0.0
        %3877 = vmatpush2.xpose.msra.mxu0 0.0
        %3878 = vmatprep.subr.mxu0 0.0
        %3879 = vmatpush2.xpose.msra.mxu0 0.0
        %3880 = vmatprep.subr.mxu0 0.0
        %3881 = vmatpush2.xpose.msra.mxu0 0.0
        %3882 = vmatprep.subr.mxu0 0.0
        %3883 = vmatpush2.xpose.msra.mxu0 0.0
        %3884 = vmatprep.subr.mxu0 0.0
        %3885 = vmatpush2.xpose.msra.mxu0 0.0
        %3886 = vmatprep.subr.mxu0 0.0
        %3887 = vmatpush2.xpose.msra.mxu0 0.0
        %3888 = vmatprep.subr.mxu0 0.0
        %3889 = vmatpush2.xpose.msra.mxu0 0.0
        %3890 = vmatprep.subr.mxu0 0.0
        %3891 = vmatpush2.xpose.msra.mxu0 0.0
        %3892 = vmatprep.subr.mxu0 0.0
        %3893 = vmatpush2.xpose.msra.mxu0 0.0
        %3894 = vmatprep.subr.mxu0 0.0
        %3895 = vmatpush2.xpose.msra.mxu0 0.0
        %3896 = vmatprep.subr.mxu0 0.0
        %3897 = vmatpush2.xpose.msra.mxu0 0.0
        %3898 = vmatprep.subr.mxu0 0.0
        %3899 = vmatpush2.xpose.msra.mxu0 0.0
        %3900 = vmatprep.subr.mxu0 0.0
        %3901 = vmatpush2.xpose.msra.mxu0 0.0
        %3902 = vmatprep.subr.mxu0 0.0
        %3903 = vmatpush2.xpose.msra.mxu0 0.0
        %3904 = vmatprep.subr.mxu0 0.0
        %3905 = vmatpush2.xpose.msra.mxu0 0.0
        %3906 = vmatprep.subr.mxu0 0.0
        %3907 = vmatpush2.xpose.msra.mxu0 0.0
        %3908 = vmatprep.mubr.f32.mxu0 0.0
        %3909 = vmatmul.mubr.f32.gmra.mxu0 %v3838
        %v3910 = vpop.f32.mrf.mxu0
        %v3911 = vadd.f32 0.0, %v3910
        %v3912 = vpop.f32.mrf.mxu0
        %3913 = vdwg.mxu0
        %v3914 = vmul.f32 %v3911, 0.35355338
        %v3915 = vsel %vm1492, %v3914, -inf
        %3916 = vmax.xlane.f32.xlu0 %v3915
        %v3917 = vpop.xlane.xlu0 %3916
        %v3918 = vsub.f32 %v3914, %v3917
        %v3919 = vmul.f32 %v3918, 1.442695
        %v3920 = vpow.pop %v3919
        %v3921 = vsel %vm1492, %v3920, 0.0
        %3922 = vadd.xlane.f32.xlu0 %v3921
        %v3923 = vpop.xlane.xlu0 %3922
        %v3924 = vrcp.pop %v3923
        %v3925 = vmul.f32 %v3920, %v3924
        %3926 = vrot.lane.b32.xlu0 %v2612, 104
        %v3927 = vpop.permute.xlu0 %3926
        %3928 = vrot.lane.b32.xlu0 %v2617, 104
        %v3929 = vpop.permute.xlu0 %3928
        %v3933 = vsel %vm1492, %v3925, 0
        %3935 = vmatprep.subr.mxu0 0.0
        %3936 = vmatpush1.msra.mxu0 0.0
        %3937 = vmatprep.subr.mxu0 0.0
        %3938 = vmatpush1.msra.mxu0 0.0
        %3939 = vmatprep.subr.mxu0 0.0
        %3940 = vmatpush1.msra.mxu0 0.0
        %3941 = vmatprep.subr.mxu0 0.0
        %3942 = vmatpush1.msra.mxu0 0.0
        %3943 = vmatprep.subr.mxu0 0.0
        %3944 = vmatpush1.msra.mxu0 0.0
        %3945 = vmatprep.subr.mxu0 0.0
        %3946 = vmatpush1.msra.mxu0 0.0
        %3947 = vmatprep.subr.mxu0 0.0
        %3948 = vmatpush1.msra.mxu0 0.0
        %3949 = vmatprep.subr.mxu0 0.0
        %3950 = vmatpush1.msra.mxu0 0.0
        %3951 = vmatprep.subr.mxu0 0.0
        %3952 = vmatpush1.msra.mxu0 0.0
        %3953 = vmatprep.subr.mxu0 0.0
        %3954 = vmatpush1.msra.mxu0 0.0
        %3955 = vmatprep.subr.mxu0 0.0
        %3956 = vmatpush1.msra.mxu0 0.0
        %3957 = vmatprep.subr.mxu0 0.0
        %3958 = vmatpush1.msra.mxu0 0.0
        %3959 = vmatprep.subr.mxu0 0.0
        %3960 = vmatpush1.msra.mxu0 0.0
        %3961 = vmatprep.subr.mxu0 0.0
        %3962 = vmatpush1.msra.mxu0 0.0
        %3963 = vmatprep.subr.mxu0 0.0
        %3964 = vmatpush1.msra.mxu0 %v3929
        %3965 = vmatprep.subr.mxu0 0.0
        %3966 = vmatpush1.msra.mxu0 %v3927
        %3967 = vmatprep.subr.mxu0 0.0
        %3968 = vmatpush2.msra.mxu0 0.0
        %3969 = vmatprep.subr.mxu0 0.0
        %3970 = vmatpush2.msra.mxu0 0.0
        %3971 = vmatprep.subr.mxu0 0.0
        %3972 = vmatpush2.msra.mxu0 0.0
        %3973 = vmatprep.subr.mxu0 0.0
        %3974 = vmatpush2.msra.mxu0 0.0
        %3975 = vmatprep.subr.mxu0 0.0
        %3976 = vmatpush2.msra.mxu0 0.0
        %3977 = vmatprep.subr.mxu0 0.0
        %3978 = vmatpush2.msra.mxu0 0.0
        %3979 = vmatprep.subr.mxu0 0.0
        %3980 = vmatpush2.msra.mxu0 0.0
        %3981 = vmatprep.subr.mxu0 0.0
        %3982 = vmatpush2.msra.mxu0 0.0
        %3983 = vmatprep.subr.mxu0 0.0
        %3984 = vmatpush2.msra.mxu0 0.0
        %3985 = vmatprep.subr.mxu0 0.0
        %3986 = vmatpush2.msra.mxu0 0.0
        %3987 = vmatprep.subr.mxu0 0.0
        %3988 = vmatpush2.msra.mxu0 0.0
        %3989 = vmatprep.subr.mxu0 0.0
        %3990 = vmatpush2.msra.mxu0 0.0
        %3991 = vmatprep.subr.mxu0 0.0
        %3992 = vmatpush2.msra.mxu0 0.0
        %3993 = vmatprep.subr.mxu0 0.0
        %3994 = vmatpush2.msra.mxu0 0.0
        %3995 = vmatprep.subr.mxu0 0.0
        %3996 = vmatpush2.msra.mxu0 0.0
        %3997 = vmatprep.subr.mxu0 0.0
        %3998 = vmatpush2.msra.mxu0 0.0
        %3999 = vmatprep.mubr.f32.mxu0 0.0
        %4000 = vmatmul.mubr.f32.gmra.mxu0 %v3933
        %v4001 = vpop.f32.mrf.mxu0
        %v4002 = vadd.f32 0.0, %v4001
        %v4003 = vpop.f32.mrf.mxu0
        %4004 = vdwg.mxu0
        %4006 = vrot.lane.b32.xlu0 %v3656, 8
        %v4007 = vpop.permute.xlu0 %4006
        %4010 = vrot.lane.b32.xlu0 %v3829, 16
        %v4011 = vpop.permute.xlu0 %4010
        %4014 = vrot.lane.b32.xlu0 %v4002, 24
        %v4015 = vpop.permute.xlu0 %4014
        %v4017 = vsel %vm819, %v3481, %v4007
        %v4018 = vsel %vm1492, %v4017, %v4011
        %v4019 = vsel %vm1494, %v4018, %v4015
        %v4020 = vlaneseq
        %v4021 = vshrl.u32 %v4020, 7
        %v4022 = vsub.s32 7, %v4021
        %v4023 = vrot.slane %v611, %v4022
        %v4025 = vsel %vm617, %v3319, 0
        %v4028 = vsel %vm617, %v4019, 0
        %4030 = vmatprep.subr.mxu0 0.0
        %4031 = vmatpush1.msra.mxu0 0.0
        %4032 = vmatprep.subr.mxu0 0.0
        %4033 = vmatpush1.msra.mxu0 0.0
        %4034 = vmatprep.subr.mxu0 0.0
        %4035 = vmatpush1.msra.mxu0 0.0
        %4036 = vmatprep.subr.mxu0 0.0
        %4037 = vmatpush1.msra.mxu0 0.0
        %4038 = vmatprep.subr.mxu0 0.0
        %4039 = vmatpush1.msra.mxu0 0.0
        %4040 = vmatprep.subr.mxu0 0.0
        %4041 = vmatpush1.msra.mxu0 0.0
        %4042 = vmatprep.subr.mxu0 0.0
        %4043 = vmatpush1.msra.mxu0 0.0
        %4044 = vmatprep.subr.mxu0 0.0
        %4045 = vmatpush1.msra.mxu0 0.0
        %4046 = vmatprep.subr.mxu0 0.0
        %4047 = vmatpush1.msra.mxu0 0.0
        %4048 = vmatprep.subr.mxu0 0.0
        %4049 = vmatpush1.msra.mxu0 0.0
        %4050 = vmatprep.subr.mxu0 0.0
        %4051 = vmatpush1.msra.mxu0 0.0
        %4052 = vmatprep.subr.mxu0 0.0
        %4053 = vmatpush1.msra.mxu0 0.0
        %4054 = vmatprep.subr.mxu0 0.0
        %4055 = vmatpush1.msra.mxu0 %v598
        %4056 = vmatprep.subr.mxu0 0.0
        %4057 = vmatpush1.msra.mxu0 %v597
        %4058 = vmatprep.subr.mxu0 0.0
        %4059 = vmatpush1.msra.mxu0 %v596
        %4060 = vmatprep.subr.mxu0 0.0
        %4061 = vmatpush1.msra.mxu0 %v595
        %4062 = vmatprep.subr.mxu0 0.0
        %4063 = vmatpush2.msra.mxu0 0.0
        %4064 = vmatprep.subr.mxu0 0.0
        %4065 = vmatpush2.msra.mxu0 0.0
        %4066 = vmatprep.subr.mxu0 0.0
        %4067 = vmatpush2.msra.mxu0 0.0
        %4068 = vmatprep.subr.mxu0 0.0
        %4069 = vmatpush2.msra.mxu0 0.0
        %4070 = vmatprep.subr.mxu0 0.0
        %4071 = vmatpush2.msra.mxu0 0.0
        %4072 = vmatprep.subr.mxu0 0.0
        %4073 = vmatpush2.msra.mxu0 0.0
        %4074 = vmatprep.subr.mxu0 0.0
        %4075 = vmatpush2.msra.mxu0 0.0
        %4076 = vmatprep.subr.mxu0 0.0
        %4077 = vmatpush2.msra.mxu0 0.0
        %4078 = vmatprep.subr.mxu0 0.0
        %4079 = vmatpush2.msra.mxu0 0.0
        %4080 = vmatprep.subr.mxu0 0.0
        %4081 = vmatpush2.msra.mxu0 0.0
        %4082 = vmatprep.subr.mxu0 0.0
        %4083 = vmatpush2.msra.mxu0 0.0
        %4084 = vmatprep.subr.mxu0 0.0
        %4085 = vmatpush2.msra.mxu0 0.0
        %4086 = vmatprep.subr.mxu0 0.0
        %4087 = vmatpush2.msra.mxu0 0.0
        %4088 = vmatprep.subr.mxu0 0.0
        %4089 = vmatpush2.msra.mxu0 0.0
        %4090 = vmatprep.subr.mxu0 0.0
        %4091 = vmatpush2.msra.mxu0 0.0
        %4092 = vmatprep.subr.mxu0 0.0
        %4093 = vmatpush2.msra.mxu0 0.0
        %4094 = vmatprep.mubr.f32.mxu0 0.0
        %4095 = vmatmul.mubr.f32.gmra.mxu0 %v4025
        %v4096 = vpop.f32.mrf.mxu0
        %v4097 = vadd.f32 %v4023, %v4096
        %v4098 = vpop.f32.mrf.mxu0
        %4099 = vmatprep.mubr.f32.mxu0 0.0
        %4100 = vmatmul.mubr.f32.gmra.mxu0 %v4028
        %v4101 = vpop.f32.mrf.mxu0
        %v4102 = vadd.f32 %v4023, %v4101
        %v4103 = vpop.f32.mrf.mxu0
        %4104 = vdwg.mxu0
        %v4105 = vadd.f32 %v2297, %v4097
        %v4106 = vadd.f32 %v2298, %v4102
        %v4107 = vsel %vm617, %v4105, 0.0
        %4108 = vadd.xlane.f32.xlu0 %v4107
        %v4109 = vpop.xlane.xlu0 %4108
        %v4110 = vsel %vm617, %v4106, 0.0
        %4111 = vadd.xlane.f32.xlu0 %v4110
        %v4112 = vpop.xlane.xlu0 %4111
        %v4113 = vmul.f32 %v4109, %v2266
        %v4114 = vmul.f32 %v4112, %v2266
        %v4115 = vsub.f32 %v4105, %v4113
        %v4116 = vsub.f32 %v4106, %v4114
        %v4117 = vmul.f32 %v4115, %v4115
        %v4118 = vmul.f32 %v4116, %v4116
        %v4119 = vsel %vm617, %v4117, 0.0
        %4120 = vadd.xlane.f32.xlu0 %v4119
        %v4121 = vpop.xlane.xlu0 %4120
        %v4122 = vsel %vm617, %v4118, 0.0
        %4123 = vadd.xlane.f32.xlu0 %v4122
        %v4124 = vpop.xlane.xlu0 %4123
        %v4125 = vmul.f32 %v4121, %v2266
        %v4126 = vmul.f32 %v4124, %v2266
        %v4127 = vadd.f32 %v4125, 1e-05
        %v4128 = vadd.f32 %v4126, 1e-05
        %v4129 = vrsqrt.pop %v4127
        %v4130 = vrsqrt.pop %v4128
        %v4131 = vmul.f32 %v4115, %v4129
        %v4132 = vmul.f32 %v4116, %v4130
        %v4133 = vlaneseq
        %v4134 = vshrl.u32 %v4133, 7
        %v4135 = vsub.s32 3, %v4134
        %v4136 = vrot.slane %v612, %v4135
        %v4137 = vmul.f32 %v4131, %v4136
        %v4138 = vmul.f32 %v4132, %v4136
        %v4139 = vlaneseq
        %v4140 = vshrl.u32 %v4139, 7
        %v4141 = vsub.s32 4, %v4140
        %v4142 = vrot.slane %v612, %v4141
        %v4143 = vadd.f32 %v4137, %v4142
        %v4144 = vadd.f32 %v4138, %v4142
        %v4146 = vlaneseq
        %v4147 = vshrl.u32 %v4146, 7
        %v4148 = vsub.s32 0, %v4147
        %v4149 = vrot.slane %v613, %v4148
        %v4152 = vsel %vm617, %v4143, 0
        %v4155 = vsel %vm617, %v4144, 0
        %4157 = vmatprep.subr.mxu0 0.0
        %4158 = vmatpush1.msra.mxu0 0.0
        %4159 = vmatprep.subr.mxu0 0.0
        %4160 = vmatpush1.msra.mxu0 0.0
        %4161 = vmatprep.subr.mxu0 0.0
        %4162 = vmatpush1.msra.mxu0 0.0
        %4163 = vmatprep.subr.mxu0 0.0
        %4164 = vmatpush1.msra.mxu0 0.0
        %4165 = vmatprep.subr.mxu0 0.0
        %4166 = vmatpush1.msra.mxu0 0.0
        %4167 = vmatprep.subr.mxu0 0.0
        %4168 = vmatpush1.msra.mxu0 0.0
        %4169 = vmatprep.subr.mxu0 0.0
        %4170 = vmatpush1.msra.mxu0 0.0
        %4171 = vmatprep.subr.mxu0 0.0
        %4172 = vmatpush1.msra.mxu0 0.0
        %4173 = vmatprep.subr.mxu0 0.0
        %4174 = vmatpush1.msra.mxu0 0.0
        %4175 = vmatprep.subr.mxu0 0.0
        %4176 = vmatpush1.msra.mxu0 0.0
        %4177 = vmatprep.subr.mxu0 0.0
        %4178 = vmatpush1.msra.mxu0 0.0
        %4179 = vmatprep.subr.mxu0 0.0
        %4180 = vmatpush1.msra.mxu0 0.0
        %4181 = vmatprep.subr.mxu0 0.0
        %4182 = vmatpush1.msra.mxu0 %v602
        %4183 = vmatprep.subr.mxu0 0.0
        %4184 = vmatpush1.msra.mxu0 %v601
        %4185 = vmatprep.subr.mxu0 0.0
        %4186 = vmatpush1.msra.mxu0 %v600
        %4187 = vmatprep.subr.mxu0 0.0
        %4188 = vmatpush1.msra.mxu0 %v599
        %4189 = vmatprep.subr.mxu0 0.0
        %4190 = vmatpush2.msra.mxu0 0.0
        %4191 = vmatprep.subr.mxu0 0.0
        %4192 = vmatpush2.msra.mxu0 0.0
        %4193 = vmatprep.subr.mxu0 0.0
        %4194 = vmatpush2.msra.mxu0 0.0
        %4195 = vmatprep.subr.mxu0 0.0
        %4196 = vmatpush2.msra.mxu0 0.0
        %4197 = vmatprep.subr.mxu0 0.0
        %4198 = vmatpush2.msra.mxu0 0.0
        %4199 = vmatprep.subr.mxu0 0.0
        %4200 = vmatpush2.msra.mxu0 0.0
        %4201 = vmatprep.subr.mxu0 0.0
        %4202 = vmatpush2.msra.mxu0 0.0
        %4203 = vmatprep.subr.mxu0 0.0
        %4204 = vmatpush2.msra.mxu0 0.0
        %4205 = vmatprep.subr.mxu0 0.0
        %4206 = vmatpush2.msra.mxu0 0.0
        %4207 = vmatprep.subr.mxu0 0.0
        %4208 = vmatpush2.msra.mxu0 0.0
        %4209 = vmatprep.subr.mxu0 0.0
        %4210 = vmatpush2.msra.mxu0 0.0
        %4211 = vmatprep.subr.mxu0 0.0
        %4212 = vmatpush2.msra.mxu0 0.0
        %4213 = vmatprep.subr.mxu0 0.0
        %4214 = vmatpush2.msra.mxu0 0.0
        %4215 = vmatprep.subr.mxu0 0.0
        %4216 = vmatpush2.msra.mxu0 0.0
        %4217 = vmatprep.subr.mxu0 0.0
        %4218 = vmatpush2.msra.mxu0 0.0
        %4219 = vmatprep.subr.mxu0 0.0
        %4220 = vmatpush2.msra.mxu0 0.0
        %4221 = vmatprep.mubr.f32.mxu0 0.0
        %4222 = vmatmul.mubr.f32.gmra.mxu0 %v4152
        %v4223 = vpop.f32.mrf.mxu0
        %v4224 = vadd.f32 %v4149, %v4223
        %v4225 = vpop.f32.mrf.mxu0
        %4226 = vmatprep.mubr.f32.mxu0 0.0
        %4227 = vmatmul.mubr.f32.gmra.mxu0 %v4155
        %v4228 = vpop.f32.mrf.mxu0
        %v4229 = vadd.f32 %v4149, %v4228
        %v4230 = vpop.f32.mrf.mxu0
        %4231 = vdwg.mxu0
        %v4232 = vmax.f32 %v4224, 0.0
        %v4233 = vmax.f32 %v4229, 0.0
        %v4234 = vlaneseq
        %v4235 = vshrl.u32 %v4234, 7
        %v4236 = vsub.s32 0, %v4235
        %v4237 = vrot.slane %v612, %v4236
        %vm4238 = vcmask 523264
        %v4240 = vsel %vm4238, %v4232, 0
        %v4243 = vsel %vm4238, %v4233, 0
        %4245 = vmatprep.subr.mxu0 0.0
        %4246 = vmatpush1.msra.mxu0 0.0
        %4247 = vmatprep.subr.mxu0 0.0
        %4248 = vmatpush1.msra.mxu0 0.0
        %4249 = vmatprep.subr.mxu0 0.0
        %4250 = vmatpush1.msra.mxu0 0.0
        %4251 = vmatprep.subr.mxu0 0.0
        %4252 = vmatpush1.msra.mxu0 0.0
        %4253 = vmatprep.subr.mxu0 0.0
        %4254 = vmatpush1.msra.mxu0 0.0
        %4255 = vmatprep.subr.mxu0 0.0
        %4256 = vmatpush1.msra.mxu0 0.0
        %4257 = vmatprep.subr.mxu0 0.0
        %4258 = vmatpush1.msra.mxu0 0.0
        %4259 = vmatprep.subr.mxu0 0.0
        %4260 = vmatpush1.msra.mxu0 0.0
        %4261 = vmatprep.subr.mxu0 0.0
        %4262 = vmatpush1.msra.mxu0 %v610
        %4263 = vmatprep.subr.mxu0 0.0
        %4264 = vmatpush1.msra.mxu0 %v609
        %4265 = vmatprep.subr.mxu0 0.0
        %4266 = vmatpush1.msra.mxu0 %v608
        %4267 = vmatprep.subr.mxu0 0.0
        %4268 = vmatpush1.msra.mxu0 %v607
        %4269 = vmatprep.subr.mxu0 0.0
        %4270 = vmatpush1.msra.mxu0 %v606
        %4271 = vmatprep.subr.mxu0 0.0
        %4272 = vmatpush1.msra.mxu0 %v605
        %4273 = vmatprep.subr.mxu0 0.0
        %4274 = vmatpush1.msra.mxu0 %v604
        %4275 = vmatprep.subr.mxu0 0.0
        %4276 = vmatpush1.msra.mxu0 %v603
        %4277 = vmatprep.subr.mxu0 0.0
        %4278 = vmatpush2.msra.mxu0 0.0
        %4279 = vmatprep.subr.mxu0 0.0
        %4280 = vmatpush2.msra.mxu0 0.0
        %4281 = vmatprep.subr.mxu0 0.0
        %4282 = vmatpush2.msra.mxu0 0.0
        %4283 = vmatprep.subr.mxu0 0.0
        %4284 = vmatpush2.msra.mxu0 0.0
        %4285 = vmatprep.subr.mxu0 0.0
        %4286 = vmatpush2.msra.mxu0 0.0
        %4287 = vmatprep.subr.mxu0 0.0
        %4288 = vmatpush2.msra.mxu0 0.0
        %4289 = vmatprep.subr.mxu0 0.0
        %4290 = vmatpush2.msra.mxu0 0.0
        %4291 = vmatprep.subr.mxu0 0.0
        %4292 = vmatpush2.msra.mxu0 0.0
        %4293 = vmatprep.subr.mxu0 0.0
        %4294 = vmatpush2.msra.mxu0 0.0
        %4295 = vmatprep.subr.mxu0 0.0
        %4296 = vmatpush2.msra.mxu0 0.0
        %4297 = vmatprep.subr.mxu0 0.0
        %4298 = vmatpush2.msra.mxu0 0.0
        %4299 = vmatprep.subr.mxu0 0.0
        %4300 = vmatpush2.msra.mxu0 0.0
        %4301 = vmatprep.subr.mxu0 0.0
        %4302 = vmatpush2.msra.mxu0 0.0
        %4303 = vmatprep.subr.mxu0 0.0
        %4304 = vmatpush2.msra.mxu0 0.0
        %4305 = vmatprep.subr.mxu0 0.0
        %4306 = vmatpush2.msra.mxu0 0.0
        %4307 = vmatprep.subr.mxu0 0.0
        %4308 = vmatpush2.msra.mxu0 0.0
        %4309 = vmatprep.mubr.f32.mxu0 0.0
        %4310 = vmatmul.mubr.f32.gmra.mxu0 %v4240
        %v4311 = vpop.f32.mrf.mxu0
        %v4312 = vadd.f32 %v4237, %v4311
        %v4313 = vpop.f32.mrf.mxu0
        %4314 = vmatprep.mubr.f32.mxu0 0.0
        %4315 = vmatmul.mubr.f32.gmra.mxu0 %v4243
        %v4316 = vpop.f32.mrf.mxu0
        %v4317 = vadd.f32 %v4237, %v4316
        %v4318 = vpop.f32.mrf.mxu0
        %4319 = vdwg.mxu0
        %v4320 = vadd.f32 %v4143, %v4312
        %v4321 = vadd.f32 %v4144, %v4317
        %v4322 = vsel %vm617, %v4320, 0.0
        %4323 = vadd.xlane.f32.xlu0 %v4322
        %v4324 = vpop.xlane.xlu0 %4323
        %v4325 = vsel %vm617, %v4321, 0.0
        %4326 = vadd.xlane.f32.xlu0 %v4325
        %v4327 = vpop.xlane.xlu0 %4326
        %v4328 = vmul.f32 %v4324, %v2266
        %v4329 = vmul.f32 %v4327, %v2266
        %v4330 = vsub.f32 %v4320, %v4328
        %v4331 = vsub.f32 %v4321, %v4329
        %v4332 = vmul.f32 %v4330, %v4330
        %v4333 = vmul.f32 %v4331, %v4331
        %v4334 = vsel %vm617, %v4332, 0.0
        %4335 = vadd.xlane.f32.xlu0 %v4334
        %v4336 = vpop.xlane.xlu0 %4335
        %v4337 = vsel %vm617, %v4333, 0.0
        %4338 = vadd.xlane.f32.xlu0 %v4337
        %v4339 = vpop.xlane.xlu0 %4338
        %v4340 = vmul.f32 %v4336, %v2266
        %v4341 = vmul.f32 %v4339, %v2266
        %v4342 = vadd.f32 %v4340, 1e-05
        %v4343 = vadd.f32 %v4341, 1e-05
        %v4344 = vrsqrt.pop %v4342
        %v4345 = vrsqrt.pop %v4343
        %v4346 = vmul.f32 %v4330, %v4344
        %v4347 = vmul.f32 %v4331, %v4345
        %v4348 = vlaneseq
        %v4349 = vshrl.u32 %v4348, 7
        %v4350 = vsub.s32 5, %v4349
        %v4351 = vrot.slane %v612, %v4350
        %v4352 = vmul.f32 %v4346, %v4351
        %v4353 = vmul.f32 %v4347, %v4351
        %v4354 = vlaneseq
        %v4355 = vshrl.u32 %v4354, 7
        %v4356 = vsub.s32 6, %v4355
        %v4357 = vrot.slane %v612, %v4356
        %v4358 = vadd.f32 %v4352, %v4357
        %v4359 = vadd.f32 %v4353, %v4357
        %4360 = vst.msk [vmem:[#allocation2] sm:$0xff] %vm617, %v4358
        %4361 = vst.msk [vmem:[#allocation2 + $0x8] sm:$0xff] %vm617, %v4359
        %v4362 = vsel %vm617, %v4358, 0.0
        %4363 = vadd.xlane.f32.xlu0 %v4362
        %v4364 = vpop.xlane.xlu0 %4363
        %v4365 = vsel %vm617, %v4359, 0.0
        %4366 = vadd.xlane.f32.xlu0 %v4365
        %v4367 = vpop.xlane.xlu0 %4366
        %v4368 = vmul.f32 %v4364, %v2266
        %v4369 = vmul.f32 %v4367, %v2266
        %v4370 = vsub.f32 %v4358, %v4368
        %v4371 = vsub.f32 %v4359, %v4369
        %v4372 = vmul.f32 %v4370, %v4370
        %v4373 = vmul.f32 %v4371, %v4371
        %v4374 = vsel %vm617, %v4372, 0.0
        %4375 = vadd.xlane.f32.xlu0 %v4374
        %v4376 = vpop.xlane.xlu0 %4375
        %v4377 = vsel %vm617, %v4373, 0.0
        %4378 = vadd.xlane.f32.xlu0 %v4377
        %v4379 = vpop.xlane.xlu0 %4378
        %v4380 = vmul.f32 %v4376, %v2266
        %v4381 = vmul.f32 %v4379, %v2266
        %v4382 = vadd.f32 %v4380, 1e-05
        %v4383 = vadd.f32 %v4381, 1e-05
        %v4384 = vrsqrt.pop %v4382
        %v4385 = vrsqrt.pop %v4383
        %v4386 = vmul.f32 %v4370, %v4384
        %v4387 = vmul.f32 %v4371, %v4385
        %v4388 = vlaneseq
        %v4389 = vshrl.u32 %v4388, 7
        %v4390 = vsub.s32 0, %v4389
        %v4391 = vrot.slane %v614, %v4390
        %v4392 = vmul.f32 %v4386, %v4391
        %v4393 = vmul.f32 %v4387, %v4391
        %v4394 = vlaneseq
        %v4395 = vshrl.u32 %v4394, 7
        %v4396 = vsub.s32 1, %v4395
        %v4397 = vrot.slane %v614, %v4396
        %v4398 = vadd.f32 %v4392, %v4397
        %v4399 = vadd.f32 %v4393, %v4397
        %4400 = vst.msk [vmem:[%s541] sm:$0xff] %vm617, %v4398
        %4401 = vst.msk [vmem:[%s541 + $0x8] sm:$0xff] %vm617, %v4399
        %s4402 = sand.u32 %s299, 1
        %s4403 = scalar_lea.sflag [#allocation5], %s4402
        %s4404 = sand.u32 %s299, 1
        %s4405 = smul.addr %s4404, 16
        %s4406 = scalar_lea.vmem [#allocation12], %s4405
        // Predicated region
        $region89: #{query_transformer_decoder.1} parent=63 // pred_check
          %p4407 = pneg %p309
        $region90: #{query_transformer_decoder.1} parent=63 // pred_check_branch
          %4409 = sbr.rel (%p4407) target = $region92
        $region91: #{query_transformer_decoder.1} parent=63 // pred_region
          %s4411 = ssub.s32 256, 256
          %4412 = vsyncadd %s4403, %s4411
          %s4413 = smul.addr %s30, 2
          %s4414 = smul.addr %s4413, 128
          %s4415 = scalar_lea.hbm %s11, %s4414
          %s4416 = sshll.u32 %s4406, 4
          %s4417 = int_to_ptr.vmem [resolvable:$true] %s4416
          %4422 = dma.vmem_to_hbm [thread:$0]  %s4417, 256, %s4415, %s4403, 128, 128, 8
        $region92: #{query_transformer_decoder.1} parent=63 // pred_fallthru
          _
      $region64: #{query_transformer_decoder.1} parent=5 // pred_fallthru
        _
      %p4423 = scmp.le.s32.totalorder 2, %s25
      // Predicated region
      $region93: #{query_transformer_decoder.1} parent=5 // pred_check
        %p4424 = pneg %p4423
      $region94: #{query_transformer_decoder.1} parent=5 // pred_check_branch
        %4426 = sbr.rel (%p4424) target = $region96
      $region95: #{query_transformer_decoder.1} parent=5 // pred_region
        %s4427 = ssub.s32 %s25, 2
        // Predicated region
        $region97: #{query_transformer_decoder.1} parent=95 // pred_check
          %p4428 = pneg %p315
        $region98: #{query_transformer_decoder.1} parent=95 // pred_check_branch
          %4430 = sbr.rel (%p4428) target = $region100
        $region99: #{query_transformer_decoder.1} parent=95 // pred_region
          %s4431 = sand.u32 %s300, 1
          %s4432 = scalar_lea.sflag [#allocation5], %s4431
          %s4433 = sand.u32 %s300, 1
          %s4434 = smul.addr %s4433, 16
          %s4435 = scalar_lea.vmem [#allocation12], %s4434
          %4436 = dma.done %s4432, 256
        $region100: #{query_transformer_decoder.1} parent=95 // pred_fallthru
          _
      $region96: #{query_transformer_decoder.1} parent=5 // pred_fallthru
        _
    $region6: #{query_transformer_decoder.1} parent=1 // loop_footer
      %s29 = sadd.s32 1, %s25
    $region7: #{query_transformer_decoder.1} parent=1 // loop_footer_branch
      %24 = sbr.rel target = $region3
    $region8: #{query_transformer_decoder.1} parent=1 // loop_exit
      _
    %4437 = vsyncpa [#allocation4], 1
    %s4438 = scalar_lea.sflag [#allocation4], 1
    %4439 = vsyncpa %s4438, 1
    %4440 = vsyncpa [#allocation7], 1
    %4441 = vsyncpa [#allocation10], 1
    %s4442 = scalar_lea.sflag [#allocation10], 1
    %4443 = vsyncpa %s4442, 1
    %4444 = vsyncpa [#allocation5], 1
    %s4445 = scalar_lea.sflag [#allocation5], 1
    %4446 = vsyncpa %s4445, 1

</llo_original>
